<compile_context>
chip_gen: v5e
topology: v5e:2x2
jax: 0.10.0
libtpu: 0.0.40
codegen_flags: <defaults>
</compile_context>

<pallas_src>
import jax
import jax.numpy as jnp
import numpy as np
from jax.experimental import pallas as pl
from jax.experimental.pallas import tpu as pltpu


def _round_up(n, m):
    return ((n + m - 1) // m) * m


def _pad_input(x, Bp, Dp):
    T, B, D = x.shape
    xp = jnp.zeros((T, Bp, Dp), jnp.float32)
    return xp.at[:, :B, :D].set(x.astype(jnp.float32))


# ----------------------------------------------------------------------------
# Kernel
# ----------------------------------------------------------------------------
def _encoder_gru_kernel(x_ref, w0_ref, b0_ref, w1_ref, b1_ref, h1_ref, h2_ref):
    T, Bp, _ = x_ref.shape
    Hp = h1_ref.shape[-1]

    # Hoist bias broadcasts out of the (unrolled) time loop.
    b0 = jnp.broadcast_to(b0_ref[...], (Bp, 4 * Hp))
    b1 = jnp.broadcast_to(b1_ref[...], (Bp, 4 * Hp))

    def cell(xh, h_prev, w_ref, b):
        # One fused MXU dot per GRU cell; gate blocks [r | z | n_ih | n_hh],
        # each Hp (=128) lanes wide -> lane-aligned slices, unmasked stores.
        g = jnp.dot(xh, w_ref[...], preferred_element_type=jnp.float32) + b
        r = jax.nn.sigmoid(g[:, 0 * Hp:1 * Hp])
        z = jax.nn.sigmoid(g[:, 1 * Hp:2 * Hp])
        n = jnp.tanh(g[:, 2 * Hp:3 * Hp] + r * g[:, 3 * Hp:4 * Hp])
        return (1.0 - z) * n + z * h_prev

    def step(t, carry):
        h1, h2 = carry
        x_t = x_ref[t]                                         # [Bp, Dp]
        h1 = cell(jnp.concatenate([x_t, h1], axis=-1), h1, w0_ref, b0)
        h2 = cell(jnp.concatenate([h1, h2], axis=-1), h2, w1_ref, b1)
        return h1, h2

    h_init = jnp.zeros((Bp, Hp), jnp.float32)
    unroll = True if T <= 16 else 4
    h1, h2 = jax.lax.fori_loop(0, T, step, (h_init, h_init), unroll=unroll)
    h1_ref[...] = h1
    h2_ref[...] = h2


# ----------------------------------------------------------------------------
# Wrapper
# ----------------------------------------------------------------------------
def encoder_rnn_forward(x, packed):
    """x: [T, B, D] float32. Returns (hidden, cell) == (h_n[0], h_n[1]), [B,H]."""
    T, B, D = x.shape
    H, Hp, Dp = packed["H"], packed["Hp"], packed["Dp"]
    Bp = _round_up(B, 8)
    x_pad = _pad_input(x, Bp, Dp)

    h1, h2 = pl.pallas_call(
        _encoder_gru_kernel,
        out_shape=(jax.ShapeDtypeStruct((Bp, Hp), jnp.float32),
                   jax.ShapeDtypeStruct((Bp, Hp), jnp.float32)),
        # Everything (x chunk + fused weights + biases) is resident in VMEM
        # for the whole kernel; explicit limit leaves room when scaling.
        compiler_params=pltpu.CompilerParams(
            vmem_limit_bytes=32 * 1024 * 1024),
    )(x_pad, packed["w0"], packed["b0"], packed["w1"], packed["b1"])
    return h1[:B, :H], h2[:B, :H]


# ----------------------------------------------------------------------------
# Parameters: PyTorch layout + fused/padded packing for the kernel
# ----------------------------------------------------------------------------
def make_raw_params(key, input_size, hidden_size):
    """PyTorch nn.GRU-shaped params: weight_ih [3H,in], weight_hh [3H,H],
    biases [3H]; gate order (r, z, n)."""
    H, D = hidden_size, input_size
    bound = 1.0 / np.sqrt(H)
    ks = jax.random.split(key, 8)
    u = lambda k, s: jax.random.uniform(k, s, jnp.float32, -bound, bound)
    return {
        "w_ih0": u(ks[0], (3 * H, D)), "w_hh0": u(ks[1], (3 * H, H)),
        "b_ih0": u(ks[2], (3 * H,)),   "b_hh0": u(ks[3], (3 * H,)),
        "w_ih1": u(ks[4], (3 * H, H)), "w_hh1": u(ks[5], (3 * H, H)),
        "b_ih1": u(ks[6], (3 * H,)),   "b_hh1": u(ks[7], (3 * H,)),
    }


def pack_params(raw, input_size, hidden_size):
    """Pack PyTorch GRU params into fused, lane-aligned kernel operands.

    Per layer: W_fused [in_pad + Hp, 4*Hp], gate column blocks (each Hp wide):
      block 0: r   (ih rows + hh rows)
      block 1: z   (ih rows + hh rows)
      block 2: n_ih (ih rows only)
      block 3: n_hh (hh rows only)      # kept separate: scaled by r
    b_fused [1, 4*Hp] = [b_ih_r+b_hh_r | b_ih_z+b_hh_z | b_ih_n | b_hh_n].
    Padded rows/cols are zero, so padded hidden lanes stay exactly zero.
    """
    D, H = input_size, hidden_size
    Dp = _round_up(D, 128)
    Hp = _round_up(H, 128)

    def pack_layer(w_ih, w_hh, b_ih, b_hh, in_dim, in_pad):
        wi, wh = np.asarray(w_ih), np.asarray(w_hh)
        bi, bh = np.asarray(b_ih), np.asarray(b_hh)
        w = np.zeros((in_pad + Hp, 4 * Hp), np.float32)
        b = np.zeros((1, 4 * Hp), np.float32)
        # input-side rows
        w[:in_dim, 0:H]                     = wi[0:H, :].T          # r
        w[:in_dim, Hp:Hp + H]               = wi[H:2 * H, :].T      # z
        w[:in_dim, 2 * Hp:2 * Hp + H]       = wi[2 * H:3 * H, :].T  # n_ih
        # hidden-side rows
        w[in_pad:in_pad + H, 0:H]           = wh[0:H, :].T          # r
        w[in_pad:in_pad + H, Hp:Hp + H]     = wh[H:2 * H, :].T      # z
        w[in_pad:in_pad + H, 3 * Hp:3 * Hp + H] = wh[2 * H:3 * H, :].T  # n_hh
        # biases
        b[0, 0:H]               = bi[0:H] + bh[0:H]
        b[0, Hp:Hp + H]         = bi[H:2 * H] + bh[H:2 * H]
        b[0, 2 * Hp:2 * Hp + H] = bi[2 * H:3 * H]
        b[0, 3 * Hp:3 * Hp + H] = bh[2 * H:3 * H]
        return jnp.asarray(w), jnp.asarray(b)

    w0, b0 = pack_layer(raw["w_ih0"], raw["w_hh0"], raw["b_ih0"], raw["b_hh0"], D, Dp)
    w1, b1 = pack_layer(raw["w_ih1"], raw["w_hh1"], raw["b_ih1"], raw["b_hh1"], H, Hp)
    return {"w0": w0, "b0": b0, "w1": w1, "b1": b1,
            "H": H, "Hp": Hp, "D": D, "Dp": Dp}


# ----------------------------------------------------------------------------
# References
# ----------------------------------------------------------------------------
def reference_fused(x, packed):
    """Pure-JAX mirror of the exact padded/fused math the kernel performs."""
    T, B, D = x.shape
    H, Hp, Dp = packed["H"], packed["Hp"], packed["Dp"]
    Bp = _round_up(B, 8)
    xp = _pad_input(x, Bp, Dp)
    h1 = jnp.zeros((Bp, Hp), jnp.float32)
    h2 = jnp.zeros((Bp, Hp), jnp.float32)

    def cell(xh, h_prev, w, b):
        g = jnp.dot(xh, w, preferred_element_type=jnp.float32) + b
        r = jax.nn.sigmoid(g[:, :Hp])
        z = jax.nn.sigmoid(g[:, Hp:2 * Hp])
        n = jnp.tanh(g[:, 2 * Hp:3 * Hp] + r * g[:, 3 * Hp:])
        return (1.0 - z) * n + z * h_prev

    for t in range(T):
        h1 = cell(jnp.concatenate([xp[t], h1], axis=-1), h1, packed["w0"], packed["b0"])
        h2 = cell(jnp.concatenate([h1, h2], axis=-1), h2, packed["w1"], packed["b1"])
    return h1[:B, :H], h2[:B, :H]


def reference_pytorch(x, raw):
    """Standard PyTorch nn.GRU math (2 layers, eval mode), unpadded/unfused."""
    T, B, D = x.shape
    H = raw["w_hh0"].shape[1]

    def cell(xt, h, w_ih, w_hh, b_ih, b_hh):
        gi = xt @ w_ih.T + b_ih
        gh = h @ w_hh.T + b_hh
        i_r, i_z, i_n = gi[:, :H], gi[:, H:2 * H], gi[:, 2 * H:]
        h_r, h_z, h_n = gh[:, :H], gh[:, H:2 * H], gh[:, 2 * H:]
        r = jax.nn.sigmoid(i_r + h_r)
        z = jax.nn.sigmoid(i_z + h_z)
        n = jnp.tanh(i_n + r * h_n)
        return (1.0 - z) * n + z * h

    h1 = jnp.zeros((B, H), jnp.float32)
    h2 = jnp.zeros((B, H), jnp.float32)
    for t in range(T):
        h1 = cell(x[t], h1, raw["w_ih0"], raw["w_hh0"], raw["b_ih0"], raw["b_hh0"])
        h2 = cell(h1, h2, raw["w_ih1"], raw["w_hh1"], raw["b_ih1"], raw["b_hh1"])
    return h1, h2


# ----------------------------------------------------------------------------
if __name__ == "__main__":
    T, B, D, H = 8, 8, 16, 32   # seq, batch, input_size, hidden_size

    key = jax.random.PRNGKey(0)
    kx, kp = jax.random.split(key)
    x = jax.random.normal(kx, (T, B, D), jnp.float32)
    raw = make_raw_params(kp, D, H)
    packed = pack_params(raw, D, H)

    hidden, cell = encoder_rnn_forward(x, packed)
    jax.block_until_ready((hidden, cell))

    # 1) Exact-math mirror (same padded/fused ops) -> tight tolerance.
    ref_h, ref_c = reference_fused(x, packed)
    np.testing.assert_allclose(np.asarray(hidden), np.asarray(ref_h),
                               rtol=2e-5, atol=2e-5)
    np.testing.assert_allclose(np.asarray(cell), np.asarray(ref_c),
                               rtol=2e-5, atol=2e-5)

    # 2) Semantic check vs. plain PyTorch-layout GRU math (different FP
    #    association / matmul decomposition) -> loose tolerance.
    ref_h_pt, ref_c_pt = reference_pytorch(x, raw)
    np.testing.assert_allclose(np.asarray(hidden), np.asarray(ref_h_pt),
                               rtol=3e-2, atol=3e-2)
    np.testing.assert_allclose(np.asarray(cell), np.asarray(ref_c_pt),
                               rtol=3e-2, atol=3e-2)

    print("KERNEL_OK")
</pallas_src>

<mosaic_0001>
module attributes {stable_mosaic.version = 11 : i64} {
  func.func @_encoder_gru_kernel(%arg0: memref<8x8x128xf32, #tpu.memory_space<vmem>>, %arg1: memref<256x512xf32, #tpu.memory_space<vmem>>, %arg2: memref<1x512xf32, #tpu.memory_space<vmem>>, %arg3: memref<256x512xf32, #tpu.memory_space<vmem>>, %arg4: memref<1x512xf32, #tpu.memory_space<vmem>>, %arg5: memref<8x128xf32, #tpu.memory_space<vmem>>, %arg6: memref<8x128xf32, #tpu.memory_space<vmem>>) attributes {dimension_semantics = [], scalar_prefetch = 0 : i64, scratch_operands = 0 : i64, tpu.core_type = #tpu.core_type<tc>} {
    %c0 = arith.constant 0 : index
    %c0_0 = arith.constant 0 : index
    %0 = vector.load %arg2[%c0, %c0_0] : memref<1x512xf32, #tpu.memory_space<vmem>>, vector<1x512xf32>
    %1 = vector.shape_cast %0 : vector<1x512xf32> to vector<1x512xf32>
    %2 = vector.broadcast %1 : vector<1x512xf32> to vector<8x512xf32>
    %c0_1 = arith.constant 0 : index
    %c0_2 = arith.constant 0 : index
    %3 = vector.load %arg4[%c0_1, %c0_2] : memref<1x512xf32, #tpu.memory_space<vmem>>, vector<1x512xf32>
    %4 = vector.shape_cast %3 : vector<1x512xf32> to vector<1x512xf32>
    %5 = vector.broadcast %4 : vector<1x512xf32> to vector<8x512xf32>
    %cst = arith.constant 0.000000e+00 : f32
    %6 = vector.broadcast %cst : f32 to vector<8x128xf32>
    %c0_i32 = arith.constant 0 : i32
    %7 = arith.index_cast %c0_i32 : i32 to index
    %c0_3 = arith.constant 0 : index
    %c0_4 = arith.constant 0 : index
    %8 = vector.load %arg0[%7, %c0_3, %c0_4] : memref<8x8x128xf32, #tpu.memory_space<vmem>>, vector<1x8x128xf32>
    %9 = vector.shape_cast %8 : vector<1x8x128xf32> to vector<8x128xf32>
    %10 = tpu.concatenate %9, %6 in 1 : vector<8x128xf32>, vector<8x128xf32> -> vector<8x256xf32>
    %c0_5 = arith.constant 0 : index
    %c0_6 = arith.constant 0 : index
    %11 = vector.load %arg1[%c0_5, %c0_6] : memref<256x512xf32, #tpu.memory_space<vmem>>, vector<256x512xf32>
    %cst_7 = arith.constant dense<0.000000e+00> : vector<8x512xf32>
    %12 = tpu.matmul %10, %11, %cst_7 {dimension_numbers = #tpu.dot_dimension_numbers<[1], [0], [0], [1], [0, 0, 1, 1], [], []>} : vector<8x256xf32>, vector<256x512xf32>, vector<8x512xf32> -> vector<8x512xf32>
    %13 = arith.addf %12, %2 : vector<8x512xf32>
    %14 = vector.extract_strided_slice %13 {offsets = [0, 0], sizes = [8, 128], strides = [1, 1]} : vector<8x512xf32> to vector<8x128xf32>
    %15 = arith.negf %14 : vector<8x128xf32>
    %16 = math.exp %15 : vector<8x128xf32>
    %cst_8 = arith.constant 1.000000e+00 : f32
    %17 = vector.broadcast %cst_8 : f32 to vector<8x128xf32>
    %18 = arith.addf %17, %16 : vector<8x128xf32>
    %19 = arith.divf %17, %18 : vector<8x128xf32>
    %20 = vector.extract_strided_slice %13 {offsets = [0, 128], sizes = [8, 128], strides = [1, 1]} : vector<8x512xf32> to vector<8x128xf32>
    %21 = arith.negf %20 : vector<8x128xf32>
    %22 = math.exp %21 : vector<8x128xf32>
    %cst_9 = arith.constant 1.000000e+00 : f32
    %23 = vector.broadcast %cst_9 : f32 to vector<8x128xf32>
    %24 = arith.addf %23, %22 : vector<8x128xf32>
    %25 = arith.divf %23, %24 : vector<8x128xf32>
    %26 = vector.extract_strided_slice %13 {offsets = [0, 256], sizes = [8, 128], strides = [1, 1]} : vector<8x512xf32> to vector<8x128xf32>
    %27 = vector.extract_strided_slice %13 {offsets = [0, 384], sizes = [8, 128], strides = [1, 1]} : vector<8x512xf32> to vector<8x128xf32>
    %28 = arith.mulf %19, %27 : vector<8x128xf32>
    %29 = arith.addf %26, %28 : vector<8x128xf32>
    %30 = math.tanh %29 : vector<8x128xf32>
    %cst_10 = arith.constant 1.000000e+00 : f32
    %31 = vector.broadcast %cst_10 : f32 to vector<8x128xf32>
    %32 = arith.subf %31, %25 : vector<8x128xf32>
    %33 = arith.mulf %32, %30 : vector<8x128xf32>
    %34 = arith.mulf %25, %6 : vector<8x128xf32>
    %35 = arith.addf %33, %34 : vector<8x128xf32>
    %36 = tpu.concatenate %35, %6 in 1 : vector<8x128xf32>, vector<8x128xf32> -> vector<8x256xf32>
    %c0_11 = arith.constant 0 : index
    %c0_12 = arith.constant 0 : index
    %37 = vector.load %arg3[%c0_11, %c0_12] : memref<256x512xf32, #tpu.memory_space<vmem>>, vector<256x512xf32>
    %cst_13 = arith.constant dense<0.000000e+00> : vector<8x512xf32>
    %38 = tpu.matmul %36, %37, %cst_13 {dimension_numbers = #tpu.dot_dimension_numbers<[1], [0], [0], [1], [0, 0, 1, 1], [], []>} : vector<8x256xf32>, vector<256x512xf32>, vector<8x512xf32> -> vector<8x512xf32>
    %39 = arith.addf %38, %5 : vector<8x512xf32>
    %40 = vector.extract_strided_slice %39 {offsets = [0, 0], sizes = [8, 128], strides = [1, 1]} : vector<8x512xf32> to vector<8x128xf32>
    %41 = arith.negf %40 : vector<8x128xf32>
    %42 = math.exp %41 : vector<8x128xf32>
    %cst_14 = arith.constant 1.000000e+00 : f32
    %43 = vector.broadcast %cst_14 : f32 to vector<8x128xf32>
    %44 = arith.addf %43, %42 : vector<8x128xf32>
    %45 = arith.divf %43, %44 : vector<8x128xf32>
    %46 = vector.extract_strided_slice %39 {offsets = [0, 128], sizes = [8, 128], strides = [1, 1]} : vector<8x512xf32> to vector<8x128xf32>
    %47 = arith.negf %46 : vector<8x128xf32>
    %48 = math.exp %47 : vector<8x128xf32>
    %cst_15 = arith.constant 1.000000e+00 : f32
    %49 = vector.broadcast %cst_15 : f32 to vector<8x128xf32>
    %50 = arith.addf %49, %48 : vector<8x128xf32>
    %51 = arith.divf %49, %50 : vector<8x128xf32>
    %52 = vector.extract_strided_slice %39 {offsets = [0, 256], sizes = [8, 128], strides = [1, 1]} : vector<8x512xf32> to vector<8x128xf32>
    %53 = vector.extract_strided_slice %39 {offsets = [0, 384], sizes = [8, 128], strides = [1, 1]} : vector<8x512xf32> to vector<8x128xf32>
    %54 = arith.mulf %45, %53 : vector<8x128xf32>
    %55 = arith.addf %52, %54 : vector<8x128xf32>
    %56 = math.tanh %55 : vector<8x128xf32>
    %cst_16 = arith.constant 1.000000e+00 : f32
    %57 = vector.broadcast %cst_16 : f32 to vector<8x128xf32>
    %58 = arith.subf %57, %51 : vector<8x128xf32>
    %59 = arith.mulf %58, %56 : vector<8x128xf32>
    %60 = arith.mulf %51, %6 : vector<8x128xf32>
    %61 = arith.addf %59, %60 : vector<8x128xf32>
    %c1_i32 = arith.constant 1 : i32
    %62 = arith.index_cast %c1_i32 : i32 to index
    %c0_17 = arith.constant 0 : index
    %c0_18 = arith.constant 0 : index
    %63 = vector.load %arg0[%62, %c0_17, %c0_18] : memref<8x8x128xf32, #tpu.memory_space<vmem>>, vector<1x8x128xf32>
    %64 = vector.shape_cast %63 : vector<1x8x128xf32> to vector<8x128xf32>
    %65 = tpu.concatenate %64, %35 in 1 : vector<8x128xf32>, vector<8x128xf32> -> vector<8x256xf32>
    %c0_19 = arith.constant 0 : index
    %c0_20 = arith.constant 0 : index
    %66 = vector.load %arg1[%c0_19, %c0_20] : memref<256x512xf32, #tpu.memory_space<vmem>>, vector<256x512xf32>
    %cst_21 = arith.constant dense<0.000000e+00> : vector<8x512xf32>
    %67 = tpu.matmul %65, %66, %cst_21 {dimension_numbers = #tpu.dot_dimension_numbers<[1], [0], [0], [1], [0, 0, 1, 1], [], []>} : vector<8x256xf32>, vector<256x512xf32>, vector<8x512xf32> -> vector<8x512xf32>
    %68 = arith.addf %67, %2 : vector<8x512xf32>
    %69 = vector.extract_strided_slice %68 {offsets = [0, 0], sizes = [8, 128], strides = [1, 1]} : vector<8x512xf32> to vector<8x128xf32>
    %70 = arith.negf %69 : vector<8x128xf32>
    %71 = math.exp %70 : vector<8x128xf32>
    %cst_22 = arith.constant 1.000000e+00 : f32
    %72 = vector.broadcast %cst_22 : f32 to vector<8x128xf32>
    %73 = arith.addf %72, %71 : vector<8x128xf32>
    %74 = arith.divf %72, %73 : vector<8x128xf32>
    %75 = vector.extract_strided_slice %68 {offsets = [0, 128], sizes = [8, 128], strides = [1, 1]} : vector<8x512xf32> to vector<8x128xf32>
    %76 = arith.negf %75 : vector<8x128xf32>
    %77 = math.exp %76 : vector<8x128xf32>
    %cst_23 = arith.constant 1.000000e+00 : f32
    %78 = vector.broadcast %cst_23 : f32 to vector<8x128xf32>
    %79 = arith.addf %78, %77 : vector<8x128xf32>
    %80 = arith.divf %78, %79 : vector<8x128xf32>
    %81 = vector.extract_strided_slice %68 {offsets = [0, 256], sizes = [8, 128], strides = [1, 1]} : vector<8x512xf32> to vector<8x128xf32>
    %82 = vector.extract_strided_slice %68 {offsets = [0, 384], sizes = [8, 128], strides = [1, 1]} : vector<8x512xf32> to vector<8x128xf32>
    %83 = arith.mulf %74, %82 : vector<8x128xf32>
    %84 = arith.addf %81, %83 : vector<8x128xf32>
    %85 = math.tanh %84 : vector<8x128xf32>
    %cst_24 = arith.constant 1.000000e+00 : f32
    %86 = vector.broadcast %cst_24 : f32 to vector<8x128xf32>
    %87 = arith.subf %86, %80 : vector<8x128xf32>
    %88 = arith.mulf %87, %85 : vector<8x128xf32>
    %89 = arith.mulf %80, %35 : vector<8x128xf32>
    %90 = arith.addf %88, %89 : vector<8x128xf32>
    %91 = tpu.concatenate %90, %61 in 1 : vector<8x128xf32>, vector<8x128xf32> -> vector<8x256xf32>
    %c0_25 = arith.constant 0 : index
    %c0_26 = arith.constant 0 : index
    %92 = vector.load %arg3[%c0_25, %c0_26] : memref<256x512xf32, #tpu.memory_space<vmem>>, vector<256x512xf32>
    %cst_27 = arith.constant dense<0.000000e+00> : vector<8x512xf32>
    %93 = tpu.matmul %91, %92, %cst_27 {dimension_numbers = #tpu.dot_dimension_numbers<[1], [0], [0], [1], [0, 0, 1, 1], [], []>} : vector<8x256xf32>, vector<256x512xf32>, vector<8x512xf32> -> vector<8x512xf32>
    %94 = arith.addf %93, %5 : vector<8x512xf32>
    %95 = vector.extract_strided_slice %94 {offsets = [0, 0], sizes = [8, 128], strides = [1, 1]} : vector<8x512xf32> to vector<8x128xf32>
    %96 = arith.negf %95 : vector<8x128xf32>
    %97 = math.exp %96 : vector<8x128xf32>
    %cst_28 = arith.constant 1.000000e+00 : f32
    %98 = vector.broadcast %cst_28 : f32 to vector<8x128xf32>
    %99 = arith.addf %98, %97 : vector<8x128xf32>
    %100 = arith.divf %98, %99 : vector<8x128xf32>
    %101 = vector.extract_strided_slice %94 {offsets = [0, 128], sizes = [8, 128], strides = [1, 1]} : vector<8x512xf32> to vector<8x128xf32>
    %102 = arith.negf %101 : vector<8x128xf32>
    %103 = math.exp %102 : vector<8x128xf32>
    %cst_29 = arith.constant 1.000000e+00 : f32
    %104 = vector.broadcast %cst_29 : f32 to vector<8x128xf32>
    %105 = arith.addf %104, %103 : vector<8x128xf32>
    %106 = arith.divf %104, %105 : vector<8x128xf32>
    %107 = vector.extract_strided_slice %94 {offsets = [0, 256], sizes = [8, 128], strides = [1, 1]} : vector<8x512xf32> to vector<8x128xf32>
    %108 = vector.extract_strided_slice %94 {offsets = [0, 384], sizes = [8, 128], strides = [1, 1]} : vector<8x512xf32> to vector<8x128xf32>
    %109 = arith.mulf %100, %108 : vector<8x128xf32>
    %110 = arith.addf %107, %109 : vector<8x128xf32>
    %111 = math.tanh %110 : vector<8x128xf32>
    %cst_30 = arith.constant 1.000000e+00 : f32
    %112 = vector.broadcast %cst_30 : f32 to vector<8x128xf32>
    %113 = arith.subf %112, %106 : vector<8x128xf32>
    %114 = arith.mulf %113, %111 : vector<8x128xf32>
    %115 = arith.mulf %106, %61 : vector<8x128xf32>
    %116 = arith.addf %114, %115 : vector<8x128xf32>
    %c2_i32 = arith.constant 2 : i32
    %117 = arith.index_cast %c2_i32 : i32 to index
    %c0_31 = arith.constant 0 : index
    %c0_32 = arith.constant 0 : index
    %118 = vector.load %arg0[%117, %c0_31, %c0_32] : memref<8x8x128xf32, #tpu.memory_space<vmem>>, vector<1x8x128xf32>
    %119 = vector.shape_cast %118 : vector<1x8x128xf32> to vector<8x128xf32>
    %120 = tpu.concatenate %119, %90 in 1 : vector<8x128xf32>, vector<8x128xf32> -> vector<8x256xf32>
    %c0_33 = arith.constant 0 : index
    %c0_34 = arith.constant 0 : index
    %121 = vector.load %arg1[%c0_33, %c0_34] : memref<256x512xf32, #tpu.memory_space<vmem>>, vector<256x512xf32>
    %cst_35 = arith.constant dense<0.000000e+00> : vector<8x512xf32>
    %122 = tpu.matmul %120, %121, %cst_35 {dimension_numbers = #tpu.dot_dimension_numbers<[1], [0], [0], [1], [0, 0, 1, 1], [], []>} : vector<8x256xf32>, vector<256x512xf32>, vector<8x512xf32> -> vector<8x512xf32>
    %123 = arith.addf %122, %2 : vector<8x512xf32>
    %124 = vector.extract_strided_slice %123 {offsets = [0, 0], sizes = [8, 128], strides = [1, 1]} : vector<8x512xf32> to vector<8x128xf32>
    %125 = arith.negf %124 : vector<8x128xf32>
    %126 = math.exp %125 : vector<8x128xf32>
    %cst_36 = arith.constant 1.000000e+00 : f32
    %127 = vector.broadcast %cst_36 : f32 to vector<8x128xf32>
    %128 = arith.addf %127, %126 : vector<8x128xf32>
    %129 = arith.divf %127, %128 : vector<8x128xf32>
    %130 = vector.extract_strided_slice %123 {offsets = [0, 128], sizes = [8, 128], strides = [1, 1]} : vector<8x512xf32> to vector<8x128xf32>
    %131 = arith.negf %130 : vector<8x128xf32>
    %132 = math.exp %131 : vector<8x128xf32>
    %cst_37 = arith.constant 1.000000e+00 : f32
    %133 = vector.broadcast %cst_37 : f32 to vector<8x128xf32>
    %134 = arith.addf %133, %132 : vector<8x128xf32>
    %135 = arith.divf %133, %134 : vector<8x128xf32>
    %136 = vector.extract_strided_slice %123 {offsets = [0, 256], sizes = [8, 128], strides = [1, 1]} : vector<8x512xf32> to vector<8x128xf32>
    %137 = vector.extract_strided_slice %123 {offsets = [0, 384], sizes = [8, 128], strides = [1, 1]} : vector<8x512xf32> to vector<8x128xf32>
    %138 = arith.mulf %129, %137 : vector<8x128xf32>
    %139 = arith.addf %136, %138 : vector<8x128xf32>
    %140 = math.tanh %139 : vector<8x128xf32>
    %cst_38 = arith.constant 1.000000e+00 : f32
    %141 = vector.broadcast %cst_38 : f32 to vector<8x128xf32>
    %142 = arith.subf %141, %135 : vector<8x128xf32>
    %143 = arith.mulf %142, %140 : vector<8x128xf32>
    %144 = arith.mulf %135, %90 : vector<8x128xf32>
    %145 = arith.addf %143, %144 : vector<8x128xf32>
    %146 = tpu.concatenate %145, %116 in 1 : vector<8x128xf32>, vector<8x128xf32> -> vector<8x256xf32>
    %c0_39 = arith.constant 0 : index
    %c0_40 = arith.constant 0 : index
    %147 = vector.load %arg3[%c0_39, %c0_40] : memref<256x512xf32, #tpu.memory_space<vmem>>, vector<256x512xf32>
    %cst_41 = arith.constant dense<0.000000e+00> : vector<8x512xf32>
    %148 = tpu.matmul %146, %147, %cst_41 {dimension_numbers = #tpu.dot_dimension_numbers<[1], [0], [0], [1], [0, 0, 1, 1], [], []>} : vector<8x256xf32>, vector<256x512xf32>, vector<8x512xf32> -> vector<8x512xf32>
    %149 = arith.addf %148, %5 : vector<8x512xf32>
    %150 = vector.extract_strided_slice %149 {offsets = [0, 0], sizes = [8, 128], strides = [1, 1]} : vector<8x512xf32> to vector<8x128xf32>
    %151 = arith.negf %150 : vector<8x128xf32>
    %152 = math.exp %151 : vector<8x128xf32>
    %cst_42 = arith.constant 1.000000e+00 : f32
    %153 = vector.broadcast %cst_42 : f32 to vector<8x128xf32>
    %154 = arith.addf %153, %152 : vector<8x128xf32>
    %155 = arith.divf %153, %154 : vector<8x128xf32>
    %156 = vector.extract_strided_slice %149 {offsets = [0, 128], sizes = [8, 128], strides = [1, 1]} : vector<8x512xf32> to vector<8x128xf32>
    %157 = arith.negf %156 : vector<8x128xf32>
    %158 = math.exp %157 : vector<8x128xf32>
    %cst_43 = arith.constant 1.000000e+00 : f32
    %159 = vector.broadcast %cst_43 : f32 to vector<8x128xf32>
    %160 = arith.addf %159, %158 : vector<8x128xf32>
    %161 = arith.divf %159, %160 : vector<8x128xf32>
    %162 = vector.extract_strided_slice %149 {offsets = [0, 256], sizes = [8, 128], strides = [1, 1]} : vector<8x512xf32> to vector<8x128xf32>
    %163 = vector.extract_strided_slice %149 {offsets = [0, 384], sizes = [8, 128], strides = [1, 1]} : vector<8x512xf32> to vector<8x128xf32>
    %164 = arith.mulf %155, %163 : vector<8x128xf32>
    %165 = arith.addf %162, %164 : vector<8x128xf32>
    %166 = math.tanh %165 : vector<8x128xf32>
    %cst_44 = arith.constant 1.000000e+00 : f32
    %167 = vector.broadcast %cst_44 : f32 to vector<8x128xf32>
    %168 = arith.subf %167, %161 : vector<8x128xf32>
    %169 = arith.mulf %168, %166 : vector<8x128xf32>
    %170 = arith.mulf %161, %116 : vector<8x128xf32>
    %171 = arith.addf %169, %170 : vector<8x128xf32>
    %c3_i32 = arith.constant 3 : i32
    %172 = arith.index_cast %c3_i32 : i32 to index
    %c0_45 = arith.constant 0 : index
    %c0_46 = arith.constant 0 : index
    %173 = vector.load %arg0[%172, %c0_45, %c0_46] : memref<8x8x128xf32, #tpu.memory_space<vmem>>, vector<1x8x128xf32>
    %174 = vector.shape_cast %173 : vector<1x8x128xf32> to vector<8x128xf32>
    %175 = tpu.concatenate %174, %145 in 1 : vector<8x128xf32>, vector<8x128xf32> -> vector<8x256xf32>
    %c0_47 = arith.constant 0 : index
    %c0_48 = arith.constant 0 : index
    %176 = vector.load %arg1[%c0_47, %c0_48] : memref<256x512xf32, #tpu.memory_space<vmem>>, vector<256x512xf32>
    %cst_49 = arith.constant dense<0.000000e+00> : vector<8x512xf32>
    %177 = tpu.matmul %175, %176, %cst_49 {dimension_numbers = #tpu.dot_dimension_numbers<[1], [0], [0], [1], [0, 0, 1, 1], [], []>} : vector<8x256xf32>, vector<256x512xf32>, vector<8x512xf32> -> vector<8x512xf32>
    %178 = arith.addf %177, %2 : vector<8x512xf32>
    %179 = vector.extract_strided_slice %178 {offsets = [0, 0], sizes = [8, 128], strides = [1, 1]} : vector<8x512xf32> to vector<8x128xf32>
    %180 = arith.negf %179 : vector<8x128xf32>
    %181 = math.exp %180 : vector<8x128xf32>
    %cst_50 = arith.constant 1.000000e+00 : f32
    %182 = vector.broadcast %cst_50 : f32 to vector<8x128xf32>
    %183 = arith.addf %182, %181 : vector<8x128xf32>
    %184 = arith.divf %182, %183 : vector<8x128xf32>
    %185 = vector.extract_strided_slice %178 {offsets = [0, 128], sizes = [8, 128], strides = [1, 1]} : vector<8x512xf32> to vector<8x128xf32>
    %186 = arith.negf %185 : vector<8x128xf32>
    %187 = math.exp %186 : vector<8x128xf32>
    %cst_51 = arith.constant 1.000000e+00 : f32
    %188 = vector.broadcast %cst_51 : f32 to vector<8x128xf32>
    %189 = arith.addf %188, %187 : vector<8x128xf32>
    %190 = arith.divf %188, %189 : vector<8x128xf32>
    %191 = vector.extract_strided_slice %178 {offsets = [0, 256], sizes = [8, 128], strides = [1, 1]} : vector<8x512xf32> to vector<8x128xf32>
    %192 = vector.extract_strided_slice %178 {offsets = [0, 384], sizes = [8, 128], strides = [1, 1]} : vector<8x512xf32> to vector<8x128xf32>
    %193 = arith.mulf %184, %192 : vector<8x128xf32>
    %194 = arith.addf %191, %193 : vector<8x128xf32>
    %195 = math.tanh %194 : vector<8x128xf32>
    %cst_52 = arith.constant 1.000000e+00 : f32
    %196 = vector.broadcast %cst_52 : f32 to vector<8x128xf32>
    %197 = arith.subf %196, %190 : vector<8x128xf32>
    %198 = arith.mulf %197, %195 : vector<8x128xf32>
    %199 = arith.mulf %190, %145 : vector<8x128xf32>
    %200 = arith.addf %198, %199 : vector<8x128xf32>
    %201 = tpu.concatenate %200, %171 in 1 : vector<8x128xf32>, vector<8x128xf32> -> vector<8x256xf32>
    %c0_53 = arith.constant 0 : index
    %c0_54 = arith.constant 0 : index
    %202 = vector.load %arg3[%c0_53, %c0_54] : memref<256x512xf32, #tpu.memory_space<vmem>>, vector<256x512xf32>
    %cst_55 = arith.constant dense<0.000000e+00> : vector<8x512xf32>
    %203 = tpu.matmul %201, %202, %cst_55 {dimension_numbers = #tpu.dot_dimension_numbers<[1], [0], [0], [1], [0, 0, 1, 1], [], []>} : vector<8x256xf32>, vector<256x512xf32>, vector<8x512xf32> -> vector<8x512xf32>
    %204 = arith.addf %203, %5 : vector<8x512xf32>
    %205 = vector.extract_strided_slice %204 {offsets = [0, 0], sizes = [8, 128], strides = [1, 1]} : vector<8x512xf32> to vector<8x128xf32>
    %206 = arith.negf %205 : vector<8x128xf32>
    %207 = math.exp %206 : vector<8x128xf32>
    %cst_56 = arith.constant 1.000000e+00 : f32
    %208 = vector.broadcast %cst_56 : f32 to vector<8x128xf32>
    %209 = arith.addf %208, %207 : vector<8x128xf32>
    %210 = arith.divf %208, %209 : vector<8x128xf32>
    %211 = vector.extract_strided_slice %204 {offsets = [0, 128], sizes = [8, 128], strides = [1, 1]} : vector<8x512xf32> to vector<8x128xf32>
    %212 = arith.negf %211 : vector<8x128xf32>
    %213 = math.exp %212 : vector<8x128xf32>
    %cst_57 = arith.constant 1.000000e+00 : f32
    %214 = vector.broadcast %cst_57 : f32 to vector<8x128xf32>
    %215 = arith.addf %214, %213 : vector<8x128xf32>
    %216 = arith.divf %214, %215 : vector<8x128xf32>
    %217 = vector.extract_strided_slice %204 {offsets = [0, 256], sizes = [8, 128], strides = [1, 1]} : vector<8x512xf32> to vector<8x128xf32>
    %218 = vector.extract_strided_slice %204 {offsets = [0, 384], sizes = [8, 128], strides = [1, 1]} : vector<8x512xf32> to vector<8x128xf32>
    %219 = arith.mulf %210, %218 : vector<8x128xf32>
    %220 = arith.addf %217, %219 : vector<8x128xf32>
    %221 = math.tanh %220 : vector<8x128xf32>
    %cst_58 = arith.constant 1.000000e+00 : f32
    %222 = vector.broadcast %cst_58 : f32 to vector<8x128xf32>
    %223 = arith.subf %222, %216 : vector<8x128xf32>
    %224 = arith.mulf %223, %221 : vector<8x128xf32>
    %225 = arith.mulf %216, %171 : vector<8x128xf32>
    %226 = arith.addf %224, %225 : vector<8x128xf32>
    %c4_i32 = arith.constant 4 : i32
    %227 = arith.index_cast %c4_i32 : i32 to index
    %c0_59 = arith.constant 0 : index
    %c0_60 = arith.constant 0 : index
    %228 = vector.load %arg0[%227, %c0_59, %c0_60] : memref<8x8x128xf32, #tpu.memory_space<vmem>>, vector<1x8x128xf32>
    %229 = vector.shape_cast %228 : vector<1x8x128xf32> to vector<8x128xf32>
    %230 = tpu.concatenate %229, %200 in 1 : vector<8x128xf32>, vector<8x128xf32> -> vector<8x256xf32>
    %c0_61 = arith.constant 0 : index
    %c0_62 = arith.constant 0 : index
    %231 = vector.load %arg1[%c0_61, %c0_62] : memref<256x512xf32, #tpu.memory_space<vmem>>, vector<256x512xf32>
    %cst_63 = arith.constant dense<0.000000e+00> : vector<8x512xf32>
    %232 = tpu.matmul %230, %231, %cst_63 {dimension_numbers = #tpu.dot_dimension_numbers<[1], [0], [0], [1], [0, 0, 1, 1], [], []>} : vector<8x256xf32>, vector<256x512xf32>, vector<8x512xf32> -> vector<8x512xf32>
    %233 = arith.addf %232, %2 : vector<8x512xf32>
    %234 = vector.extract_strided_slice %233 {offsets = [0, 0], sizes = [8, 128], strides = [1, 1]} : vector<8x512xf32> to vector<8x128xf32>
    %235 = arith.negf %234 : vector<8x128xf32>
    %236 = math.exp %235 : vector<8x128xf32>
    %cst_64 = arith.constant 1.000000e+00 : f32
    %237 = vector.broadcast %cst_64 : f32 to vector<8x128xf32>
    %238 = arith.addf %237, %236 : vector<8x128xf32>
    %239 = arith.divf %237, %238 : vector<8x128xf32>
    %240 = vector.extract_strided_slice %233 {offsets = [0, 128], sizes = [8, 128], strides = [1, 1]} : vector<8x512xf32> to vector<8x128xf32>
    %241 = arith.negf %240 : vector<8x128xf32>
    %242 = math.exp %241 : vector<8x128xf32>
    %cst_65 = arith.constant 1.000000e+00 : f32
    %243 = vector.broadcast %cst_65 : f32 to vector<8x128xf32>
    %244 = arith.addf %243, %242 : vector<8x128xf32>
    %245 = arith.divf %243, %244 : vector<8x128xf32>
    %246 = vector.extract_strided_slice %233 {offsets = [0, 256], sizes = [8, 128], strides = [1, 1]} : vector<8x512xf32> to vector<8x128xf32>
    %247 = vector.extract_strided_slice %233 {offsets = [0, 384], sizes = [8, 128], strides = [1, 1]} : vector<8x512xf32> to vector<8x128xf32>
    %248 = arith.mulf %239, %247 : vector<8x128xf32>
    %249 = arith.addf %246, %248 : vector<8x128xf32>
    %250 = math.tanh %249 : vector<8x128xf32>
    %cst_66 = arith.constant 1.000000e+00 : f32
    %251 = vector.broadcast %cst_66 : f32 to vector<8x128xf32>
    %252 = arith.subf %251, %245 : vector<8x128xf32>
    %253 = arith.mulf %252, %250 : vector<8x128xf32>
    %254 = arith.mulf %245, %200 : vector<8x128xf32>
    %255 = arith.addf %253, %254 : vector<8x128xf32>
    %256 = tpu.concatenate %255, %226 in 1 : vector<8x128xf32>, vector<8x128xf32> -> vector<8x256xf32>
    %c0_67 = arith.constant 0 : index
    %c0_68 = arith.constant 0 : index
    %257 = vector.load %arg3[%c0_67, %c0_68] : memref<256x512xf32, #tpu.memory_space<vmem>>, vector<256x512xf32>
    %cst_69 = arith.constant dense<0.000000e+00> : vector<8x512xf32>
    %258 = tpu.matmul %256, %257, %cst_69 {dimension_numbers = #tpu.dot_dimension_numbers<[1], [0], [0], [1], [0, 0, 1, 1], [], []>} : vector<8x256xf32>, vector<256x512xf32>, vector<8x512xf32> -> vector<8x512xf32>
    %259 = arith.addf %258, %5 : vector<8x512xf32>
    %260 = vector.extract_strided_slice %259 {offsets = [0, 0], sizes = [8, 128], strides = [1, 1]} : vector<8x512xf32> to vector<8x128xf32>
    %261 = arith.negf %260 : vector<8x128xf32>
    %262 = math.exp %261 : vector<8x128xf32>
    %cst_70 = arith.constant 1.000000e+00 : f32
    %263 = vector.broadcast %cst_70 : f32 to vector<8x128xf32>
    %264 = arith.addf %263, %262 : vector<8x128xf32>
    %265 = arith.divf %263, %264 : vector<8x128xf32>
    %266 = vector.extract_strided_slice %259 {offsets = [0, 128], sizes = [8, 128], strides = [1, 1]} : vector<8x512xf32> to vector<8x128xf32>
    %267 = arith.negf %266 : vector<8x128xf32>
    %268 = math.exp %267 : vector<8x128xf32>
    %cst_71 = arith.constant 1.000000e+00 : f32
    %269 = vector.broadcast %cst_71 : f32 to vector<8x128xf32>
    %270 = arith.addf %269, %268 : vector<8x128xf32>
    %271 = arith.divf %269, %270 : vector<8x128xf32>
    %272 = vector.extract_strided_slice %259 {offsets = [0, 256], sizes = [8, 128], strides = [1, 1]} : vector<8x512xf32> to vector<8x128xf32>
    %273 = vector.extract_strided_slice %259 {offsets = [0, 384], sizes = [8, 128], strides = [1, 1]} : vector<8x512xf32> to vector<8x128xf32>
    %274 = arith.mulf %265, %273 : vector<8x128xf32>
    %275 = arith.addf %272, %274 : vector<8x128xf32>
    %276 = math.tanh %275 : vector<8x128xf32>
    %cst_72 = arith.constant 1.000000e+00 : f32
    %277 = vector.broadcast %cst_72 : f32 to vector<8x128xf32>
    %278 = arith.subf %277, %271 : vector<8x128xf32>
    %279 = arith.mulf %278, %276 : vector<8x128xf32>
    %280 = arith.mulf %271, %226 : vector<8x128xf32>
    %281 = arith.addf %279, %280 : vector<8x128xf32>
    %c5_i32 = arith.constant 5 : i32
    %282 = arith.index_cast %c5_i32 : i32 to index
    %c0_73 = arith.constant 0 : index
    %c0_74 = arith.constant 0 : index
    %283 = vector.load %arg0[%282, %c0_73, %c0_74] : memref<8x8x128xf32, #tpu.memory_space<vmem>>, vector<1x8x128xf32>
    %284 = vector.shape_cast %283 : vector<1x8x128xf32> to vector<8x128xf32>
    %285 = tpu.concatenate %284, %255 in 1 : vector<8x128xf32>, vector<8x128xf32> -> vector<8x256xf32>
    %c0_75 = arith.constant 0 : index
    %c0_76 = arith.constant 0 : index
    %286 = vector.load %arg1[%c0_75, %c0_76] : memref<256x512xf32, #tpu.memory_space<vmem>>, vector<256x512xf32>
    %cst_77 = arith.constant dense<0.000000e+00> : vector<8x512xf32>
    %287 = tpu.matmul %285, %286, %cst_77 {dimension_numbers = #tpu.dot_dimension_numbers<[1], [0], [0], [1], [0, 0, 1, 1], [], []>} : vector<8x256xf32>, vector<256x512xf32>, vector<8x512xf32> -> vector<8x512xf32>
    %288 = arith.addf %287, %2 : vector<8x512xf32>
    %289 = vector.extract_strided_slice %288 {offsets = [0, 0], sizes = [8, 128], strides = [1, 1]} : vector<8x512xf32> to vector<8x128xf32>
    %290 = arith.negf %289 : vector<8x128xf32>
    %291 = math.exp %290 : vector<8x128xf32>
    %cst_78 = arith.constant 1.000000e+00 : f32
    %292 = vector.broadcast %cst_78 : f32 to vector<8x128xf32>
    %293 = arith.addf %292, %291 : vector<8x128xf32>
    %294 = arith.divf %292, %293 : vector<8x128xf32>
    %295 = vector.extract_strided_slice %288 {offsets = [0, 128], sizes = [8, 128], strides = [1, 1]} : vector<8x512xf32> to vector<8x128xf32>
    %296 = arith.negf %295 : vector<8x128xf32>
    %297 = math.exp %296 : vector<8x128xf32>
    %cst_79 = arith.constant 1.000000e+00 : f32
    %298 = vector.broadcast %cst_79 : f32 to vector<8x128xf32>
    %299 = arith.addf %298, %297 : vector<8x128xf32>
    %300 = arith.divf %298, %299 : vector<8x128xf32>
    %301 = vector.extract_strided_slice %288 {offsets = [0, 256], sizes = [8, 128], strides = [1, 1]} : vector<8x512xf32> to vector<8x128xf32>
    %302 = vector.extract_strided_slice %288 {offsets = [0, 384], sizes = [8, 128], strides = [1, 1]} : vector<8x512xf32> to vector<8x128xf32>
    %303 = arith.mulf %294, %302 : vector<8x128xf32>
    %304 = arith.addf %301, %303 : vector<8x128xf32>
    %305 = math.tanh %304 : vector<8x128xf32>
    %cst_80 = arith.constant 1.000000e+00 : f32
    %306 = vector.broadcast %cst_80 : f32 to vector<8x128xf32>
    %307 = arith.subf %306, %300 : vector<8x128xf32>
    %308 = arith.mulf %307, %305 : vector<8x128xf32>
    %309 = arith.mulf %300, %255 : vector<8x128xf32>
    %310 = arith.addf %308, %309 : vector<8x128xf32>
    %311 = tpu.concatenate %310, %281 in 1 : vector<8x128xf32>, vector<8x128xf32> -> vector<8x256xf32>
    %c0_81 = arith.constant 0 : index
    %c0_82 = arith.constant 0 : index
    %312 = vector.load %arg3[%c0_81, %c0_82] : memref<256x512xf32, #tpu.memory_space<vmem>>, vector<256x512xf32>
    %cst_83 = arith.constant dense<0.000000e+00> : vector<8x512xf32>
    %313 = tpu.matmul %311, %312, %cst_83 {dimension_numbers = #tpu.dot_dimension_numbers<[1], [0], [0], [1], [0, 0, 1, 1], [], []>} : vector<8x256xf32>, vector<256x512xf32>, vector<8x512xf32> -> vector<8x512xf32>
    %314 = arith.addf %313, %5 : vector<8x512xf32>
    %315 = vector.extract_strided_slice %314 {offsets = [0, 0], sizes = [8, 128], strides = [1, 1]} : vector<8x512xf32> to vector<8x128xf32>
    %316 = arith.negf %315 : vector<8x128xf32>
    %317 = math.exp %316 : vector<8x128xf32>
    %cst_84 = arith.constant 1.000000e+00 : f32
    %318 = vector.broadcast %cst_84 : f32 to vector<8x128xf32>
    %319 = arith.addf %318, %317 : vector<8x128xf32>
    %320 = arith.divf %318, %319 : vector<8x128xf32>
    %321 = vector.extract_strided_slice %314 {offsets = [0, 128], sizes = [8, 128], strides = [1, 1]} : vector<8x512xf32> to vector<8x128xf32>
    %322 = arith.negf %321 : vector<8x128xf32>
    %323 = math.exp %322 : vector<8x128xf32>
    %cst_85 = arith.constant 1.000000e+00 : f32
    %324 = vector.broadcast %cst_85 : f32 to vector<8x128xf32>
    %325 = arith.addf %324, %323 : vector<8x128xf32>
    %326 = arith.divf %324, %325 : vector<8x128xf32>
    %327 = vector.extract_strided_slice %314 {offsets = [0, 256], sizes = [8, 128], strides = [1, 1]} : vector<8x512xf32> to vector<8x128xf32>
    %328 = vector.extract_strided_slice %314 {offsets = [0, 384], sizes = [8, 128], strides = [1, 1]} : vector<8x512xf32> to vector<8x128xf32>
    %329 = arith.mulf %320, %328 : vector<8x128xf32>
    %330 = arith.addf %327, %329 : vector<8x128xf32>
    %331 = math.tanh %330 : vector<8x128xf32>
    %cst_86 = arith.constant 1.000000e+00 : f32
    %332 = vector.broadcast %cst_86 : f32 to vector<8x128xf32>
    %333 = arith.subf %332, %326 : vector<8x128xf32>
    %334 = arith.mulf %333, %331 : vector<8x128xf32>
    %335 = arith.mulf %326, %281 : vector<8x128xf32>
    %336 = arith.addf %334, %335 : vector<8x128xf32>
    %c6_i32 = arith.constant 6 : i32
    %337 = arith.index_cast %c6_i32 : i32 to index
    %c0_87 = arith.constant 0 : index
    %c0_88 = arith.constant 0 : index
    %338 = vector.load %arg0[%337, %c0_87, %c0_88] : memref<8x8x128xf32, #tpu.memory_space<vmem>>, vector<1x8x128xf32>
    %339 = vector.shape_cast %338 : vector<1x8x128xf32> to vector<8x128xf32>
    %340 = tpu.concatenate %339, %310 in 1 : vector<8x128xf32>, vector<8x128xf32> -> vector<8x256xf32>
    %c0_89 = arith.constant 0 : index
    %c0_90 = arith.constant 0 : index
    %341 = vector.load %arg1[%c0_89, %c0_90] : memref<256x512xf32, #tpu.memory_space<vmem>>, vector<256x512xf32>
    %cst_91 = arith.constant dense<0.000000e+00> : vector<8x512xf32>
    %342 = tpu.matmul %340, %341, %cst_91 {dimension_numbers = #tpu.dot_dimension_numbers<[1], [0], [0], [1], [0, 0, 1, 1], [], []>} : vector<8x256xf32>, vector<256x512xf32>, vector<8x512xf32> -> vector<8x512xf32>
    %343 = arith.addf %342, %2 : vector<8x512xf32>
    %344 = vector.extract_strided_slice %343 {offsets = [0, 0], sizes = [8, 128], strides = [1, 1]} : vector<8x512xf32> to vector<8x128xf32>
    %345 = arith.negf %344 : vector<8x128xf32>
    %346 = math.exp %345 : vector<8x128xf32>
    %cst_92 = arith.constant 1.000000e+00 : f32
    %347 = vector.broadcast %cst_92 : f32 to vector<8x128xf32>
    %348 = arith.addf %347, %346 : vector<8x128xf32>
    %349 = arith.divf %347, %348 : vector<8x128xf32>
    %350 = vector.extract_strided_slice %343 {offsets = [0, 128], sizes = [8, 128], strides = [1, 1]} : vector<8x512xf32> to vector<8x128xf32>
    %351 = arith.negf %350 : vector<8x128xf32>
    %352 = math.exp %351 : vector<8x128xf32>
    %cst_93 = arith.constant 1.000000e+00 : f32
    %353 = vector.broadcast %cst_93 : f32 to vector<8x128xf32>
    %354 = arith.addf %353, %352 : vector<8x128xf32>
    %355 = arith.divf %353, %354 : vector<8x128xf32>
    %356 = vector.extract_strided_slice %343 {offsets = [0, 256], sizes = [8, 128], strides = [1, 1]} : vector<8x512xf32> to vector<8x128xf32>
    %357 = vector.extract_strided_slice %343 {offsets = [0, 384], sizes = [8, 128], strides = [1, 1]} : vector<8x512xf32> to vector<8x128xf32>
    %358 = arith.mulf %349, %357 : vector<8x128xf32>
    %359 = arith.addf %356, %358 : vector<8x128xf32>
    %360 = math.tanh %359 : vector<8x128xf32>
    %cst_94 = arith.constant 1.000000e+00 : f32
    %361 = vector.broadcast %cst_94 : f32 to vector<8x128xf32>
    %362 = arith.subf %361, %355 : vector<8x128xf32>
    %363 = arith.mulf %362, %360 : vector<8x128xf32>
    %364 = arith.mulf %355, %310 : vector<8x128xf32>
    %365 = arith.addf %363, %364 : vector<8x128xf32>
    %366 = tpu.concatenate %365, %336 in 1 : vector<8x128xf32>, vector<8x128xf32> -> vector<8x256xf32>
    %c0_95 = arith.constant 0 : index
    %c0_96 = arith.constant 0 : index
    %367 = vector.load %arg3[%c0_95, %c0_96] : memref<256x512xf32, #tpu.memory_space<vmem>>, vector<256x512xf32>
    %cst_97 = arith.constant dense<0.000000e+00> : vector<8x512xf32>
    %368 = tpu.matmul %366, %367, %cst_97 {dimension_numbers = #tpu.dot_dimension_numbers<[1], [0], [0], [1], [0, 0, 1, 1], [], []>} : vector<8x256xf32>, vector<256x512xf32>, vector<8x512xf32> -> vector<8x512xf32>
    %369 = arith.addf %368, %5 : vector<8x512xf32>
    %370 = vector.extract_strided_slice %369 {offsets = [0, 0], sizes = [8, 128], strides = [1, 1]} : vector<8x512xf32> to vector<8x128xf32>
    %371 = arith.negf %370 : vector<8x128xf32>
    %372 = math.exp %371 : vector<8x128xf32>
    %cst_98 = arith.constant 1.000000e+00 : f32
    %373 = vector.broadcast %cst_98 : f32 to vector<8x128xf32>
    %374 = arith.addf %373, %372 : vector<8x128xf32>
    %375 = arith.divf %373, %374 : vector<8x128xf32>
    %376 = vector.extract_strided_slice %369 {offsets = [0, 128], sizes = [8, 128], strides = [1, 1]} : vector<8x512xf32> to vector<8x128xf32>
    %377 = arith.negf %376 : vector<8x128xf32>
    %378 = math.exp %377 : vector<8x128xf32>
    %cst_99 = arith.constant 1.000000e+00 : f32
    %379 = vector.broadcast %cst_99 : f32 to vector<8x128xf32>
    %380 = arith.addf %379, %378 : vector<8x128xf32>
    %381 = arith.divf %379, %380 : vector<8x128xf32>
    %382 = vector.extract_strided_slice %369 {offsets = [0, 256], sizes = [8, 128], strides = [1, 1]} : vector<8x512xf32> to vector<8x128xf32>
    %383 = vector.extract_strided_slice %369 {offsets = [0, 384], sizes = [8, 128], strides = [1, 1]} : vector<8x512xf32> to vector<8x128xf32>
    %384 = arith.mulf %375, %383 : vector<8x128xf32>
    %385 = arith.addf %382, %384 : vector<8x128xf32>
    %386 = math.tanh %385 : vector<8x128xf32>
    %cst_100 = arith.constant 1.000000e+00 : f32
    %387 = vector.broadcast %cst_100 : f32 to vector<8x128xf32>
    %388 = arith.subf %387, %381 : vector<8x128xf32>
    %389 = arith.mulf %388, %386 : vector<8x128xf32>
    %390 = arith.mulf %381, %336 : vector<8x128xf32>
    %391 = arith.addf %389, %390 : vector<8x128xf32>
    %c7_i32 = arith.constant 7 : i32
    %392 = arith.index_cast %c7_i32 : i32 to index
    %c0_101 = arith.constant 0 : index
    %c0_102 = arith.constant 0 : index
    %393 = vector.load %arg0[%392, %c0_101, %c0_102] : memref<8x8x128xf32, #tpu.memory_space<vmem>>, vector<1x8x128xf32>
    %394 = vector.shape_cast %393 : vector<1x8x128xf32> to vector<8x128xf32>
    %395 = tpu.concatenate %394, %365 in 1 : vector<8x128xf32>, vector<8x128xf32> -> vector<8x256xf32>
    %c0_103 = arith.constant 0 : index
    %c0_104 = arith.constant 0 : index
    %396 = vector.load %arg1[%c0_103, %c0_104] : memref<256x512xf32, #tpu.memory_space<vmem>>, vector<256x512xf32>
    %cst_105 = arith.constant dense<0.000000e+00> : vector<8x512xf32>
    %397 = tpu.matmul %395, %396, %cst_105 {dimension_numbers = #tpu.dot_dimension_numbers<[1], [0], [0], [1], [0, 0, 1, 1], [], []>} : vector<8x256xf32>, vector<256x512xf32>, vector<8x512xf32> -> vector<8x512xf32>
    %398 = arith.addf %397, %2 : vector<8x512xf32>
    %399 = vector.extract_strided_slice %398 {offsets = [0, 0], sizes = [8, 128], strides = [1, 1]} : vector<8x512xf32> to vector<8x128xf32>
    %400 = arith.negf %399 : vector<8x128xf32>
    %401 = math.exp %400 : vector<8x128xf32>
    %cst_106 = arith.constant 1.000000e+00 : f32
    %402 = vector.broadcast %cst_106 : f32 to vector<8x128xf32>
    %403 = arith.addf %402, %401 : vector<8x128xf32>
    %404 = arith.divf %402, %403 : vector<8x128xf32>
    %405 = vector.extract_strided_slice %398 {offsets = [0, 128], sizes = [8, 128], strides = [1, 1]} : vector<8x512xf32> to vector<8x128xf32>
    %406 = arith.negf %405 : vector<8x128xf32>
    %407 = math.exp %406 : vector<8x128xf32>
    %cst_107 = arith.constant 1.000000e+00 : f32
    %408 = vector.broadcast %cst_107 : f32 to vector<8x128xf32>
    %409 = arith.addf %408, %407 : vector<8x128xf32>
    %410 = arith.divf %408, %409 : vector<8x128xf32>
    %411 = vector.extract_strided_slice %398 {offsets = [0, 256], sizes = [8, 128], strides = [1, 1]} : vector<8x512xf32> to vector<8x128xf32>
    %412 = vector.extract_strided_slice %398 {offsets = [0, 384], sizes = [8, 128], strides = [1, 1]} : vector<8x512xf32> to vector<8x128xf32>
    %413 = arith.mulf %404, %412 : vector<8x128xf32>
    %414 = arith.addf %411, %413 : vector<8x128xf32>
    %415 = math.tanh %414 : vector<8x128xf32>
    %cst_108 = arith.constant 1.000000e+00 : f32
    %416 = vector.broadcast %cst_108 : f32 to vector<8x128xf32>
    %417 = arith.subf %416, %410 : vector<8x128xf32>
    %418 = arith.mulf %417, %415 : vector<8x128xf32>
    %419 = arith.mulf %410, %365 : vector<8x128xf32>
    %420 = arith.addf %418, %419 : vector<8x128xf32>
    %421 = tpu.concatenate %420, %391 in 1 : vector<8x128xf32>, vector<8x128xf32> -> vector<8x256xf32>
    %c0_109 = arith.constant 0 : index
    %c0_110 = arith.constant 0 : index
    %422 = vector.load %arg3[%c0_109, %c0_110] : memref<256x512xf32, #tpu.memory_space<vmem>>, vector<256x512xf32>
    %cst_111 = arith.constant dense<0.000000e+00> : vector<8x512xf32>
    %423 = tpu.matmul %421, %422, %cst_111 {dimension_numbers = #tpu.dot_dimension_numbers<[1], [0], [0], [1], [0, 0, 1, 1], [], []>} : vector<8x256xf32>, vector<256x512xf32>, vector<8x512xf32> -> vector<8x512xf32>
    %424 = arith.addf %423, %5 : vector<8x512xf32>
    %425 = vector.extract_strided_slice %424 {offsets = [0, 0], sizes = [8, 128], strides = [1, 1]} : vector<8x512xf32> to vector<8x128xf32>
    %426 = arith.negf %425 : vector<8x128xf32>
    %427 = math.exp %426 : vector<8x128xf32>
    %cst_112 = arith.constant 1.000000e+00 : f32
    %428 = vector.broadcast %cst_112 : f32 to vector<8x128xf32>
    %429 = arith.addf %428, %427 : vector<8x128xf32>
    %430 = arith.divf %428, %429 : vector<8x128xf32>
    %431 = vector.extract_strided_slice %424 {offsets = [0, 128], sizes = [8, 128], strides = [1, 1]} : vector<8x512xf32> to vector<8x128xf32>
    %432 = arith.negf %431 : vector<8x128xf32>
    %433 = math.exp %432 : vector<8x128xf32>
    %cst_113 = arith.constant 1.000000e+00 : f32
    %434 = vector.broadcast %cst_113 : f32 to vector<8x128xf32>
    %435 = arith.addf %434, %433 : vector<8x128xf32>
    %436 = arith.divf %434, %435 : vector<8x128xf32>
    %437 = vector.extract_strided_slice %424 {offsets = [0, 256], sizes = [8, 128], strides = [1, 1]} : vector<8x512xf32> to vector<8x128xf32>
    %438 = vector.extract_strided_slice %424 {offsets = [0, 384], sizes = [8, 128], strides = [1, 1]} : vector<8x512xf32> to vector<8x128xf32>
    %439 = arith.mulf %430, %438 : vector<8x128xf32>
    %440 = arith.addf %437, %439 : vector<8x128xf32>
    %441 = math.tanh %440 : vector<8x128xf32>
    %cst_114 = arith.constant 1.000000e+00 : f32
    %442 = vector.broadcast %cst_114 : f32 to vector<8x128xf32>
    %443 = arith.subf %442, %436 : vector<8x128xf32>
    %444 = arith.mulf %443, %441 : vector<8x128xf32>
    %445 = arith.mulf %436, %391 : vector<8x128xf32>
    %446 = arith.addf %444, %445 : vector<8x128xf32>
    %c8_i32 = arith.constant 8 : i32
    %c0_115 = arith.constant 0 : index
    %c0_116 = arith.constant 0 : index
    %447 = vector.load %arg5[%c0_115, %c0_116] : memref<8x128xf32, #tpu.memory_space<vmem>>, vector<8x128xf32>
    tpu.vector_store %arg5[%c0_115, %c0_116], %420 {strides = array<i32>} : memref<8x128xf32, #tpu.memory_space<vmem>>, vector<8x128xf32>,
    %c0_117 = arith.constant 0 : index
    %c0_118 = arith.constant 0 : index
    %448 = vector.load %arg6[%c0_117, %c0_118] : memref<8x128xf32, #tpu.memory_space<vmem>>, vector<8x128xf32>
    tpu.vector_store %arg6[%c0_117, %c0_118], %446 {strides = array<i32>} : memref<8x128xf32, #tpu.memory_space<vmem>>, vector<8x128xf32>,
    return
  }
}

</mosaic_0001>

<llo_original>
// kernel: tpu_custom_call.1
$region0: #{tpu_custom_call.1}
  #allocation0 [shape = 'u32[]', space=smem, size = 0x4, offset = 0x4, fixed_abs, tag = 'smem constant byte address 0x4 - core index']
  #allocation1 [shape = 'u32[72,128]{1,0:T(1,128)}', space=vmem, size = 0x9000, scoped, tag = 'internal scratch']
  %s0 = inlined_call_operand.hbm [shape: f32[8,8,128], index: 0, kind: input, shape index: {}]
  %s1 = inlined_call_operand.hbm [shape: f32[256,512], index: 1, kind: input, shape index: {}]
  %s2 = inlined_call_operand.hbm [shape: f32[1,512], index: 2, kind: input, shape index: {}]
  %s3 = inlined_call_operand.hbm [shape: f32[256,512], index: 3, kind: input, shape index: {}]
  %s4 = inlined_call_operand.hbm [shape: f32[1,512], index: 4, kind: input, shape index: {}]
  %s5 = inlined_call_operand.hbm [shape: f32[8,128], index: 5, kind: output, shape index: {0}]
  %s6 = inlined_call_operand.hbm [shape: f32[8,128], index: 6, kind: output, shape index: {1}]
  %7 = xla_tuple %s5, %s6
  %s8 = sld [smem:[#allocation0]]
  $region58: #{tpu_custom_call.1} parent=0
    _
  %s10 = ssub.s32 1, %s8
  %s11 = scalar_select 0, %s10, %s8
  $region1: #{tpu_custom_call.1} parent=0
    #allocation2 [shape = 'u8[32768]{0}', space=vmem, size = 0x8000, scoped, tag = 'input window, operand 0, single buffered']
    #allocation3 [shape = 's32[1]{0}', space=sflag, size = 0x4, scoped, tag = 'scoped memory for tpu_custom_call.1']
    #allocation4 [shape = 's32[1]{0}', space=sflag, size = 0x4, scoped, tag = 'scoped memory for tpu_custom_call.1']
    #allocation5 [shape = 'u8[524288]{0}', space=vmem, size = 0x80000, scoped, tag = 'input window, operand 1, single buffered']
    #allocation6 [shape = 's32[1]{0}', space=sflag, size = 0x4, scoped, tag = 'scoped memory for tpu_custom_call.1']
    #allocation7 [shape = 'u8[2048]{0}', space=vmem, size = 0x800, scoped, tag = 'input window, operand 2, single buffered']
    #allocation8 [shape = 'u8[524288]{0}', space=vmem, size = 0x80000, scoped, tag = 'input window, operand 3, single buffered']
    #allocation9 [shape = 's32[1]{0}', space=sflag, size = 0x4, scoped, tag = 'scoped memory for tpu_custom_call.1']
    #allocation10 [shape = 'u8[2048]{0}', space=vmem, size = 0x800, scoped, tag = 'input window, operand 4, single buffered']
    #allocation11 [shape = 'u8[4096]{0}', space=vmem, size = 0x1000, scoped, tag = 'output window, operand 0, single buffered']
    #allocation12 [shape = 'u8[4096]{0}', space=vmem, size = 0x1000, scoped, tag = 'output window, operand 1, single buffered']
    #allocation13 [shape = 's32[1]{0}', space=sflag, size = 0x4, scoped, tag = 'scoped memory for tpu_custom_call.1']
    %12 = vsyncpa [#allocation3], 0
    %13 = vsyncpa [#allocation6], 0
    %14 = vsyncpa [#allocation9], 0
    %15 = vsyncpa [#allocation4], 0
    %16 = vsyncpa [#allocation13], 0
    // Predicated region
    $region2: #{tpu_custom_call.1} parent=1 // pred_check
      _
    $region3: #{tpu_custom_call.1} parent=1 // pred_check_branch
      %18 = sbr.rel (0) target = $region5
    $region4: #{tpu_custom_call.1} parent=1 // pred_region
      %20 = vsyncadd [#allocation3], 0
      %s21 = sshll.u32 %s0, 4
      %s22 = int_to_ptr.hbm [resolvable:$true] %s21
      %s23 = sshll.u32 [#allocation2], 4
      %s24 = int_to_ptr.vmem [resolvable:$true] %s23
      %29 = dma.hbm_to_vmem [thread:$0]  %s22, 1024, %s24, [#allocation3], 128, 128, 8
    $region5: #{tpu_custom_call.1} parent=1 // pred_fallthru
      _
    // Predicated region
    $region6: #{tpu_custom_call.1} parent=1 // pred_check
      _
    $region7: #{tpu_custom_call.1} parent=1 // pred_check_branch
      %31 = sbr.rel (0) target = $region9
    $region8: #{tpu_custom_call.1} parent=1 // pred_region
      %33 = vsyncadd [#allocation6], 0
      %s34 = sshll.u32 %s1, 4
      %s35 = int_to_ptr.hbm [resolvable:$true] %s34
      %s36 = sshll.u32 [#allocation5], 4
      %s37 = int_to_ptr.vmem [resolvable:$true] %s36
      %42 = dma.hbm_to_vmem [thread:$0]  %s35, 16384, %s37, [#allocation6], 512, 512, 32
    $region9: #{tpu_custom_call.1} parent=1 // pred_fallthru
      _
    // Predicated region
    $region10: #{tpu_custom_call.1} parent=1 // pred_check
      _
    $region11: #{tpu_custom_call.1} parent=1 // pred_check_branch
      %44 = sbr.rel (0) target = $region13
    $region12: #{tpu_custom_call.1} parent=1 // pred_region
      %46 = vsyncadd [#allocation6], 0
      %s48 = sshll.u32 %s2, 4
      %s49 = int_to_ptr.hbm [resolvable:$true] %s48
      %s50 = sshll.u32 [#allocation7], 4
      %s51 = int_to_ptr.vmem [resolvable:$true] %s50
      %53 = dma.hbm_to_vmem [thread:$0]  %s49, 64, %s51, [#allocation6]
    $region13: #{tpu_custom_call.1} parent=1 // pred_fallthru
      _
    // Predicated region
    $region14: #{tpu_custom_call.1} parent=1 // pred_check
      _
    $region15: #{tpu_custom_call.1} parent=1 // pred_check_branch
      %55 = sbr.rel (0) target = $region17
    $region16: #{tpu_custom_call.1} parent=1 // pred_region
      %57 = vsyncadd [#allocation9], 0
      %s58 = sshll.u32 %s3, 4
      %s59 = int_to_ptr.hbm [resolvable:$true] %s58
      %s60 = sshll.u32 [#allocation8], 4
      %s61 = int_to_ptr.vmem [resolvable:$true] %s60
      %66 = dma.hbm_to_vmem [thread:$0]  %s59, 16384, %s61, [#allocation9], 512, 512, 32
    $region17: #{tpu_custom_call.1} parent=1 // pred_fallthru
      _
    // Predicated region
    $region18: #{tpu_custom_call.1} parent=1 // pred_check
      _
    $region19: #{tpu_custom_call.1} parent=1 // pred_check_branch
      %68 = sbr.rel (0) target = $region21
    $region20: #{tpu_custom_call.1} parent=1 // pred_region
      %70 = vsyncadd [#allocation9], 0
      %s72 = sshll.u32 %s4, 4
      %s73 = int_to_ptr.hbm [resolvable:$true] %s72
      %s74 = sshll.u32 [#allocation10], 4
      %s75 = int_to_ptr.vmem [resolvable:$true] %s74
      %77 = dma.hbm_to_vmem [thread:$0]  %s73, 64, %s75, [#allocation9]
    $region21: #{tpu_custom_call.1} parent=1 // pred_fallthru
      _
    // Predicated region
    $region22: #{tpu_custom_call.1} parent=1 // pred_check
      _
    $region23: #{tpu_custom_call.1} parent=1 // pred_check_branch
      %79 = sbr.rel (0) target = $region25
    $region24: #{tpu_custom_call.1} parent=1 // pred_region
      %81 = dma.done [#allocation3], 1024
    $region25: #{tpu_custom_call.1} parent=1 // pred_fallthru
      _
    // Predicated region
    $region26: #{tpu_custom_call.1} parent=1 // pred_check
      _
    $region27: #{tpu_custom_call.1} parent=1 // pred_check_branch
      %83 = sbr.rel (0) target = $region29
    $region28: #{tpu_custom_call.1} parent=1 // pred_region
      %85 = dma.done [#allocation6], 16384
    $region29: #{tpu_custom_call.1} parent=1 // pred_fallthru
      _
    // Predicated region
    $region30: #{tpu_custom_call.1} parent=1 // pred_check
      _
    $region31: #{tpu_custom_call.1} parent=1 // pred_check_branch
      %87 = sbr.rel (0) target = $region33
    $region32: #{tpu_custom_call.1} parent=1 // pred_region
      %89 = dma.done [#allocation6], 64
    $region33: #{tpu_custom_call.1} parent=1 // pred_fallthru
      _
    // Predicated region
    $region34: #{tpu_custom_call.1} parent=1 // pred_check
      _
    $region35: #{tpu_custom_call.1} parent=1 // pred_check_branch
      %91 = sbr.rel (0) target = $region37
    $region36: #{tpu_custom_call.1} parent=1 // pred_region
      %93 = dma.done [#allocation9], 16384
    $region37: #{tpu_custom_call.1} parent=1 // pred_fallthru
      _
    // Predicated region
    $region38: #{tpu_custom_call.1} parent=1 // pred_check
      _
    $region39: #{tpu_custom_call.1} parent=1 // pred_check_branch
      %95 = sbr.rel (0) target = $region41
    $region40: #{tpu_custom_call.1} parent=1 // pred_region
      %97 = dma.done [#allocation9], 64
    $region41: #{tpu_custom_call.1} parent=1 // pred_fallthru
      _
    %v98 = vld [vmem:[#allocation7] sm:$0xf]
    %v100 = vperm.slane %v98, 0
    %v101 = vperm.slane %v98, 1
    %v102 = vperm.slane %v98, 2
    %v103 = vperm.slane %v98, 3
    %v108 = vld [vmem:[#allocation10] sm:$0xf]
    %v110 = vperm.slane %v108, 0
    %v111 = vperm.slane %v108, 1
    %v112 = vperm.slane %v108, 2
    %v113 = vperm.slane %v108, 3
    %v118 = vld [vmem:[#allocation2] sm:$0xff]
    %v119 = vld [vmem:[#allocation5] sm:$0xff]
    %v120 = vld [vmem:[#allocation5 + $0x8] sm:$0xff]
    %v121 = vld [vmem:[#allocation5 + $0x10] sm:$0xff]
    %v122 = vld [vmem:[#allocation5 + $0x18] sm:$0xff]
    %v123 = vld [vmem:[#allocation5 + $0x20] sm:$0xff]
    %v124 = vld [vmem:[#allocation5 + $0x28] sm:$0xff]
    %v125 = vld [vmem:[#allocation5 + $0x30] sm:$0xff]
    %v126 = vld [vmem:[#allocation5 + $0x38] sm:$0xff]
    %v127 = vld [vmem:[#allocation5 + $0x40] sm:$0xff]
    %v128 = vld [vmem:[#allocation5 + $0x48] sm:$0xff]
    %v129 = vld [vmem:[#allocation5 + $0x50] sm:$0xff]
    %v130 = vld [vmem:[#allocation5 + $0x58] sm:$0xff]
    %v131 = vld [vmem:[#allocation5 + $0x60] sm:$0xff]
    %v132 = vld [vmem:[#allocation5 + $0x68] sm:$0xff]
    %v133 = vld [vmem:[#allocation5 + $0x70] sm:$0xff]
    %v134 = vld [vmem:[#allocation5 + $0x78] sm:$0xff]
    %v135 = vld [vmem:[#allocation5 + $0x80] sm:$0xff]
    %v136 = vld [vmem:[#allocation5 + $0x88] sm:$0xff]
    %v137 = vld [vmem:[#allocation5 + $0x90] sm:$0xff]
    %v138 = vld [vmem:[#allocation5 + $0x98] sm:$0xff]
    %v139 = vld [vmem:[#allocation5 + $0xa0] sm:$0xff]
    %v140 = vld [vmem:[#allocation5 + $0xa8] sm:$0xff]
    %v141 = vld [vmem:[#allocation5 + $0xb0] sm:$0xff]
    %v142 = vld [vmem:[#allocation5 + $0xb8] sm:$0xff]
    %v143 = vld [vmem:[#allocation5 + $0xc0] sm:$0xff]
    %v144 = vld [vmem:[#allocation5 + $0xc8] sm:$0xff]
    %v145 = vld [vmem:[#allocation5 + $0xd0] sm:$0xff]
    %v146 = vld [vmem:[#allocation5 + $0xd8] sm:$0xff]
    %v147 = vld [vmem:[#allocation5 + $0xe0] sm:$0xff]
    %v148 = vld [vmem:[#allocation5 + $0xe8] sm:$0xff]
    %v149 = vld [vmem:[#allocation5 + $0xf0] sm:$0xff]
    %v150 = vld [vmem:[#allocation5 + $0xf8] sm:$0xff]
    %v151 = vld [vmem:[#allocation5 + $0x100] sm:$0xff]
    %v152 = vld [vmem:[#allocation5 + $0x108] sm:$0xff]
    %v153 = vld [vmem:[#allocation5 + $0x110] sm:$0xff]
    %v154 = vld [vmem:[#allocation5 + $0x118] sm:$0xff]
    %v155 = vld [vmem:[#allocation5 + $0x120] sm:$0xff]
    %v156 = vld [vmem:[#allocation5 + $0x128] sm:$0xff]
    %v157 = vld [vmem:[#allocation5 + $0x130] sm:$0xff]
    %v158 = vld [vmem:[#allocation5 + $0x138] sm:$0xff]
    %v159 = vld [vmem:[#allocation5 + $0x140] sm:$0xff]
    %v160 = vld [vmem:[#allocation5 + $0x148] sm:$0xff]
    %v161 = vld [vmem:[#allocation5 + $0x150] sm:$0xff]
    %v162 = vld [vmem:[#allocation5 + $0x158] sm:$0xff]
    %v163 = vld [vmem:[#allocation5 + $0x160] sm:$0xff]
    %v164 = vld [vmem:[#allocation5 + $0x168] sm:$0xff]
    %v165 = vld [vmem:[#allocation5 + $0x170] sm:$0xff]
    %v166 = vld [vmem:[#allocation5 + $0x178] sm:$0xff]
    %v167 = vld [vmem:[#allocation5 + $0x180] sm:$0xff]
    %v168 = vld [vmem:[#allocation5 + $0x188] sm:$0xff]
    %v169 = vld [vmem:[#allocation5 + $0x190] sm:$0xff]
    %v170 = vld [vmem:[#allocation5 + $0x198] sm:$0xff]
    %v171 = vld [vmem:[#allocation5 + $0x1a0] sm:$0xff]
    %v172 = vld [vmem:[#allocation5 + $0x1a8] sm:$0xff]
    %v173 = vld [vmem:[#allocation5 + $0x1b0] sm:$0xff]
    %v174 = vld [vmem:[#allocation5 + $0x1b8] sm:$0xff]
    %v175 = vld [vmem:[#allocation5 + $0x1c0] sm:$0xff]
    %v176 = vld [vmem:[#allocation5 + $0x1c8] sm:$0xff]
    %v177 = vld [vmem:[#allocation5 + $0x1d0] sm:$0xff]
    %v178 = vld [vmem:[#allocation5 + $0x1d8] sm:$0xff]
    %v179 = vld [vmem:[#allocation5 + $0x1e0] sm:$0xff]
    %v180 = vld [vmem:[#allocation5 + $0x1e8] sm:$0xff]
    %v181 = vld [vmem:[#allocation5 + $0x1f0] sm:$0xff]
    %v182 = vld [vmem:[#allocation5 + $0x1f8] sm:$0xff]
    %v183 = vld [vmem:[#allocation5 + $0x200] sm:$0xff]
    %v184 = vld [vmem:[#allocation5 + $0x208] sm:$0xff]
    %v185 = vld [vmem:[#allocation5 + $0x210] sm:$0xff]
    %v186 = vld [vmem:[#allocation5 + $0x218] sm:$0xff]
    %v187 = vld [vmem:[#allocation5 + $0x220] sm:$0xff]
    %v188 = vld [vmem:[#allocation5 + $0x228] sm:$0xff]
    %v189 = vld [vmem:[#allocation5 + $0x230] sm:$0xff]
    %v190 = vld [vmem:[#allocation5 + $0x238] sm:$0xff]
    %v191 = vld [vmem:[#allocation5 + $0x240] sm:$0xff]
    %v192 = vld [vmem:[#allocation5 + $0x248] sm:$0xff]
    %v193 = vld [vmem:[#allocation5 + $0x250] sm:$0xff]
    %v194 = vld [vmem:[#allocation5 + $0x258] sm:$0xff]
    %v195 = vld [vmem:[#allocation5 + $0x260] sm:$0xff]
    %v196 = vld [vmem:[#allocation5 + $0x268] sm:$0xff]
    %v197 = vld [vmem:[#allocation5 + $0x270] sm:$0xff]
    %v198 = vld [vmem:[#allocation5 + $0x278] sm:$0xff]
    %v199 = vld [vmem:[#allocation5 + $0x280] sm:$0xff]
    %v200 = vld [vmem:[#allocation5 + $0x288] sm:$0xff]
    %v201 = vld [vmem:[#allocation5 + $0x290] sm:$0xff]
    %v202 = vld [vmem:[#allocation5 + $0x298] sm:$0xff]
    %v203 = vld [vmem:[#allocation5 + $0x2a0] sm:$0xff]
    %v204 = vld [vmem:[#allocation5 + $0x2a8] sm:$0xff]
    %v205 = vld [vmem:[#allocation5 + $0x2b0] sm:$0xff]
    %v206 = vld [vmem:[#allocation5 + $0x2b8] sm:$0xff]
    %v207 = vld [vmem:[#allocation5 + $0x2c0] sm:$0xff]
    %v208 = vld [vmem:[#allocation5 + $0x2c8] sm:$0xff]
    %v209 = vld [vmem:[#allocation5 + $0x2d0] sm:$0xff]
    %v210 = vld [vmem:[#allocation5 + $0x2d8] sm:$0xff]
    %v211 = vld [vmem:[#allocation5 + $0x2e0] sm:$0xff]
    %v212 = vld [vmem:[#allocation5 + $0x2e8] sm:$0xff]
    %v213 = vld [vmem:[#allocation5 + $0x2f0] sm:$0xff]
    %v214 = vld [vmem:[#allocation5 + $0x2f8] sm:$0xff]
    %v215 = vld [vmem:[#allocation5 + $0x300] sm:$0xff]
    %v216 = vld [vmem:[#allocation5 + $0x308] sm:$0xff]
    %v217 = vld [vmem:[#allocation5 + $0x310] sm:$0xff]
    %v218 = vld [vmem:[#allocation5 + $0x318] sm:$0xff]
    %v219 = vld [vmem:[#allocation5 + $0x320] sm:$0xff]
    %v220 = vld [vmem:[#allocation5 + $0x328] sm:$0xff]
    %v221 = vld [vmem:[#allocation5 + $0x330] sm:$0xff]
    %v222 = vld [vmem:[#allocation5 + $0x338] sm:$0xff]
    %v223 = vld [vmem:[#allocation5 + $0x340] sm:$0xff]
    %v224 = vld [vmem:[#allocation5 + $0x348] sm:$0xff]
    %v225 = vld [vmem:[#allocation5 + $0x350] sm:$0xff]
    %v226 = vld [vmem:[#allocation5 + $0x358] sm:$0xff]
    %v227 = vld [vmem:[#allocation5 + $0x360] sm:$0xff]
    %v228 = vld [vmem:[#allocation5 + $0x368] sm:$0xff]
    %v229 = vld [vmem:[#allocation5 + $0x370] sm:$0xff]
    %v230 = vld [vmem:[#allocation5 + $0x378] sm:$0xff]
    %v231 = vld [vmem:[#allocation5 + $0x380] sm:$0xff]
    %v232 = vld [vmem:[#allocation5 + $0x388] sm:$0xff]
    %v233 = vld [vmem:[#allocation5 + $0x390] sm:$0xff]
    %v234 = vld [vmem:[#allocation5 + $0x398] sm:$0xff]
    %v235 = vld [vmem:[#allocation5 + $0x3a0] sm:$0xff]
    %v236 = vld [vmem:[#allocation5 + $0x3a8] sm:$0xff]
    %v237 = vld [vmem:[#allocation5 + $0x3b0] sm:$0xff]
    %v238 = vld [vmem:[#allocation5 + $0x3b8] sm:$0xff]
    %v239 = vld [vmem:[#allocation5 + $0x3c0] sm:$0xff]
    %v240 = vld [vmem:[#allocation5 + $0x3c8] sm:$0xff]
    %v241 = vld [vmem:[#allocation5 + $0x3d0] sm:$0xff]
    %v242 = vld [vmem:[#allocation5 + $0x3d8] sm:$0xff]
    %v243 = vld [vmem:[#allocation5 + $0x3e0] sm:$0xff]
    %v244 = vld [vmem:[#allocation5 + $0x3e8] sm:$0xff]
    %v245 = vld [vmem:[#allocation5 + $0x3f0] sm:$0xff]
    %v246 = vld [vmem:[#allocation5 + $0x3f8] sm:$0xff]
    %247 = vmatpush.msra.mxu0 %v179
    %248 = vmatpush.msra.mxu0 %v175
    %249 = vmatpush.msra.mxu0 %v171
    %250 = vmatpush.msra.mxu0 %v167
    %251 = vmatpush.msra.mxu0 %v163
    %252 = vmatpush.msra.mxu0 %v159
    %253 = vmatpush.msra.mxu0 %v155
    %254 = vmatpush.msra.mxu0 %v151
    %255 = vmatpush.msra.mxu0 %v147
    %256 = vmatpush.msra.mxu0 %v143
    %257 = vmatpush.msra.mxu0 %v139
    %258 = vmatpush.msra.mxu0 %v135
    %259 = vmatpush.msra.mxu0 %v131
    %260 = vmatpush.msra.mxu0 %v127
    %261 = vmatpush.msra.mxu0 %v123
    %262 = vmatpush.msra.mxu0 %v119
    %263 = vmatmul.f32.gmra.mxu0 %v118
    %v264 = vpop.f32.mrf.mxu0
    %v265 = vadd.f32 %v100, %v264
    %266 = vdwg.mxu0
    %267 = vmatpush.msra.mxu0 %v243
    %268 = vmatpush.msra.mxu0 %v239
    %269 = vmatpush.msra.mxu0 %v235
    %270 = vmatpush.msra.mxu0 %v231
    %271 = vmatpush.msra.mxu0 %v227
    %272 = vmatpush.msra.mxu0 %v223
    %273 = vmatpush.msra.mxu0 %v219
    %274 = vmatpush.msra.mxu0 %v215
    %275 = vmatpush.msra.mxu0 %v211
    %276 = vmatpush.msra.mxu0 %v207
    %277 = vmatpush.msra.mxu0 %v203
    %278 = vmatpush.msra.mxu0 %v199
    %279 = vmatpush.msra.mxu0 %v195
    %280 = vmatpush.msra.mxu0 %v191
    %281 = vmatpush.msra.mxu0 %v187
    %282 = vmatpush.msra.mxu0 %v183
    %283 = vmatmul.f32.gmra.mxu0 0.0
    %v284 = vpop.f32.mrf.mxu0
    %v285 = vadd.f32 %v265, %v284
    %286 = vdwg.mxu0
    %287 = vmatpush.msra.mxu0 %v180
    %288 = vmatpush.msra.mxu0 %v176
    %289 = vmatpush.msra.mxu0 %v172
    %290 = vmatpush.msra.mxu0 %v168
    %291 = vmatpush.msra.mxu0 %v164
    %292 = vmatpush.msra.mxu0 %v160
    %293 = vmatpush.msra.mxu0 %v156
    %294 = vmatpush.msra.mxu0 %v152
    %295 = vmatpush.msra.mxu0 %v148
    %296 = vmatpush.msra.mxu0 %v144
    %297 = vmatpush.msra.mxu0 %v140
    %298 = vmatpush.msra.mxu0 %v136
    %299 = vmatpush.msra.mxu0 %v132
    %300 = vmatpush.msra.mxu0 %v128
    %301 = vmatpush.msra.mxu0 %v124
    %302 = vmatpush.msra.mxu0 %v120
    %303 = vmatmul.f32.gmra.mxu0 %v118
    %v304 = vpop.f32.mrf.mxu0
    %v305 = vadd.f32 %v101, %v304
    %306 = vdwg.mxu0
    %307 = vmatpush.msra.mxu0 %v244
    %308 = vmatpush.msra.mxu0 %v240
    %309 = vmatpush.msra.mxu0 %v236
    %310 = vmatpush.msra.mxu0 %v232
    %311 = vmatpush.msra.mxu0 %v228
    %312 = vmatpush.msra.mxu0 %v224
    %313 = vmatpush.msra.mxu0 %v220
    %314 = vmatpush.msra.mxu0 %v216
    %315 = vmatpush.msra.mxu0 %v212
    %316 = vmatpush.msra.mxu0 %v208
    %317 = vmatpush.msra.mxu0 %v204
    %318 = vmatpush.msra.mxu0 %v200
    %319 = vmatpush.msra.mxu0 %v196
    %320 = vmatpush.msra.mxu0 %v192
    %321 = vmatpush.msra.mxu0 %v188
    %322 = vmatpush.msra.mxu0 %v184
    %323 = vmatmul.f32.gmra.mxu0 0.0
    %v324 = vpop.f32.mrf.mxu0
    %v325 = vadd.f32 %v305, %v324
    %326 = vdwg.mxu0
    %327 = vmatpush.msra.mxu0 %v181
    %328 = vmatpush.msra.mxu0 %v177
    %329 = vmatpush.msra.mxu0 %v173
    %330 = vmatpush.msra.mxu0 %v169
    %331 = vmatpush.msra.mxu0 %v165
    %332 = vmatpush.msra.mxu0 %v161
    %333 = vmatpush.msra.mxu0 %v157
    %334 = vmatpush.msra.mxu0 %v153
    %335 = vmatpush.msra.mxu0 %v149
    %336 = vmatpush.msra.mxu0 %v145
    %337 = vmatpush.msra.mxu0 %v141
    %338 = vmatpush.msra.mxu0 %v137
    %339 = vmatpush.msra.mxu0 %v133
    %340 = vmatpush.msra.mxu0 %v129
    %341 = vmatpush.msra.mxu0 %v125
    %342 = vmatpush.msra.mxu0 %v121
    %343 = vmatmul.f32.gmra.mxu0 %v118
    %v344 = vpop.f32.mrf.mxu0
    %v345 = vadd.f32 %v102, %v344
    %346 = vdwg.mxu0
    %347 = vmatpush.msra.mxu0 %v245
    %348 = vmatpush.msra.mxu0 %v241
    %349 = vmatpush.msra.mxu0 %v237
    %350 = vmatpush.msra.mxu0 %v233
    %351 = vmatpush.msra.mxu0 %v229
    %352 = vmatpush.msra.mxu0 %v225
    %353 = vmatpush.msra.mxu0 %v221
    %354 = vmatpush.msra.mxu0 %v217
    %355 = vmatpush.msra.mxu0 %v213
    %356 = vmatpush.msra.mxu0 %v209
    %357 = vmatpush.msra.mxu0 %v205
    %358 = vmatpush.msra.mxu0 %v201
    %359 = vmatpush.msra.mxu0 %v197
    %360 = vmatpush.msra.mxu0 %v193
    %361 = vmatpush.msra.mxu0 %v189
    %362 = vmatpush.msra.mxu0 %v185
    %363 = vmatmul.f32.gmra.mxu0 0.0
    %v364 = vpop.f32.mrf.mxu0
    %v365 = vadd.f32 %v345, %v364
    %366 = vdwg.mxu0
    %367 = vmatpush.msra.mxu0 %v182
    %368 = vmatpush.msra.mxu0 %v178
    %369 = vmatpush.msra.mxu0 %v174
    %370 = vmatpush.msra.mxu0 %v170
    %371 = vmatpush.msra.mxu0 %v166
    %372 = vmatpush.msra.mxu0 %v162
    %373 = vmatpush.msra.mxu0 %v158
    %374 = vmatpush.msra.mxu0 %v154
    %375 = vmatpush.msra.mxu0 %v150
    %376 = vmatpush.msra.mxu0 %v146
    %377 = vmatpush.msra.mxu0 %v142
    %378 = vmatpush.msra.mxu0 %v138
    %379 = vmatpush.msra.mxu0 %v134
    %380 = vmatpush.msra.mxu0 %v130
    %381 = vmatpush.msra.mxu0 %v126
    %382 = vmatpush.msra.mxu0 %v122
    %383 = vmatmul.f32.gmra.mxu0 %v118
    %v384 = vpop.f32.mrf.mxu0
    %v385 = vadd.f32 %v103, %v384
    %386 = vdwg.mxu0
    %387 = vmatpush.msra.mxu0 %v246
    %388 = vmatpush.msra.mxu0 %v242
    %389 = vmatpush.msra.mxu0 %v238
    %390 = vmatpush.msra.mxu0 %v234
    %391 = vmatpush.msra.mxu0 %v230
    %392 = vmatpush.msra.mxu0 %v226
    %393 = vmatpush.msra.mxu0 %v222
    %394 = vmatpush.msra.mxu0 %v218
    %395 = vmatpush.msra.mxu0 %v214
    %396 = vmatpush.msra.mxu0 %v210
    %397 = vmatpush.msra.mxu0 %v206
    %398 = vmatpush.msra.mxu0 %v202
    %399 = vmatpush.msra.mxu0 %v198
    %400 = vmatpush.msra.mxu0 %v194
    %401 = vmatpush.msra.mxu0 %v190
    %402 = vmatpush.msra.mxu0 %v186
    %403 = vmatmul.f32.gmra.mxu0 0.0
    %v404 = vpop.f32.mrf.mxu0
    %v405 = vadd.f32 %v385, %v404
    %406 = vdwg.mxu0
    %v407 = vxor.u32 %v285, 2147483648
    %v408 = vmul.f32 %v407, 1.442695
    %v409 = vpow.pop %v408
    %v410 = vadd.f32 %v409, 1.0
    %v411 = vrcp.pop %v410
    %v412 = vmul.f32 %v410, %v411
    %v413 = vsub.f32 1.0, %v412
    %v414 = vmul.f32 %v411, %v413
    %v415 = vadd.f32 %v411, %v414
    %vm416 = vweird.f32 %v410
    %vm417 = vweird.f32 %v411
    %vm418 = vmor %vm416, %vm417
    %v419 = vsel %vm418, %v411, %v415
    %v420 = vand.u32 2147483647, %v410
    %vm421 = vcmp.eq.f32.partialorder %v420, 8.507059e+37
    %v422 = vand.u32 %v410, 2147483648
    %v423 = vor.u32 1.1754944e-38, %v422
    %v424 = vsel %vm421, %v423, %v419
    %v425 = vmul.f32 1.0, %v424
    %v426 = vxor.u32 %v325, 2147483648
    %v427 = vmul.f32 %v426, 1.442695
    %v428 = vpow.pop %v427
    %v429 = vadd.f32 %v428, 1.0
    %v430 = vrcp.pop %v429
    %v431 = vmul.f32 %v429, %v430
    %v432 = vsub.f32 1.0, %v431
    %v433 = vmul.f32 %v430, %v432
    %v434 = vadd.f32 %v430, %v433
    %vm435 = vweird.f32 %v429
    %vm436 = vweird.f32 %v430
    %vm437 = vmor %vm435, %vm436
    %v438 = vsel %vm437, %v430, %v434
    %v439 = vand.u32 2147483647, %v429
    %vm440 = vcmp.eq.f32.partialorder %v439, 8.507059e+37
    %v441 = vand.u32 %v429, 2147483648
    %v442 = vor.u32 1.1754944e-38, %v441
    %v443 = vsel %vm440, %v442, %v438
    %v444 = vmul.f32 1.0, %v443
    %v445 = vmul.f32 %v425, %v405
    %v446 = vadd.f32 %v365, %v445
    %v447 = vtanh.pop %v446
    %v448 = vsub.f32 1.0, %v444
    %v449 = vmul.f32 %v448, %v447
    %v450 = vmul.f32 %v444, 0.0
    %v451 = vadd.f32 %v449, %v450
    %v452 = vld [vmem:[#allocation8] sm:$0xff]
    %v453 = vld [vmem:[#allocation8 + $0x8] sm:$0xff]
    %v454 = vld [vmem:[#allocation8 + $0x10] sm:$0xff]
    %v455 = vld [vmem:[#allocation8 + $0x18] sm:$0xff]
    %v456 = vld [vmem:[#allocation8 + $0x20] sm:$0xff]
    %v457 = vld [vmem:[#allocation8 + $0x28] sm:$0xff]
    %v458 = vld [vmem:[#allocation8 + $0x30] sm:$0xff]
    %v459 = vld [vmem:[#allocation8 + $0x38] sm:$0xff]
    %v460 = vld [vmem:[#allocation8 + $0x40] sm:$0xff]
    %v461 = vld [vmem:[#allocation8 + $0x48] sm:$0xff]
    %v462 = vld [vmem:[#allocation8 + $0x50] sm:$0xff]
    %v463 = vld [vmem:[#allocation8 + $0x58] sm:$0xff]
    %v464 = vld [vmem:[#allocation8 + $0x60] sm:$0xff]
    %v465 = vld [vmem:[#allocation8 + $0x68] sm:$0xff]
    %v466 = vld [vmem:[#allocation8 + $0x70] sm:$0xff]
    %v467 = vld [vmem:[#allocation8 + $0x78] sm:$0xff]
    %v468 = vld [vmem:[#allocation8 + $0x80] sm:$0xff]
    %v469 = vld [vmem:[#allocation8 + $0x88] sm:$0xff]
    %v470 = vld [vmem:[#allocation8 + $0x90] sm:$0xff]
    %v471 = vld [vmem:[#allocation8 + $0x98] sm:$0xff]
    %v472 = vld [vmem:[#allocation8 + $0xa0] sm:$0xff]
    %v473 = vld [vmem:[#allocation8 + $0xa8] sm:$0xff]
    %v474 = vld [vmem:[#allocation8 + $0xb0] sm:$0xff]
    %v475 = vld [vmem:[#allocation8 + $0xb8] sm:$0xff]
    %v476 = vld [vmem:[#allocation8 + $0xc0] sm:$0xff]
    %v477 = vld [vmem:[#allocation8 + $0xc8] sm:$0xff]
    %v478 = vld [vmem:[#allocation8 + $0xd0] sm:$0xff]
    %v479 = vld [vmem:[#allocation8 + $0xd8] sm:$0xff]
    %v480 = vld [vmem:[#allocation8 + $0xe0] sm:$0xff]
    %v481 = vld [vmem:[#allocation8 + $0xe8] sm:$0xff]
    %v482 = vld [vmem:[#allocation8 + $0xf0] sm:$0xff]
    %v483 = vld [vmem:[#allocation8 + $0xf8] sm:$0xff]
    %v484 = vld [vmem:[#allocation8 + $0x100] sm:$0xff]
    %v485 = vld [vmem:[#allocation8 + $0x108] sm:$0xff]
    %v486 = vld [vmem:[#allocation8 + $0x110] sm:$0xff]
    %v487 = vld [vmem:[#allocation8 + $0x118] sm:$0xff]
    %v488 = vld [vmem:[#allocation8 + $0x120] sm:$0xff]
    %v489 = vld [vmem:[#allocation8 + $0x128] sm:$0xff]
    %v490 = vld [vmem:[#allocation8 + $0x130] sm:$0xff]
    %v491 = vld [vmem:[#allocation8 + $0x138] sm:$0xff]
    %v492 = vld [vmem:[#allocation8 + $0x140] sm:$0xff]
    %v493 = vld [vmem:[#allocation8 + $0x148] sm:$0xff]
    %v494 = vld [vmem:[#allocation8 + $0x150] sm:$0xff]
    %v495 = vld [vmem:[#allocation8 + $0x158] sm:$0xff]
    %v496 = vld [vmem:[#allocation8 + $0x160] sm:$0xff]
    %v497 = vld [vmem:[#allocation8 + $0x168] sm:$0xff]
    %v498 = vld [vmem:[#allocation8 + $0x170] sm:$0xff]
    %v499 = vld [vmem:[#allocation8 + $0x178] sm:$0xff]
    %v500 = vld [vmem:[#allocation8 + $0x180] sm:$0xff]
    %v501 = vld [vmem:[#allocation8 + $0x188] sm:$0xff]
    %v502 = vld [vmem:[#allocation8 + $0x190] sm:$0xff]
    %v503 = vld [vmem:[#allocation8 + $0x198] sm:$0xff]
    %v504 = vld [vmem:[#allocation8 + $0x1a0] sm:$0xff]
    %v505 = vld [vmem:[#allocation8 + $0x1a8] sm:$0xff]
    %v506 = vld [vmem:[#allocation8 + $0x1b0] sm:$0xff]
    %v507 = vld [vmem:[#allocation8 + $0x1b8] sm:$0xff]
    %v508 = vld [vmem:[#allocation8 + $0x1c0] sm:$0xff]
    %v509 = vld [vmem:[#allocation8 + $0x1c8] sm:$0xff]
    %v510 = vld [vmem:[#allocation8 + $0x1d0] sm:$0xff]
    %v511 = vld [vmem:[#allocation8 + $0x1d8] sm:$0xff]
    %v512 = vld [vmem:[#allocation8 + $0x1e0] sm:$0xff]
    %v513 = vld [vmem:[#allocation8 + $0x1e8] sm:$0xff]
    %v514 = vld [vmem:[#allocation8 + $0x1f0] sm:$0xff]
    %v515 = vld [vmem:[#allocation8 + $0x1f8] sm:$0xff]
    %v516 = vld [vmem:[#allocation8 + $0x200] sm:$0xff]
    %v517 = vld [vmem:[#allocation8 + $0x208] sm:$0xff]
    %v518 = vld [vmem:[#allocation8 + $0x210] sm:$0xff]
    %v519 = vld [vmem:[#allocation8 + $0x218] sm:$0xff]
    %v520 = vld [vmem:[#allocation8 + $0x220] sm:$0xff]
    %v521 = vld [vmem:[#allocation8 + $0x228] sm:$0xff]
    %v522 = vld [vmem:[#allocation8 + $0x230] sm:$0xff]
    %v523 = vld [vmem:[#allocation8 + $0x238] sm:$0xff]
    %v524 = vld [vmem:[#allocation8 + $0x240] sm:$0xff]
    %v525 = vld [vmem:[#allocation8 + $0x248] sm:$0xff]
    %v526 = vld [vmem:[#allocation8 + $0x250] sm:$0xff]
    %v527 = vld [vmem:[#allocation8 + $0x258] sm:$0xff]
    %v528 = vld [vmem:[#allocation8 + $0x260] sm:$0xff]
    %v529 = vld [vmem:[#allocation8 + $0x268] sm:$0xff]
    %v530 = vld [vmem:[#allocation8 + $0x270] sm:$0xff]
    %v531 = vld [vmem:[#allocation8 + $0x278] sm:$0xff]
    %v532 = vld [vmem:[#allocation8 + $0x280] sm:$0xff]
    %v533 = vld [vmem:[#allocation8 + $0x288] sm:$0xff]
    %v534 = vld [vmem:[#allocation8 + $0x290] sm:$0xff]
    %v535 = vld [vmem:[#allocation8 + $0x298] sm:$0xff]
    %v536 = vld [vmem:[#allocation8 + $0x2a0] sm:$0xff]
    %v537 = vld [vmem:[#allocation8 + $0x2a8] sm:$0xff]
    %v538 = vld [vmem:[#allocation8 + $0x2b0] sm:$0xff]
    %v539 = vld [vmem:[#allocation8 + $0x2b8] sm:$0xff]
    %v540 = vld [vmem:[#allocation8 + $0x2c0] sm:$0xff]
    %v541 = vld [vmem:[#allocation8 + $0x2c8] sm:$0xff]
    %v542 = vld [vmem:[#allocation8 + $0x2d0] sm:$0xff]
    %v543 = vld [vmem:[#allocation8 + $0x2d8] sm:$0xff]
    %v544 = vld [vmem:[#allocation8 + $0x2e0] sm:$0xff]
    %v545 = vld [vmem:[#allocation8 + $0x2e8] sm:$0xff]
    %v546 = vld [vmem:[#allocation8 + $0x2f0] sm:$0xff]
    %v547 = vld [vmem:[#allocation8 + $0x2f8] sm:$0xff]
    %v548 = vld [vmem:[#allocation8 + $0x300] sm:$0xff]
    %v549 = vld [vmem:[#allocation8 + $0x308] sm:$0xff]
    %v550 = vld [vmem:[#allocation8 + $0x310] sm:$0xff]
    %v551 = vld [vmem:[#allocation8 + $0x318] sm:$0xff]
    %v552 = vld [vmem:[#allocation8 + $0x320] sm:$0xff]
    %v553 = vld [vmem:[#allocation8 + $0x328] sm:$0xff]
    %v554 = vld [vmem:[#allocation8 + $0x330] sm:$0xff]
    %v555 = vld [vmem:[#allocation8 + $0x338] sm:$0xff]
    %v556 = vld [vmem:[#allocation8 + $0x340] sm:$0xff]
    %v557 = vld [vmem:[#allocation8 + $0x348] sm:$0xff]
    %v558 = vld [vmem:[#allocation8 + $0x350] sm:$0xff]
    %v559 = vld [vmem:[#allocation8 + $0x358] sm:$0xff]
    %v560 = vld [vmem:[#allocation8 + $0x360] sm:$0xff]
    %v561 = vld [vmem:[#allocation8 + $0x368] sm:$0xff]
    %v562 = vld [vmem:[#allocation8 + $0x370] sm:$0xff]
    %v563 = vld [vmem:[#allocation8 + $0x378] sm:$0xff]
    %v564 = vld [vmem:[#allocation8 + $0x380] sm:$0xff]
    %v565 = vld [vmem:[#allocation8 + $0x388] sm:$0xff]
    %v566 = vld [vmem:[#allocation8 + $0x390] sm:$0xff]
    %v567 = vld [vmem:[#allocation8 + $0x398] sm:$0xff]
    %v568 = vld [vmem:[#allocation8 + $0x3a0] sm:$0xff]
    %v569 = vld [vmem:[#allocation8 + $0x3a8] sm:$0xff]
    %v570 = vld [vmem:[#allocation8 + $0x3b0] sm:$0xff]
    %v571 = vld [vmem:[#allocation8 + $0x3b8] sm:$0xff]
    %v572 = vld [vmem:[#allocation8 + $0x3c0] sm:$0xff]
    %v573 = vld [vmem:[#allocation8 + $0x3c8] sm:$0xff]
    %v574 = vld [vmem:[#allocation8 + $0x3d0] sm:$0xff]
    %v575 = vld [vmem:[#allocation8 + $0x3d8] sm:$0xff]
    %v576 = vld [vmem:[#allocation8 + $0x3e0] sm:$0xff]
    %v577 = vld [vmem:[#allocation8 + $0x3e8] sm:$0xff]
    %v578 = vld [vmem:[#allocation8 + $0x3f0] sm:$0xff]
    %v579 = vld [vmem:[#allocation8 + $0x3f8] sm:$0xff]
    %580 = vmatpush.msra.mxu0 %v512
    %581 = vmatpush.msra.mxu0 %v508
    %582 = vmatpush.msra.mxu0 %v504
    %583 = vmatpush.msra.mxu0 %v500
    %584 = vmatpush.msra.mxu0 %v496
    %585 = vmatpush.msra.mxu0 %v492
    %586 = vmatpush.msra.mxu0 %v488
    %587 = vmatpush.msra.mxu0 %v484
    %588 = vmatpush.msra.mxu0 %v480
    %589 = vmatpush.msra.mxu0 %v476
    %590 = vmatpush.msra.mxu0 %v472
    %591 = vmatpush.msra.mxu0 %v468
    %592 = vmatpush.msra.mxu0 %v464
    %593 = vmatpush.msra.mxu0 %v460
    %594 = vmatpush.msra.mxu0 %v456
    %595 = vmatpush.msra.mxu0 %v452
    %596 = vmatmul.f32.gmra.mxu0 %v451
    %v597 = vpop.f32.mrf.mxu0
    %v598 = vadd.f32 %v110, %v597
    %599 = vdwg.mxu0
    %600 = vmatpush.msra.mxu0 %v576
    %601 = vmatpush.msra.mxu0 %v572
    %602 = vmatpush.msra.mxu0 %v568
    %603 = vmatpush.msra.mxu0 %v564
    %604 = vmatpush.msra.mxu0 %v560
    %605 = vmatpush.msra.mxu0 %v556
    %606 = vmatpush.msra.mxu0 %v552
    %607 = vmatpush.msra.mxu0 %v548
    %608 = vmatpush.msra.mxu0 %v544
    %609 = vmatpush.msra.mxu0 %v540
    %610 = vmatpush.msra.mxu0 %v536
    %611 = vmatpush.msra.mxu0 %v532
    %612 = vmatpush.msra.mxu0 %v528
    %613 = vmatpush.msra.mxu0 %v524
    %614 = vmatpush.msra.mxu0 %v520
    %615 = vmatpush.msra.mxu0 %v516
    %616 = vmatmul.f32.gmra.mxu0 0.0
    %v617 = vpop.f32.mrf.mxu0
    %v618 = vadd.f32 %v598, %v617
    %619 = vdwg.mxu0
    %620 = vmatpush.msra.mxu0 %v513
    %621 = vmatpush.msra.mxu0 %v509
    %622 = vmatpush.msra.mxu0 %v505
    %623 = vmatpush.msra.mxu0 %v501
    %624 = vmatpush.msra.mxu0 %v497
    %625 = vmatpush.msra.mxu0 %v493
    %626 = vmatpush.msra.mxu0 %v489
    %627 = vmatpush.msra.mxu0 %v485
    %628 = vmatpush.msra.mxu0 %v481
    %629 = vmatpush.msra.mxu0 %v477
    %630 = vmatpush.msra.mxu0 %v473
    %631 = vmatpush.msra.mxu0 %v469
    %632 = vmatpush.msra.mxu0 %v465
    %633 = vmatpush.msra.mxu0 %v461
    %634 = vmatpush.msra.mxu0 %v457
    %635 = vmatpush.msra.mxu0 %v453
    %636 = vmatmul.f32.gmra.mxu0 %v451
    %v637 = vpop.f32.mrf.mxu0
    %v638 = vadd.f32 %v111, %v637
    %639 = vdwg.mxu0
    %640 = vmatpush.msra.mxu0 %v577
    %641 = vmatpush.msra.mxu0 %v573
    %642 = vmatpush.msra.mxu0 %v569
    %643 = vmatpush.msra.mxu0 %v565
    %644 = vmatpush.msra.mxu0 %v561
    %645 = vmatpush.msra.mxu0 %v557
    %646 = vmatpush.msra.mxu0 %v553
    %647 = vmatpush.msra.mxu0 %v549
    %648 = vmatpush.msra.mxu0 %v545
    %649 = vmatpush.msra.mxu0 %v541
    %650 = vmatpush.msra.mxu0 %v537
    %651 = vmatpush.msra.mxu0 %v533
    %652 = vmatpush.msra.mxu0 %v529
    %653 = vmatpush.msra.mxu0 %v525
    %654 = vmatpush.msra.mxu0 %v521
    %655 = vmatpush.msra.mxu0 %v517
    %656 = vmatmul.f32.gmra.mxu0 0.0
    %v657 = vpop.f32.mrf.mxu0
    %v658 = vadd.f32 %v638, %v657
    %659 = vdwg.mxu0
    %660 = vmatpush.msra.mxu0 %v514
    %661 = vmatpush.msra.mxu0 %v510
    %662 = vmatpush.msra.mxu0 %v506
    %663 = vmatpush.msra.mxu0 %v502
    %664 = vmatpush.msra.mxu0 %v498
    %665 = vmatpush.msra.mxu0 %v494
    %666 = vmatpush.msra.mxu0 %v490
    %667 = vmatpush.msra.mxu0 %v486
    %668 = vmatpush.msra.mxu0 %v482
    %669 = vmatpush.msra.mxu0 %v478
    %670 = vmatpush.msra.mxu0 %v474
    %671 = vmatpush.msra.mxu0 %v470
    %672 = vmatpush.msra.mxu0 %v466
    %673 = vmatpush.msra.mxu0 %v462
    %674 = vmatpush.msra.mxu0 %v458
    %675 = vmatpush.msra.mxu0 %v454
    %676 = vmatmul.f32.gmra.mxu0 %v451
    %v677 = vpop.f32.mrf.mxu0
    %v678 = vadd.f32 %v112, %v677
    %679 = vdwg.mxu0
    %680 = vmatpush.msra.mxu0 %v578
    %681 = vmatpush.msra.mxu0 %v574
    %682 = vmatpush.msra.mxu0 %v570
    %683 = vmatpush.msra.mxu0 %v566
    %684 = vmatpush.msra.mxu0 %v562
    %685 = vmatpush.msra.mxu0 %v558
    %686 = vmatpush.msra.mxu0 %v554
    %687 = vmatpush.msra.mxu0 %v550
    %688 = vmatpush.msra.mxu0 %v546
    %689 = vmatpush.msra.mxu0 %v542
    %690 = vmatpush.msra.mxu0 %v538
    %691 = vmatpush.msra.mxu0 %v534
    %692 = vmatpush.msra.mxu0 %v530
    %693 = vmatpush.msra.mxu0 %v526
    %694 = vmatpush.msra.mxu0 %v522
    %695 = vmatpush.msra.mxu0 %v518
    %696 = vmatmul.f32.gmra.mxu0 0.0
    %v697 = vpop.f32.mrf.mxu0
    %v698 = vadd.f32 %v678, %v697
    %699 = vdwg.mxu0
    %700 = vmatpush.msra.mxu0 %v515
    %701 = vmatpush.msra.mxu0 %v511
    %702 = vmatpush.msra.mxu0 %v507
    %703 = vmatpush.msra.mxu0 %v503
    %704 = vmatpush.msra.mxu0 %v499
    %705 = vmatpush.msra.mxu0 %v495
    %706 = vmatpush.msra.mxu0 %v491
    %707 = vmatpush.msra.mxu0 %v487
    %708 = vmatpush.msra.mxu0 %v483
    %709 = vmatpush.msra.mxu0 %v479
    %710 = vmatpush.msra.mxu0 %v475
    %711 = vmatpush.msra.mxu0 %v471
    %712 = vmatpush.msra.mxu0 %v467
    %713 = vmatpush.msra.mxu0 %v463
    %714 = vmatpush.msra.mxu0 %v459
    %715 = vmatpush.msra.mxu0 %v455
    %716 = vmatmul.f32.gmra.mxu0 %v451
    %v717 = vpop.f32.mrf.mxu0
    %v718 = vadd.f32 %v113, %v717
    %719 = vdwg.mxu0
    %720 = vmatpush.msra.mxu0 %v579
    %721 = vmatpush.msra.mxu0 %v575
    %722 = vmatpush.msra.mxu0 %v571
    %723 = vmatpush.msra.mxu0 %v567
    %724 = vmatpush.msra.mxu0 %v563
    %725 = vmatpush.msra.mxu0 %v559
    %726 = vmatpush.msra.mxu0 %v555
    %727 = vmatpush.msra.mxu0 %v551
    %728 = vmatpush.msra.mxu0 %v547
    %729 = vmatpush.msra.mxu0 %v543
    %730 = vmatpush.msra.mxu0 %v539
    %731 = vmatpush.msra.mxu0 %v535
    %732 = vmatpush.msra.mxu0 %v531
    %733 = vmatpush.msra.mxu0 %v527
    %734 = vmatpush.msra.mxu0 %v523
    %735 = vmatpush.msra.mxu0 %v519
    %736 = vmatmul.f32.gmra.mxu0 0.0
    %v737 = vpop.f32.mrf.mxu0
    %v738 = vadd.f32 %v718, %v737
    %739 = vdwg.mxu0
    %v740 = vxor.u32 %v618, 2147483648
    %v741 = vmul.f32 %v740, 1.442695
    %v742 = vpow.pop %v741
    %v743 = vadd.f32 %v742, 1.0
    %v744 = vrcp.pop %v743
    %v745 = vmul.f32 %v743, %v744
    %v746 = vsub.f32 1.0, %v745
    %v747 = vmul.f32 %v744, %v746
    %v748 = vadd.f32 %v744, %v747
    %vm749 = vweird.f32 %v743
    %vm750 = vweird.f32 %v744
    %vm751 = vmor %vm749, %vm750
    %v752 = vsel %vm751, %v744, %v748
    %v753 = vand.u32 2147483647, %v743
    %vm754 = vcmp.eq.f32.partialorder %v753, 8.507059e+37
    %v755 = vand.u32 %v743, 2147483648
    %v756 = vor.u32 1.1754944e-38, %v755
    %v757 = vsel %vm754, %v756, %v752
    %v758 = vmul.f32 1.0, %v757
    %v759 = vxor.u32 %v658, 2147483648
    %v760 = vmul.f32 %v759, 1.442695
    %v761 = vpow.pop %v760
    %v762 = vadd.f32 %v761, 1.0
    %v763 = vrcp.pop %v762
    %v764 = vmul.f32 %v762, %v763
    %v765 = vsub.f32 1.0, %v764
    %v766 = vmul.f32 %v763, %v765
    %v767 = vadd.f32 %v763, %v766
    %vm768 = vweird.f32 %v762
    %vm769 = vweird.f32 %v763
    %vm770 = vmor %vm768, %vm769
    %v771 = vsel %vm770, %v763, %v767
    %v772 = vand.u32 2147483647, %v762
    %vm773 = vcmp.eq.f32.partialorder %v772, 8.507059e+37
    %v774 = vand.u32 %v762, 2147483648
    %v775 = vor.u32 1.1754944e-38, %v774
    %v776 = vsel %vm773, %v775, %v771
    %v777 = vmul.f32 1.0, %v776
    %v778 = vmul.f32 %v758, %v738
    %v779 = vadd.f32 %v698, %v778
    %v780 = vtanh.pop %v779
    %v781 = vsub.f32 1.0, %v777
    %v782 = vmul.f32 %v781, %v780
    %v783 = vmul.f32 %v777, 0.0
    %v784 = vadd.f32 %v782, %v783
    %s785 = scalar_lea.vmem [#allocation2], 8
    %v786 = vld [vmem:[%s785] sm:$0xff]
    %787 = vmatpush.msra.mxu0 %v179
    %788 = vmatpush.msra.mxu0 %v175
    %789 = vmatpush.msra.mxu0 %v171
    %790 = vmatpush.msra.mxu0 %v167
    %791 = vmatpush.msra.mxu0 %v163
    %792 = vmatpush.msra.mxu0 %v159
    %793 = vmatpush.msra.mxu0 %v155
    %794 = vmatpush.msra.mxu0 %v151
    %795 = vmatpush.msra.mxu0 %v147
    %796 = vmatpush.msra.mxu0 %v143
    %797 = vmatpush.msra.mxu0 %v139
    %798 = vmatpush.msra.mxu0 %v135
    %799 = vmatpush.msra.mxu0 %v131
    %800 = vmatpush.msra.mxu0 %v127
    %801 = vmatpush.msra.mxu0 %v123
    %802 = vmatpush.msra.mxu0 %v119
    %803 = vmatmul.f32.gmra.mxu0 %v786
    %v804 = vpop.f32.mrf.mxu0
    %v805 = vadd.f32 %v100, %v804
    %806 = vdwg.mxu0
    %807 = vmatpush.msra.mxu0 %v243
    %808 = vmatpush.msra.mxu0 %v239
    %809 = vmatpush.msra.mxu0 %v235
    %810 = vmatpush.msra.mxu0 %v231
    %811 = vmatpush.msra.mxu0 %v227
    %812 = vmatpush.msra.mxu0 %v223
    %813 = vmatpush.msra.mxu0 %v219
    %814 = vmatpush.msra.mxu0 %v215
    %815 = vmatpush.msra.mxu0 %v211
    %816 = vmatpush.msra.mxu0 %v207
    %817 = vmatpush.msra.mxu0 %v203
    %818 = vmatpush.msra.mxu0 %v199
    %819 = vmatpush.msra.mxu0 %v195
    %820 = vmatpush.msra.mxu0 %v191
    %821 = vmatpush.msra.mxu0 %v187
    %822 = vmatpush.msra.mxu0 %v183
    %823 = vmatmul.f32.gmra.mxu0 %v451
    %v824 = vpop.f32.mrf.mxu0
    %v825 = vadd.f32 %v805, %v824
    %826 = vdwg.mxu0
    %827 = vmatpush.msra.mxu0 %v180
    %828 = vmatpush.msra.mxu0 %v176
    %829 = vmatpush.msra.mxu0 %v172
    %830 = vmatpush.msra.mxu0 %v168
    %831 = vmatpush.msra.mxu0 %v164
    %832 = vmatpush.msra.mxu0 %v160
    %833 = vmatpush.msra.mxu0 %v156
    %834 = vmatpush.msra.mxu0 %v152
    %835 = vmatpush.msra.mxu0 %v148
    %836 = vmatpush.msra.mxu0 %v144
    %837 = vmatpush.msra.mxu0 %v140
    %838 = vmatpush.msra.mxu0 %v136
    %839 = vmatpush.msra.mxu0 %v132
    %840 = vmatpush.msra.mxu0 %v128
    %841 = vmatpush.msra.mxu0 %v124
    %842 = vmatpush.msra.mxu0 %v120
    %843 = vmatmul.f32.gmra.mxu0 %v786
    %v844 = vpop.f32.mrf.mxu0
    %v845 = vadd.f32 %v101, %v844
    %846 = vdwg.mxu0
    %847 = vmatpush.msra.mxu0 %v244
    %848 = vmatpush.msra.mxu0 %v240
    %849 = vmatpush.msra.mxu0 %v236
    %850 = vmatpush.msra.mxu0 %v232
    %851 = vmatpush.msra.mxu0 %v228
    %852 = vmatpush.msra.mxu0 %v224
    %853 = vmatpush.msra.mxu0 %v220
    %854 = vmatpush.msra.mxu0 %v216
    %855 = vmatpush.msra.mxu0 %v212
    %856 = vmatpush.msra.mxu0 %v208
    %857 = vmatpush.msra.mxu0 %v204
    %858 = vmatpush.msra.mxu0 %v200
    %859 = vmatpush.msra.mxu0 %v196
    %860 = vmatpush.msra.mxu0 %v192
    %861 = vmatpush.msra.mxu0 %v188
    %862 = vmatpush.msra.mxu0 %v184
    %863 = vmatmul.f32.gmra.mxu0 %v451
    %v864 = vpop.f32.mrf.mxu0
    %v865 = vadd.f32 %v845, %v864
    %866 = vdwg.mxu0
    %867 = vmatpush.msra.mxu0 %v181
    %868 = vmatpush.msra.mxu0 %v177
    %869 = vmatpush.msra.mxu0 %v173
    %870 = vmatpush.msra.mxu0 %v169
    %871 = vmatpush.msra.mxu0 %v165
    %872 = vmatpush.msra.mxu0 %v161
    %873 = vmatpush.msra.mxu0 %v157
    %874 = vmatpush.msra.mxu0 %v153
    %875 = vmatpush.msra.mxu0 %v149
    %876 = vmatpush.msra.mxu0 %v145
    %877 = vmatpush.msra.mxu0 %v141
    %878 = vmatpush.msra.mxu0 %v137
    %879 = vmatpush.msra.mxu0 %v133
    %880 = vmatpush.msra.mxu0 %v129
    %881 = vmatpush.msra.mxu0 %v125
    %882 = vmatpush.msra.mxu0 %v121
    %883 = vmatmul.f32.gmra.mxu0 %v786
    %v884 = vpop.f32.mrf.mxu0
    %v885 = vadd.f32 %v102, %v884
    %886 = vdwg.mxu0
    %887 = vmatpush.msra.mxu0 %v245
    %888 = vmatpush.msra.mxu0 %v241
    %889 = vmatpush.msra.mxu0 %v237
    %890 = vmatpush.msra.mxu0 %v233
    %891 = vmatpush.msra.mxu0 %v229
    %892 = vmatpush.msra.mxu0 %v225
    %893 = vmatpush.msra.mxu0 %v221
    %894 = vmatpush.msra.mxu0 %v217
    %895 = vmatpush.msra.mxu0 %v213
    %896 = vmatpush.msra.mxu0 %v209
    %897 = vmatpush.msra.mxu0 %v205
    %898 = vmatpush.msra.mxu0 %v201
    %899 = vmatpush.msra.mxu0 %v197
    %900 = vmatpush.msra.mxu0 %v193
    %901 = vmatpush.msra.mxu0 %v189
    %902 = vmatpush.msra.mxu0 %v185
    %903 = vmatmul.f32.gmra.mxu0 %v451
    %v904 = vpop.f32.mrf.mxu0
    %v905 = vadd.f32 %v885, %v904
    %906 = vdwg.mxu0
    %907 = vmatpush.msra.mxu0 %v182
    %908 = vmatpush.msra.mxu0 %v178
    %909 = vmatpush.msra.mxu0 %v174
    %910 = vmatpush.msra.mxu0 %v170
    %911 = vmatpush.msra.mxu0 %v166
    %912 = vmatpush.msra.mxu0 %v162
    %913 = vmatpush.msra.mxu0 %v158
    %914 = vmatpush.msra.mxu0 %v154
    %915 = vmatpush.msra.mxu0 %v150
    %916 = vmatpush.msra.mxu0 %v146
    %917 = vmatpush.msra.mxu0 %v142
    %918 = vmatpush.msra.mxu0 %v138
    %919 = vmatpush.msra.mxu0 %v134
    %920 = vmatpush.msra.mxu0 %v130
    %921 = vmatpush.msra.mxu0 %v126
    %922 = vmatpush.msra.mxu0 %v122
    %923 = vmatmul.f32.gmra.mxu0 %v786
    %v924 = vpop.f32.mrf.mxu0
    %v925 = vadd.f32 %v103, %v924
    %926 = vdwg.mxu0
    %927 = vmatpush.msra.mxu0 %v246
    %928 = vmatpush.msra.mxu0 %v242
    %929 = vmatpush.msra.mxu0 %v238
    %930 = vmatpush.msra.mxu0 %v234
    %931 = vmatpush.msra.mxu0 %v230
    %932 = vmatpush.msra.mxu0 %v226
    %933 = vmatpush.msra.mxu0 %v222
    %934 = vmatpush.msra.mxu0 %v218
    %935 = vmatpush.msra.mxu0 %v214
    %936 = vmatpush.msra.mxu0 %v210
    %937 = vmatpush.msra.mxu0 %v206
    %938 = vmatpush.msra.mxu0 %v202
    %939 = vmatpush.msra.mxu0 %v198
    %940 = vmatpush.msra.mxu0 %v194
    %941 = vmatpush.msra.mxu0 %v190
    %942 = vmatpush.msra.mxu0 %v186
    %943 = vmatmul.f32.gmra.mxu0 %v451
    %v944 = vpop.f32.mrf.mxu0
    %v945 = vadd.f32 %v925, %v944
    %946 = vdwg.mxu0
    %v947 = vxor.u32 %v825, 2147483648
    %v948 = vmul.f32 %v947, 1.442695
    %v949 = vpow.pop %v948
    %v950 = vadd.f32 %v949, 1.0
    %v951 = vrcp.pop %v950
    %v952 = vmul.f32 %v950, %v951
    %v953 = vsub.f32 1.0, %v952
    %v954 = vmul.f32 %v951, %v953
    %v955 = vadd.f32 %v951, %v954
    %vm956 = vweird.f32 %v950
    %vm957 = vweird.f32 %v951
    %vm958 = vmor %vm956, %vm957
    %v959 = vsel %vm958, %v951, %v955
    %v960 = vand.u32 2147483647, %v950
    %vm961 = vcmp.eq.f32.partialorder %v960, 8.507059e+37
    %v962 = vand.u32 %v950, 2147483648
    %v963 = vor.u32 1.1754944e-38, %v962
    %v964 = vsel %vm961, %v963, %v959
    %v965 = vmul.f32 1.0, %v964
    %v966 = vxor.u32 %v865, 2147483648
    %v967 = vmul.f32 %v966, 1.442695
    %v968 = vpow.pop %v967
    %v969 = vadd.f32 %v968, 1.0
    %v970 = vrcp.pop %v969
    %v971 = vmul.f32 %v969, %v970
    %v972 = vsub.f32 1.0, %v971
    %v973 = vmul.f32 %v970, %v972
    %v974 = vadd.f32 %v970, %v973
    %vm975 = vweird.f32 %v969
    %vm976 = vweird.f32 %v970
    %vm977 = vmor %vm975, %vm976
    %v978 = vsel %vm977, %v970, %v974
    %v979 = vand.u32 2147483647, %v969
    %vm980 = vcmp.eq.f32.partialorder %v979, 8.507059e+37
    %v981 = vand.u32 %v969, 2147483648
    %v982 = vor.u32 1.1754944e-38, %v981
    %v983 = vsel %vm980, %v982, %v978
    %v984 = vmul.f32 1.0, %v983
    %v985 = vmul.f32 %v965, %v945
    %v986 = vadd.f32 %v905, %v985
    %v987 = vtanh.pop %v986
    %v988 = vsub.f32 1.0, %v984
    %v989 = vmul.f32 %v988, %v987
    %v990 = vmul.f32 %v984, %v451
    %v991 = vadd.f32 %v989, %v990
    %992 = vmatpush.msra.mxu0 %v512
    %993 = vmatpush.msra.mxu0 %v508
    %994 = vmatpush.msra.mxu0 %v504
    %995 = vmatpush.msra.mxu0 %v500
    %996 = vmatpush.msra.mxu0 %v496
    %997 = vmatpush.msra.mxu0 %v492
    %998 = vmatpush.msra.mxu0 %v488
    %999 = vmatpush.msra.mxu0 %v484
    %1000 = vmatpush.msra.mxu0 %v480
    %1001 = vmatpush.msra.mxu0 %v476
    %1002 = vmatpush.msra.mxu0 %v472
    %1003 = vmatpush.msra.mxu0 %v468
    %1004 = vmatpush.msra.mxu0 %v464
    %1005 = vmatpush.msra.mxu0 %v460
    %1006 = vmatpush.msra.mxu0 %v456
    %1007 = vmatpush.msra.mxu0 %v452
    %1008 = vmatmul.f32.gmra.mxu0 %v991
    %v1009 = vpop.f32.mrf.mxu0
    %v1010 = vadd.f32 %v110, %v1009
    %1011 = vdwg.mxu0
    %1012 = vmatpush.msra.mxu0 %v576
    %1013 = vmatpush.msra.mxu0 %v572
    %1014 = vmatpush.msra.mxu0 %v568
    %1015 = vmatpush.msra.mxu0 %v564
    %1016 = vmatpush.msra.mxu0 %v560
    %1017 = vmatpush.msra.mxu0 %v556
    %1018 = vmatpush.msra.mxu0 %v552
    %1019 = vmatpush.msra.mxu0 %v548
    %1020 = vmatpush.msra.mxu0 %v544
    %1021 = vmatpush.msra.mxu0 %v540
    %1022 = vmatpush.msra.mxu0 %v536
    %1023 = vmatpush.msra.mxu0 %v532
    %1024 = vmatpush.msra.mxu0 %v528
    %1025 = vmatpush.msra.mxu0 %v524
    %1026 = vmatpush.msra.mxu0 %v520
    %1027 = vmatpush.msra.mxu0 %v516
    %1028 = vmatmul.f32.gmra.mxu0 %v784
    %v1029 = vpop.f32.mrf.mxu0
    %v1030 = vadd.f32 %v1010, %v1029
    %1031 = vdwg.mxu0
    %1032 = vmatpush.msra.mxu0 %v513
    %1033 = vmatpush.msra.mxu0 %v509
    %1034 = vmatpush.msra.mxu0 %v505
    %1035 = vmatpush.msra.mxu0 %v501
    %1036 = vmatpush.msra.mxu0 %v497
    %1037 = vmatpush.msra.mxu0 %v493
    %1038 = vmatpush.msra.mxu0 %v489
    %1039 = vmatpush.msra.mxu0 %v485
    %1040 = vmatpush.msra.mxu0 %v481
    %1041 = vmatpush.msra.mxu0 %v477
    %1042 = vmatpush.msra.mxu0 %v473
    %1043 = vmatpush.msra.mxu0 %v469
    %1044 = vmatpush.msra.mxu0 %v465
    %1045 = vmatpush.msra.mxu0 %v461
    %1046 = vmatpush.msra.mxu0 %v457
    %1047 = vmatpush.msra.mxu0 %v453
    %1048 = vmatmul.f32.gmra.mxu0 %v991
    %v1049 = vpop.f32.mrf.mxu0
    %v1050 = vadd.f32 %v111, %v1049
    %1051 = vdwg.mxu0
    %1052 = vmatpush.msra.mxu0 %v577
    %1053 = vmatpush.msra.mxu0 %v573
    %1054 = vmatpush.msra.mxu0 %v569
    %1055 = vmatpush.msra.mxu0 %v565
    %1056 = vmatpush.msra.mxu0 %v561
    %1057 = vmatpush.msra.mxu0 %v557
    %1058 = vmatpush.msra.mxu0 %v553
    %1059 = vmatpush.msra.mxu0 %v549
    %1060 = vmatpush.msra.mxu0 %v545
    %1061 = vmatpush.msra.mxu0 %v541
    %1062 = vmatpush.msra.mxu0 %v537
    %1063 = vmatpush.msra.mxu0 %v533
    %1064 = vmatpush.msra.mxu0 %v529
    %1065 = vmatpush.msra.mxu0 %v525
    %1066 = vmatpush.msra.mxu0 %v521
    %1067 = vmatpush.msra.mxu0 %v517
    %1068 = vmatmul.f32.gmra.mxu0 %v784
    %v1069 = vpop.f32.mrf.mxu0
    %v1070 = vadd.f32 %v1050, %v1069
    %1071 = vdwg.mxu0
    %1072 = vmatpush.msra.mxu0 %v514
    %1073 = vmatpush.msra.mxu0 %v510
    %1074 = vmatpush.msra.mxu0 %v506
    %1075 = vmatpush.msra.mxu0 %v502
    %1076 = vmatpush.msra.mxu0 %v498
    %1077 = vmatpush.msra.mxu0 %v494
    %1078 = vmatpush.msra.mxu0 %v490
    %1079 = vmatpush.msra.mxu0 %v486
    %1080 = vmatpush.msra.mxu0 %v482
    %1081 = vmatpush.msra.mxu0 %v478
    %1082 = vmatpush.msra.mxu0 %v474
    %1083 = vmatpush.msra.mxu0 %v470
    %1084 = vmatpush.msra.mxu0 %v466
    %1085 = vmatpush.msra.mxu0 %v462
    %1086 = vmatpush.msra.mxu0 %v458
    %1087 = vmatpush.msra.mxu0 %v454
    %1088 = vmatmul.f32.gmra.mxu0 %v991
    %v1089 = vpop.f32.mrf.mxu0
    %v1090 = vadd.f32 %v112, %v1089
    %1091 = vdwg.mxu0
    %1092 = vmatpush.msra.mxu0 %v578
    %1093 = vmatpush.msra.mxu0 %v574
    %1094 = vmatpush.msra.mxu0 %v570
    %1095 = vmatpush.msra.mxu0 %v566
    %1096 = vmatpush.msra.mxu0 %v562
    %1097 = vmatpush.msra.mxu0 %v558
    %1098 = vmatpush.msra.mxu0 %v554
    %1099 = vmatpush.msra.mxu0 %v550
    %1100 = vmatpush.msra.mxu0 %v546
    %1101 = vmatpush.msra.mxu0 %v542
    %1102 = vmatpush.msra.mxu0 %v538
    %1103 = vmatpush.msra.mxu0 %v534
    %1104 = vmatpush.msra.mxu0 %v530
    %1105 = vmatpush.msra.mxu0 %v526
    %1106 = vmatpush.msra.mxu0 %v522
    %1107 = vmatpush.msra.mxu0 %v518
    %1108 = vmatmul.f32.gmra.mxu0 %v784
    %v1109 = vpop.f32.mrf.mxu0
    %v1110 = vadd.f32 %v1090, %v1109
    %1111 = vdwg.mxu0
    %1112 = vmatpush.msra.mxu0 %v515
    %1113 = vmatpush.msra.mxu0 %v511
    %1114 = vmatpush.msra.mxu0 %v507
    %1115 = vmatpush.msra.mxu0 %v503
    %1116 = vmatpush.msra.mxu0 %v499
    %1117 = vmatpush.msra.mxu0 %v495
    %1118 = vmatpush.msra.mxu0 %v491
    %1119 = vmatpush.msra.mxu0 %v487
    %1120 = vmatpush.msra.mxu0 %v483
    %1121 = vmatpush.msra.mxu0 %v479
    %1122 = vmatpush.msra.mxu0 %v475
    %1123 = vmatpush.msra.mxu0 %v471
    %1124 = vmatpush.msra.mxu0 %v467
    %1125 = vmatpush.msra.mxu0 %v463
    %1126 = vmatpush.msra.mxu0 %v459
    %1127 = vmatpush.msra.mxu0 %v455
    %1128 = vmatmul.f32.gmra.mxu0 %v991
    %v1129 = vpop.f32.mrf.mxu0
    %v1130 = vadd.f32 %v113, %v1129
    %1131 = vdwg.mxu0
    %1132 = vmatpush.msra.mxu0 %v579
    %1133 = vmatpush.msra.mxu0 %v575
    %1134 = vmatpush.msra.mxu0 %v571
    %1135 = vmatpush.msra.mxu0 %v567
    %1136 = vmatpush.msra.mxu0 %v563
    %1137 = vmatpush.msra.mxu0 %v559
    %1138 = vmatpush.msra.mxu0 %v555
    %1139 = vmatpush.msra.mxu0 %v551
    %1140 = vmatpush.msra.mxu0 %v547
    %1141 = vmatpush.msra.mxu0 %v543
    %1142 = vmatpush.msra.mxu0 %v539
    %1143 = vmatpush.msra.mxu0 %v535
    %1144 = vmatpush.msra.mxu0 %v531
    %1145 = vmatpush.msra.mxu0 %v527
    %1146 = vmatpush.msra.mxu0 %v523
    %1147 = vmatpush.msra.mxu0 %v519
    %1148 = vmatmul.f32.gmra.mxu0 %v784
    %v1149 = vpop.f32.mrf.mxu0
    %v1150 = vadd.f32 %v1130, %v1149
    %1151 = vdwg.mxu0
    %v1152 = vxor.u32 %v1030, 2147483648
    %v1153 = vmul.f32 %v1152, 1.442695
    %v1154 = vpow.pop %v1153
    %v1155 = vadd.f32 %v1154, 1.0
    %v1156 = vrcp.pop %v1155
    %v1157 = vmul.f32 %v1155, %v1156
    %v1158 = vsub.f32 1.0, %v1157
    %v1159 = vmul.f32 %v1156, %v1158
    %v1160 = vadd.f32 %v1156, %v1159
    %vm1161 = vweird.f32 %v1155
    %vm1162 = vweird.f32 %v1156
    %vm1163 = vmor %vm1161, %vm1162
    %v1164 = vsel %vm1163, %v1156, %v1160
    %v1165 = vand.u32 2147483647, %v1155
    %vm1166 = vcmp.eq.f32.partialorder %v1165, 8.507059e+37
    %v1167 = vand.u32 %v1155, 2147483648
    %v1168 = vor.u32 1.1754944e-38, %v1167
    %v1169 = vsel %vm1166, %v1168, %v1164
    %v1170 = vmul.f32 1.0, %v1169
    %v1171 = vxor.u32 %v1070, 2147483648
    %v1172 = vmul.f32 %v1171, 1.442695
    %v1173 = vpow.pop %v1172
    %v1174 = vadd.f32 %v1173, 1.0
    %v1175 = vrcp.pop %v1174
    %v1176 = vmul.f32 %v1174, %v1175
    %v1177 = vsub.f32 1.0, %v1176
    %v1178 = vmul.f32 %v1175, %v1177
    %v1179 = vadd.f32 %v1175, %v1178
    %vm1180 = vweird.f32 %v1174
    %vm1181 = vweird.f32 %v1175
    %vm1182 = vmor %vm1180, %vm1181
    %v1183 = vsel %vm1182, %v1175, %v1179
    %v1184 = vand.u32 2147483647, %v1174
    %vm1185 = vcmp.eq.f32.partialorder %v1184, 8.507059e+37
    %v1186 = vand.u32 %v1174, 2147483648
    %v1187 = vor.u32 1.1754944e-38, %v1186
    %v1188 = vsel %vm1185, %v1187, %v1183
    %v1189 = vmul.f32 1.0, %v1188
    %v1190 = vmul.f32 %v1170, %v1150
    %v1191 = vadd.f32 %v1110, %v1190
    %v1192 = vtanh.pop %v1191
    %v1193 = vsub.f32 1.0, %v1189
    %v1194 = vmul.f32 %v1193, %v1192
    %v1195 = vmul.f32 %v1189, %v784
    %v1196 = vadd.f32 %v1194, %v1195
    %s1197 = scalar_lea.vmem [#allocation2], 16
    %v1198 = vld [vmem:[%s1197] sm:$0xff]
    %1199 = vmatpush.msra.mxu0 %v179
    %1200 = vmatpush.msra.mxu0 %v175
    %1201 = vmatpush.msra.mxu0 %v171
    %1202 = vmatpush.msra.mxu0 %v167
    %1203 = vmatpush.msra.mxu0 %v163
    %1204 = vmatpush.msra.mxu0 %v159
    %1205 = vmatpush.msra.mxu0 %v155
    %1206 = vmatpush.msra.mxu0 %v151
    %1207 = vmatpush.msra.mxu0 %v147
    %1208 = vmatpush.msra.mxu0 %v143
    %1209 = vmatpush.msra.mxu0 %v139
    %1210 = vmatpush.msra.mxu0 %v135
    %1211 = vmatpush.msra.mxu0 %v131
    %1212 = vmatpush.msra.mxu0 %v127
    %1213 = vmatpush.msra.mxu0 %v123
    %1214 = vmatpush.msra.mxu0 %v119
    %1215 = vmatmul.f32.gmra.mxu0 %v1198
    %v1216 = vpop.f32.mrf.mxu0
    %v1217 = vadd.f32 %v100, %v1216
    %1218 = vdwg.mxu0
    %1219 = vmatpush.msra.mxu0 %v243
    %1220 = vmatpush.msra.mxu0 %v239
    %1221 = vmatpush.msra.mxu0 %v235
    %1222 = vmatpush.msra.mxu0 %v231
    %1223 = vmatpush.msra.mxu0 %v227
    %1224 = vmatpush.msra.mxu0 %v223
    %1225 = vmatpush.msra.mxu0 %v219
    %1226 = vmatpush.msra.mxu0 %v215
    %1227 = vmatpush.msra.mxu0 %v211
    %1228 = vmatpush.msra.mxu0 %v207
    %1229 = vmatpush.msra.mxu0 %v203
    %1230 = vmatpush.msra.mxu0 %v199
    %1231 = vmatpush.msra.mxu0 %v195
    %1232 = vmatpush.msra.mxu0 %v191
    %1233 = vmatpush.msra.mxu0 %v187
    %1234 = vmatpush.msra.mxu0 %v183
    %1235 = vmatmul.f32.gmra.mxu0 %v991
    %v1236 = vpop.f32.mrf.mxu0
    %v1237 = vadd.f32 %v1217, %v1236
    %1238 = vdwg.mxu0
    %1239 = vmatpush.msra.mxu0 %v180
    %1240 = vmatpush.msra.mxu0 %v176
    %1241 = vmatpush.msra.mxu0 %v172
    %1242 = vmatpush.msra.mxu0 %v168
    %1243 = vmatpush.msra.mxu0 %v164
    %1244 = vmatpush.msra.mxu0 %v160
    %1245 = vmatpush.msra.mxu0 %v156
    %1246 = vmatpush.msra.mxu0 %v152
    %1247 = vmatpush.msra.mxu0 %v148
    %1248 = vmatpush.msra.mxu0 %v144
    %1249 = vmatpush.msra.mxu0 %v140
    %1250 = vmatpush.msra.mxu0 %v136
    %1251 = vmatpush.msra.mxu0 %v132
    %1252 = vmatpush.msra.mxu0 %v128
    %1253 = vmatpush.msra.mxu0 %v124
    %1254 = vmatpush.msra.mxu0 %v120
    %1255 = vmatmul.f32.gmra.mxu0 %v1198
    %v1256 = vpop.f32.mrf.mxu0
    %v1257 = vadd.f32 %v101, %v1256
    %1258 = vdwg.mxu0
    %1259 = vmatpush.msra.mxu0 %v244
    %1260 = vmatpush.msra.mxu0 %v240
    %1261 = vmatpush.msra.mxu0 %v236
    %1262 = vmatpush.msra.mxu0 %v232
    %1263 = vmatpush.msra.mxu0 %v228
    %1264 = vmatpush.msra.mxu0 %v224
    %1265 = vmatpush.msra.mxu0 %v220
    %1266 = vmatpush.msra.mxu0 %v216
    %1267 = vmatpush.msra.mxu0 %v212
    %1268 = vmatpush.msra.mxu0 %v208
    %1269 = vmatpush.msra.mxu0 %v204
    %1270 = vmatpush.msra.mxu0 %v200
    %1271 = vmatpush.msra.mxu0 %v196
    %1272 = vmatpush.msra.mxu0 %v192
    %1273 = vmatpush.msra.mxu0 %v188
    %1274 = vmatpush.msra.mxu0 %v184
    %1275 = vmatmul.f32.gmra.mxu0 %v991
    %v1276 = vpop.f32.mrf.mxu0
    %v1277 = vadd.f32 %v1257, %v1276
    %1278 = vdwg.mxu0
    %1279 = vmatpush.msra.mxu0 %v181
    %1280 = vmatpush.msra.mxu0 %v177
    %1281 = vmatpush.msra.mxu0 %v173
    %1282 = vmatpush.msra.mxu0 %v169
    %1283 = vmatpush.msra.mxu0 %v165
    %1284 = vmatpush.msra.mxu0 %v161
    %1285 = vmatpush.msra.mxu0 %v157
    %1286 = vmatpush.msra.mxu0 %v153
    %1287 = vmatpush.msra.mxu0 %v149
    %1288 = vmatpush.msra.mxu0 %v145
    %1289 = vmatpush.msra.mxu0 %v141
    %1290 = vmatpush.msra.mxu0 %v137
    %1291 = vmatpush.msra.mxu0 %v133
    %1292 = vmatpush.msra.mxu0 %v129
    %1293 = vmatpush.msra.mxu0 %v125
    %1294 = vmatpush.msra.mxu0 %v121
    %1295 = vmatmul.f32.gmra.mxu0 %v1198
    %v1296 = vpop.f32.mrf.mxu0
    %v1297 = vadd.f32 %v102, %v1296
    %1298 = vdwg.mxu0
    %1299 = vmatpush.msra.mxu0 %v245
    %1300 = vmatpush.msra.mxu0 %v241
    %1301 = vmatpush.msra.mxu0 %v237
    %1302 = vmatpush.msra.mxu0 %v233
    %1303 = vmatpush.msra.mxu0 %v229
    %1304 = vmatpush.msra.mxu0 %v225
    %1305 = vmatpush.msra.mxu0 %v221
    %1306 = vmatpush.msra.mxu0 %v217
    %1307 = vmatpush.msra.mxu0 %v213
    %1308 = vmatpush.msra.mxu0 %v209
    %1309 = vmatpush.msra.mxu0 %v205
    %1310 = vmatpush.msra.mxu0 %v201
    %1311 = vmatpush.msra.mxu0 %v197
    %1312 = vmatpush.msra.mxu0 %v193
    %1313 = vmatpush.msra.mxu0 %v189
    %1314 = vmatpush.msra.mxu0 %v185
    %1315 = vmatmul.f32.gmra.mxu0 %v991
    %v1316 = vpop.f32.mrf.mxu0
    %v1317 = vadd.f32 %v1297, %v1316
    %1318 = vdwg.mxu0
    %1319 = vmatpush.msra.mxu0 %v182
    %1320 = vmatpush.msra.mxu0 %v178
    %1321 = vmatpush.msra.mxu0 %v174
    %1322 = vmatpush.msra.mxu0 %v170
    %1323 = vmatpush.msra.mxu0 %v166
    %1324 = vmatpush.msra.mxu0 %v162
    %1325 = vmatpush.msra.mxu0 %v158
    %1326 = vmatpush.msra.mxu0 %v154
    %1327 = vmatpush.msra.mxu0 %v150
    %1328 = vmatpush.msra.mxu0 %v146
    %1329 = vmatpush.msra.mxu0 %v142
    %1330 = vmatpush.msra.mxu0 %v138
    %1331 = vmatpush.msra.mxu0 %v134
    %1332 = vmatpush.msra.mxu0 %v130
    %1333 = vmatpush.msra.mxu0 %v126
    %1334 = vmatpush.msra.mxu0 %v122
    %1335 = vmatmul.f32.gmra.mxu0 %v1198
    %v1336 = vpop.f32.mrf.mxu0
    %v1337 = vadd.f32 %v103, %v1336
    %1338 = vdwg.mxu0
    %1339 = vmatpush.msra.mxu0 %v246
    %1340 = vmatpush.msra.mxu0 %v242
    %1341 = vmatpush.msra.mxu0 %v238
    %1342 = vmatpush.msra.mxu0 %v234
    %1343 = vmatpush.msra.mxu0 %v230
    %1344 = vmatpush.msra.mxu0 %v226
    %1345 = vmatpush.msra.mxu0 %v222
    %1346 = vmatpush.msra.mxu0 %v218
    %1347 = vmatpush.msra.mxu0 %v214
    %1348 = vmatpush.msra.mxu0 %v210
    %1349 = vmatpush.msra.mxu0 %v206
    %1350 = vmatpush.msra.mxu0 %v202
    %1351 = vmatpush.msra.mxu0 %v198
    %1352 = vmatpush.msra.mxu0 %v194
    %1353 = vmatpush.msra.mxu0 %v190
    %1354 = vmatpush.msra.mxu0 %v186
    %1355 = vmatmul.f32.gmra.mxu0 %v991
    %v1356 = vpop.f32.mrf.mxu0
    %v1357 = vadd.f32 %v1337, %v1356
    %1358 = vdwg.mxu0
    %v1359 = vxor.u32 %v1237, 2147483648
    %v1360 = vmul.f32 %v1359, 1.442695
    %v1361 = vpow.pop %v1360
    %v1362 = vadd.f32 %v1361, 1.0
    %v1363 = vrcp.pop %v1362
    %v1364 = vmul.f32 %v1362, %v1363
    %v1365 = vsub.f32 1.0, %v1364
    %v1366 = vmul.f32 %v1363, %v1365
    %v1367 = vadd.f32 %v1363, %v1366
    %vm1368 = vweird.f32 %v1362
    %vm1369 = vweird.f32 %v1363
    %vm1370 = vmor %vm1368, %vm1369
    %v1371 = vsel %vm1370, %v1363, %v1367
    %v1372 = vand.u32 2147483647, %v1362
    %vm1373 = vcmp.eq.f32.partialorder %v1372, 8.507059e+37
    %v1374 = vand.u32 %v1362, 2147483648
    %v1375 = vor.u32 1.1754944e-38, %v1374
    %v1376 = vsel %vm1373, %v1375, %v1371
    %v1377 = vmul.f32 1.0, %v1376
    %v1378 = vxor.u32 %v1277, 2147483648
    %v1379 = vmul.f32 %v1378, 1.442695
    %v1380 = vpow.pop %v1379
    %v1381 = vadd.f32 %v1380, 1.0
    %v1382 = vrcp.pop %v1381
    %v1383 = vmul.f32 %v1381, %v1382
    %v1384 = vsub.f32 1.0, %v1383
    %v1385 = vmul.f32 %v1382, %v1384
    %v1386 = vadd.f32 %v1382, %v1385
    %vm1387 = vweird.f32 %v1381
    %vm1388 = vweird.f32 %v1382
    %vm1389 = vmor %vm1387, %vm1388
    %v1390 = vsel %vm1389, %v1382, %v1386
    %v1391 = vand.u32 2147483647, %v1381
    %vm1392 = vcmp.eq.f32.partialorder %v1391, 8.507059e+37
    %v1393 = vand.u32 %v1381, 2147483648
    %v1394 = vor.u32 1.1754944e-38, %v1393
    %v1395 = vsel %vm1392, %v1394, %v1390
    %v1396 = vmul.f32 1.0, %v1395
    %v1397 = vmul.f32 %v1377, %v1357
    %v1398 = vadd.f32 %v1317, %v1397
    %v1399 = vtanh.pop %v1398
    %v1400 = vsub.f32 1.0, %v1396
    %v1401 = vmul.f32 %v1400, %v1399
    %v1402 = vmul.f32 %v1396, %v991
    %v1403 = vadd.f32 %v1401, %v1402
    %1404 = vmatpush.msra.mxu0 %v512
    %1405 = vmatpush.msra.mxu0 %v508
    %1406 = vmatpush.msra.mxu0 %v504
    %1407 = vmatpush.msra.mxu0 %v500
    %1408 = vmatpush.msra.mxu0 %v496
    %1409 = vmatpush.msra.mxu0 %v492
    %1410 = vmatpush.msra.mxu0 %v488
    %1411 = vmatpush.msra.mxu0 %v484
    %1412 = vmatpush.msra.mxu0 %v480
    %1413 = vmatpush.msra.mxu0 %v476
    %1414 = vmatpush.msra.mxu0 %v472
    %1415 = vmatpush.msra.mxu0 %v468
    %1416 = vmatpush.msra.mxu0 %v464
    %1417 = vmatpush.msra.mxu0 %v460
    %1418 = vmatpush.msra.mxu0 %v456
    %1419 = vmatpush.msra.mxu0 %v452
    %1420 = vmatmul.f32.gmra.mxu0 %v1403
    %v1421 = vpop.f32.mrf.mxu0
    %v1422 = vadd.f32 %v110, %v1421
    %1423 = vdwg.mxu0
    %1424 = vmatpush.msra.mxu0 %v576
    %1425 = vmatpush.msra.mxu0 %v572
    %1426 = vmatpush.msra.mxu0 %v568
    %1427 = vmatpush.msra.mxu0 %v564
    %1428 = vmatpush.msra.mxu0 %v560
    %1429 = vmatpush.msra.mxu0 %v556
    %1430 = vmatpush.msra.mxu0 %v552
    %1431 = vmatpush.msra.mxu0 %v548
    %1432 = vmatpush.msra.mxu0 %v544
    %1433 = vmatpush.msra.mxu0 %v540
    %1434 = vmatpush.msra.mxu0 %v536
    %1435 = vmatpush.msra.mxu0 %v532
    %1436 = vmatpush.msra.mxu0 %v528
    %1437 = vmatpush.msra.mxu0 %v524
    %1438 = vmatpush.msra.mxu0 %v520
    %1439 = vmatpush.msra.mxu0 %v516
    %1440 = vmatmul.f32.gmra.mxu0 %v1196
    %v1441 = vpop.f32.mrf.mxu0
    %v1442 = vadd.f32 %v1422, %v1441
    %1443 = vdwg.mxu0
    %1444 = vmatpush.msra.mxu0 %v513
    %1445 = vmatpush.msra.mxu0 %v509
    %1446 = vmatpush.msra.mxu0 %v505
    %1447 = vmatpush.msra.mxu0 %v501
    %1448 = vmatpush.msra.mxu0 %v497
    %1449 = vmatpush.msra.mxu0 %v493
    %1450 = vmatpush.msra.mxu0 %v489
    %1451 = vmatpush.msra.mxu0 %v485
    %1452 = vmatpush.msra.mxu0 %v481
    %1453 = vmatpush.msra.mxu0 %v477
    %1454 = vmatpush.msra.mxu0 %v473
    %1455 = vmatpush.msra.mxu0 %v469
    %1456 = vmatpush.msra.mxu0 %v465
    %1457 = vmatpush.msra.mxu0 %v461
    %1458 = vmatpush.msra.mxu0 %v457
    %1459 = vmatpush.msra.mxu0 %v453
    %1460 = vmatmul.f32.gmra.mxu0 %v1403
    %v1461 = vpop.f32.mrf.mxu0
    %v1462 = vadd.f32 %v111, %v1461
    %1463 = vdwg.mxu0
    %1464 = vmatpush.msra.mxu0 %v577
    %1465 = vmatpush.msra.mxu0 %v573
    %1466 = vmatpush.msra.mxu0 %v569
    %1467 = vmatpush.msra.mxu0 %v565
    %1468 = vmatpush.msra.mxu0 %v561
    %1469 = vmatpush.msra.mxu0 %v557
    %1470 = vmatpush.msra.mxu0 %v553
    %1471 = vmatpush.msra.mxu0 %v549
    %1472 = vmatpush.msra.mxu0 %v545
    %1473 = vmatpush.msra.mxu0 %v541
    %1474 = vmatpush.msra.mxu0 %v537
    %1475 = vmatpush.msra.mxu0 %v533
    %1476 = vmatpush.msra.mxu0 %v529
    %1477 = vmatpush.msra.mxu0 %v525
    %1478 = vmatpush.msra.mxu0 %v521
    %1479 = vmatpush.msra.mxu0 %v517
    %1480 = vmatmul.f32.gmra.mxu0 %v1196
    %v1481 = vpop.f32.mrf.mxu0
    %v1482 = vadd.f32 %v1462, %v1481
    %1483 = vdwg.mxu0
    %1484 = vmatpush.msra.mxu0 %v514
    %1485 = vmatpush.msra.mxu0 %v510
    %1486 = vmatpush.msra.mxu0 %v506
    %1487 = vmatpush.msra.mxu0 %v502
    %1488 = vmatpush.msra.mxu0 %v498
    %1489 = vmatpush.msra.mxu0 %v494
    %1490 = vmatpush.msra.mxu0 %v490
    %1491 = vmatpush.msra.mxu0 %v486
    %1492 = vmatpush.msra.mxu0 %v482
    %1493 = vmatpush.msra.mxu0 %v478
    %1494 = vmatpush.msra.mxu0 %v474
    %1495 = vmatpush.msra.mxu0 %v470
    %1496 = vmatpush.msra.mxu0 %v466
    %1497 = vmatpush.msra.mxu0 %v462
    %1498 = vmatpush.msra.mxu0 %v458
    %1499 = vmatpush.msra.mxu0 %v454
    %1500 = vmatmul.f32.gmra.mxu0 %v1403
    %v1501 = vpop.f32.mrf.mxu0
    %v1502 = vadd.f32 %v112, %v1501
    %1503 = vdwg.mxu0
    %1504 = vmatpush.msra.mxu0 %v578
    %1505 = vmatpush.msra.mxu0 %v574
    %1506 = vmatpush.msra.mxu0 %v570
    %1507 = vmatpush.msra.mxu0 %v566
    %1508 = vmatpush.msra.mxu0 %v562
    %1509 = vmatpush.msra.mxu0 %v558
    %1510 = vmatpush.msra.mxu0 %v554
    %1511 = vmatpush.msra.mxu0 %v550
    %1512 = vmatpush.msra.mxu0 %v546
    %1513 = vmatpush.msra.mxu0 %v542
    %1514 = vmatpush.msra.mxu0 %v538
    %1515 = vmatpush.msra.mxu0 %v534
    %1516 = vmatpush.msra.mxu0 %v530
    %1517 = vmatpush.msra.mxu0 %v526
    %1518 = vmatpush.msra.mxu0 %v522
    %1519 = vmatpush.msra.mxu0 %v518
    %1520 = vmatmul.f32.gmra.mxu0 %v1196
    %v1521 = vpop.f32.mrf.mxu0
    %v1522 = vadd.f32 %v1502, %v1521
    %1523 = vdwg.mxu0
    %1524 = vmatpush.msra.mxu0 %v515
    %1525 = vmatpush.msra.mxu0 %v511
    %1526 = vmatpush.msra.mxu0 %v507
    %1527 = vmatpush.msra.mxu0 %v503
    %1528 = vmatpush.msra.mxu0 %v499
    %1529 = vmatpush.msra.mxu0 %v495
    %1530 = vmatpush.msra.mxu0 %v491
    %1531 = vmatpush.msra.mxu0 %v487
    %1532 = vmatpush.msra.mxu0 %v483
    %1533 = vmatpush.msra.mxu0 %v479
    %1534 = vmatpush.msra.mxu0 %v475
    %1535 = vmatpush.msra.mxu0 %v471
    %1536 = vmatpush.msra.mxu0 %v467
    %1537 = vmatpush.msra.mxu0 %v463
    %1538 = vmatpush.msra.mxu0 %v459
    %1539 = vmatpush.msra.mxu0 %v455
    %1540 = vmatmul.f32.gmra.mxu0 %v1403
    %v1541 = vpop.f32.mrf.mxu0
    %v1542 = vadd.f32 %v113, %v1541
    %1543 = vdwg.mxu0
    %1544 = vmatpush.msra.mxu0 %v579
    %1545 = vmatpush.msra.mxu0 %v575
    %1546 = vmatpush.msra.mxu0 %v571
    %1547 = vmatpush.msra.mxu0 %v567
    %1548 = vmatpush.msra.mxu0 %v563
    %1549 = vmatpush.msra.mxu0 %v559
    %1550 = vmatpush.msra.mxu0 %v555
    %1551 = vmatpush.msra.mxu0 %v551
    %1552 = vmatpush.msra.mxu0 %v547
    %1553 = vmatpush.msra.mxu0 %v543
    %1554 = vmatpush.msra.mxu0 %v539
    %1555 = vmatpush.msra.mxu0 %v535
    %1556 = vmatpush.msra.mxu0 %v531
    %1557 = vmatpush.msra.mxu0 %v527
    %1558 = vmatpush.msra.mxu0 %v523
    %1559 = vmatpush.msra.mxu0 %v519
    %1560 = vmatmul.f32.gmra.mxu0 %v1196
    %v1561 = vpop.f32.mrf.mxu0
    %v1562 = vadd.f32 %v1542, %v1561
    %1563 = vdwg.mxu0
    %v1564 = vxor.u32 %v1442, 2147483648
    %v1565 = vmul.f32 %v1564, 1.442695
    %v1566 = vpow.pop %v1565
    %v1567 = vadd.f32 %v1566, 1.0
    %v1568 = vrcp.pop %v1567
    %v1569 = vmul.f32 %v1567, %v1568
    %v1570 = vsub.f32 1.0, %v1569
    %v1571 = vmul.f32 %v1568, %v1570
    %v1572 = vadd.f32 %v1568, %v1571
    %vm1573 = vweird.f32 %v1567
    %vm1574 = vweird.f32 %v1568
    %vm1575 = vmor %vm1573, %vm1574
    %v1576 = vsel %vm1575, %v1568, %v1572
    %v1577 = vand.u32 2147483647, %v1567
    %vm1578 = vcmp.eq.f32.partialorder %v1577, 8.507059e+37
    %v1579 = vand.u32 %v1567, 2147483648
    %v1580 = vor.u32 1.1754944e-38, %v1579
    %v1581 = vsel %vm1578, %v1580, %v1576
    %v1582 = vmul.f32 1.0, %v1581
    %v1583 = vxor.u32 %v1482, 2147483648
    %v1584 = vmul.f32 %v1583, 1.442695
    %v1585 = vpow.pop %v1584
    %v1586 = vadd.f32 %v1585, 1.0
    %v1587 = vrcp.pop %v1586
    %v1588 = vmul.f32 %v1586, %v1587
    %v1589 = vsub.f32 1.0, %v1588
    %v1590 = vmul.f32 %v1587, %v1589
    %v1591 = vadd.f32 %v1587, %v1590
    %vm1592 = vweird.f32 %v1586
    %vm1593 = vweird.f32 %v1587
    %vm1594 = vmor %vm1592, %vm1593
    %v1595 = vsel %vm1594, %v1587, %v1591
    %v1596 = vand.u32 2147483647, %v1586
    %vm1597 = vcmp.eq.f32.partialorder %v1596, 8.507059e+37
    %v1598 = vand.u32 %v1586, 2147483648
    %v1599 = vor.u32 1.1754944e-38, %v1598
    %v1600 = vsel %vm1597, %v1599, %v1595
    %v1601 = vmul.f32 1.0, %v1600
    %v1602 = vmul.f32 %v1582, %v1562
    %v1603 = vadd.f32 %v1522, %v1602
    %v1604 = vtanh.pop %v1603
    %v1605 = vsub.f32 1.0, %v1601
    %v1606 = vmul.f32 %v1605, %v1604
    %v1607 = vmul.f32 %v1601, %v1196
    %v1608 = vadd.f32 %v1606, %v1607
    %s1609 = scalar_lea.vmem [#allocation2], 24
    %v1610 = vld [vmem:[%s1609] sm:$0xff]
    %1611 = vmatpush.msra.mxu0 %v179
    %1612 = vmatpush.msra.mxu0 %v175
    %1613 = vmatpush.msra.mxu0 %v171
    %1614 = vmatpush.msra.mxu0 %v167
    %1615 = vmatpush.msra.mxu0 %v163
    %1616 = vmatpush.msra.mxu0 %v159
    %1617 = vmatpush.msra.mxu0 %v155
    %1618 = vmatpush.msra.mxu0 %v151
    %1619 = vmatpush.msra.mxu0 %v147
    %1620 = vmatpush.msra.mxu0 %v143
    %1621 = vmatpush.msra.mxu0 %v139
    %1622 = vmatpush.msra.mxu0 %v135
    %1623 = vmatpush.msra.mxu0 %v131
    %1624 = vmatpush.msra.mxu0 %v127
    %1625 = vmatpush.msra.mxu0 %v123
    %1626 = vmatpush.msra.mxu0 %v119
    %1627 = vmatmul.f32.gmra.mxu0 %v1610
    %v1628 = vpop.f32.mrf.mxu0
    %v1629 = vadd.f32 %v100, %v1628
    %1630 = vdwg.mxu0
    %1631 = vmatpush.msra.mxu0 %v243
    %1632 = vmatpush.msra.mxu0 %v239
    %1633 = vmatpush.msra.mxu0 %v235
    %1634 = vmatpush.msra.mxu0 %v231
    %1635 = vmatpush.msra.mxu0 %v227
    %1636 = vmatpush.msra.mxu0 %v223
    %1637 = vmatpush.msra.mxu0 %v219
    %1638 = vmatpush.msra.mxu0 %v215
    %1639 = vmatpush.msra.mxu0 %v211
    %1640 = vmatpush.msra.mxu0 %v207
    %1641 = vmatpush.msra.mxu0 %v203
    %1642 = vmatpush.msra.mxu0 %v199
    %1643 = vmatpush.msra.mxu0 %v195
    %1644 = vmatpush.msra.mxu0 %v191
    %1645 = vmatpush.msra.mxu0 %v187
    %1646 = vmatpush.msra.mxu0 %v183
    %1647 = vmatmul.f32.gmra.mxu0 %v1403
    %v1648 = vpop.f32.mrf.mxu0
    %v1649 = vadd.f32 %v1629, %v1648
    %1650 = vdwg.mxu0
    %1651 = vmatpush.msra.mxu0 %v180
    %1652 = vmatpush.msra.mxu0 %v176
    %1653 = vmatpush.msra.mxu0 %v172
    %1654 = vmatpush.msra.mxu0 %v168
    %1655 = vmatpush.msra.mxu0 %v164
    %1656 = vmatpush.msra.mxu0 %v160
    %1657 = vmatpush.msra.mxu0 %v156
    %1658 = vmatpush.msra.mxu0 %v152
    %1659 = vmatpush.msra.mxu0 %v148
    %1660 = vmatpush.msra.mxu0 %v144
    %1661 = vmatpush.msra.mxu0 %v140
    %1662 = vmatpush.msra.mxu0 %v136
    %1663 = vmatpush.msra.mxu0 %v132
    %1664 = vmatpush.msra.mxu0 %v128
    %1665 = vmatpush.msra.mxu0 %v124
    %1666 = vmatpush.msra.mxu0 %v120
    %1667 = vmatmul.f32.gmra.mxu0 %v1610
    %v1668 = vpop.f32.mrf.mxu0
    %v1669 = vadd.f32 %v101, %v1668
    %1670 = vdwg.mxu0
    %1671 = vmatpush.msra.mxu0 %v244
    %1672 = vmatpush.msra.mxu0 %v240
    %1673 = vmatpush.msra.mxu0 %v236
    %1674 = vmatpush.msra.mxu0 %v232
    %1675 = vmatpush.msra.mxu0 %v228
    %1676 = vmatpush.msra.mxu0 %v224
    %1677 = vmatpush.msra.mxu0 %v220
    %1678 = vmatpush.msra.mxu0 %v216
    %1679 = vmatpush.msra.mxu0 %v212
    %1680 = vmatpush.msra.mxu0 %v208
    %1681 = vmatpush.msra.mxu0 %v204
    %1682 = vmatpush.msra.mxu0 %v200
    %1683 = vmatpush.msra.mxu0 %v196
    %1684 = vmatpush.msra.mxu0 %v192
    %1685 = vmatpush.msra.mxu0 %v188
    %1686 = vmatpush.msra.mxu0 %v184
    %1687 = vmatmul.f32.gmra.mxu0 %v1403
    %v1688 = vpop.f32.mrf.mxu0
    %v1689 = vadd.f32 %v1669, %v1688
    %1690 = vdwg.mxu0
    %1691 = vmatpush.msra.mxu0 %v181
    %1692 = vmatpush.msra.mxu0 %v177
    %1693 = vmatpush.msra.mxu0 %v173
    %1694 = vmatpush.msra.mxu0 %v169
    %1695 = vmatpush.msra.mxu0 %v165
    %1696 = vmatpush.msra.mxu0 %v161
    %1697 = vmatpush.msra.mxu0 %v157
    %1698 = vmatpush.msra.mxu0 %v153
    %1699 = vmatpush.msra.mxu0 %v149
    %1700 = vmatpush.msra.mxu0 %v145
    %1701 = vmatpush.msra.mxu0 %v141
    %1702 = vmatpush.msra.mxu0 %v137
    %1703 = vmatpush.msra.mxu0 %v133
    %1704 = vmatpush.msra.mxu0 %v129
    %1705 = vmatpush.msra.mxu0 %v125
    %1706 = vmatpush.msra.mxu0 %v121
    %1707 = vmatmul.f32.gmra.mxu0 %v1610
    %v1708 = vpop.f32.mrf.mxu0
    %v1709 = vadd.f32 %v102, %v1708
    %1710 = vdwg.mxu0
    %1711 = vmatpush.msra.mxu0 %v245
    %1712 = vmatpush.msra.mxu0 %v241
    %1713 = vmatpush.msra.mxu0 %v237
    %1714 = vmatpush.msra.mxu0 %v233
    %1715 = vmatpush.msra.mxu0 %v229
    %1716 = vmatpush.msra.mxu0 %v225
    %1717 = vmatpush.msra.mxu0 %v221
    %1718 = vmatpush.msra.mxu0 %v217
    %1719 = vmatpush.msra.mxu0 %v213
    %1720 = vmatpush.msra.mxu0 %v209
    %1721 = vmatpush.msra.mxu0 %v205
    %1722 = vmatpush.msra.mxu0 %v201
    %1723 = vmatpush.msra.mxu0 %v197
    %1724 = vmatpush.msra.mxu0 %v193
    %1725 = vmatpush.msra.mxu0 %v189
    %1726 = vmatpush.msra.mxu0 %v185
    %1727 = vmatmul.f32.gmra.mxu0 %v1403
    %v1728 = vpop.f32.mrf.mxu0
    %v1729 = vadd.f32 %v1709, %v1728
    %1730 = vdwg.mxu0
    %1731 = vmatpush.msra.mxu0 %v182
    %1732 = vmatpush.msra.mxu0 %v178
    %1733 = vmatpush.msra.mxu0 %v174
    %1734 = vmatpush.msra.mxu0 %v170
    %1735 = vmatpush.msra.mxu0 %v166
    %1736 = vmatpush.msra.mxu0 %v162
    %1737 = vmatpush.msra.mxu0 %v158
    %1738 = vmatpush.msra.mxu0 %v154
    %1739 = vmatpush.msra.mxu0 %v150
    %1740 = vmatpush.msra.mxu0 %v146
    %1741 = vmatpush.msra.mxu0 %v142
    %1742 = vmatpush.msra.mxu0 %v138
    %1743 = vmatpush.msra.mxu0 %v134
    %1744 = vmatpush.msra.mxu0 %v130
    %1745 = vmatpush.msra.mxu0 %v126
    %1746 = vmatpush.msra.mxu0 %v122
    %1747 = vmatmul.f32.gmra.mxu0 %v1610
    %v1748 = vpop.f32.mrf.mxu0
    %v1749 = vadd.f32 %v103, %v1748
    %1750 = vdwg.mxu0
    %1751 = vmatpush.msra.mxu0 %v246
    %1752 = vmatpush.msra.mxu0 %v242
    %1753 = vmatpush.msra.mxu0 %v238
    %1754 = vmatpush.msra.mxu0 %v234
    %1755 = vmatpush.msra.mxu0 %v230
    %1756 = vmatpush.msra.mxu0 %v226
    %1757 = vmatpush.msra.mxu0 %v222
    %1758 = vmatpush.msra.mxu0 %v218
    %1759 = vmatpush.msra.mxu0 %v214
    %1760 = vmatpush.msra.mxu0 %v210
    %1761 = vmatpush.msra.mxu0 %v206
    %1762 = vmatpush.msra.mxu0 %v202
    %1763 = vmatpush.msra.mxu0 %v198
    %1764 = vmatpush.msra.mxu0 %v194
    %1765 = vmatpush.msra.mxu0 %v190
    %1766 = vmatpush.msra.mxu0 %v186
    %1767 = vmatmul.f32.gmra.mxu0 %v1403
    %v1768 = vpop.f32.mrf.mxu0
    %v1769 = vadd.f32 %v1749, %v1768
    %1770 = vdwg.mxu0
    %v1771 = vxor.u32 %v1649, 2147483648
    %v1772 = vmul.f32 %v1771, 1.442695
    %v1773 = vpow.pop %v1772
    %v1774 = vadd.f32 %v1773, 1.0
    %v1775 = vrcp.pop %v1774
    %v1776 = vmul.f32 %v1774, %v1775
    %v1777 = vsub.f32 1.0, %v1776
    %v1778 = vmul.f32 %v1775, %v1777
    %v1779 = vadd.f32 %v1775, %v1778
    %vm1780 = vweird.f32 %v1774
    %vm1781 = vweird.f32 %v1775
    %vm1782 = vmor %vm1780, %vm1781
    %v1783 = vsel %vm1782, %v1775, %v1779
    %v1784 = vand.u32 2147483647, %v1774
    %vm1785 = vcmp.eq.f32.partialorder %v1784, 8.507059e+37
    %v1786 = vand.u32 %v1774, 2147483648
    %v1787 = vor.u32 1.1754944e-38, %v1786
    %v1788 = vsel %vm1785, %v1787, %v1783
    %v1789 = vmul.f32 1.0, %v1788
    %v1790 = vxor.u32 %v1689, 2147483648
    %v1791 = vmul.f32 %v1790, 1.442695
    %v1792 = vpow.pop %v1791
    %v1793 = vadd.f32 %v1792, 1.0
    %v1794 = vrcp.pop %v1793
    %v1795 = vmul.f32 %v1793, %v1794
    %v1796 = vsub.f32 1.0, %v1795
    %v1797 = vmul.f32 %v1794, %v1796
    %v1798 = vadd.f32 %v1794, %v1797
    %vm1799 = vweird.f32 %v1793
    %vm1800 = vweird.f32 %v1794
    %vm1801 = vmor %vm1799, %vm1800
    %v1802 = vsel %vm1801, %v1794, %v1798
    %v1803 = vand.u32 2147483647, %v1793
    %vm1804 = vcmp.eq.f32.partialorder %v1803, 8.507059e+37
    %v1805 = vand.u32 %v1793, 2147483648
    %v1806 = vor.u32 1.1754944e-38, %v1805
    %v1807 = vsel %vm1804, %v1806, %v1802
    %v1808 = vmul.f32 1.0, %v1807
    %v1809 = vmul.f32 %v1789, %v1769
    %v1810 = vadd.f32 %v1729, %v1809
    %v1811 = vtanh.pop %v1810
    %v1812 = vsub.f32 1.0, %v1808
    %v1813 = vmul.f32 %v1812, %v1811
    %v1814 = vmul.f32 %v1808, %v1403
    %v1815 = vadd.f32 %v1813, %v1814
    %1816 = vmatpush.msra.mxu0 %v512
    %1817 = vmatpush.msra.mxu0 %v508
    %1818 = vmatpush.msra.mxu0 %v504
    %1819 = vmatpush.msra.mxu0 %v500
    %1820 = vmatpush.msra.mxu0 %v496
    %1821 = vmatpush.msra.mxu0 %v492
    %1822 = vmatpush.msra.mxu0 %v488
    %1823 = vmatpush.msra.mxu0 %v484
    %1824 = vmatpush.msra.mxu0 %v480
    %1825 = vmatpush.msra.mxu0 %v476
    %1826 = vmatpush.msra.mxu0 %v472
    %1827 = vmatpush.msra.mxu0 %v468
    %1828 = vmatpush.msra.mxu0 %v464
    %1829 = vmatpush.msra.mxu0 %v460
    %1830 = vmatpush.msra.mxu0 %v456
    %1831 = vmatpush.msra.mxu0 %v452
    %1832 = vmatmul.f32.gmra.mxu0 %v1815
    %v1833 = vpop.f32.mrf.mxu0
    %v1834 = vadd.f32 %v110, %v1833
    %1835 = vdwg.mxu0
    %1836 = vmatpush.msra.mxu0 %v576
    %1837 = vmatpush.msra.mxu0 %v572
    %1838 = vmatpush.msra.mxu0 %v568
    %1839 = vmatpush.msra.mxu0 %v564
    %1840 = vmatpush.msra.mxu0 %v560
    %1841 = vmatpush.msra.mxu0 %v556
    %1842 = vmatpush.msra.mxu0 %v552
    %1843 = vmatpush.msra.mxu0 %v548
    %1844 = vmatpush.msra.mxu0 %v544
    %1845 = vmatpush.msra.mxu0 %v540
    %1846 = vmatpush.msra.mxu0 %v536
    %1847 = vmatpush.msra.mxu0 %v532
    %1848 = vmatpush.msra.mxu0 %v528
    %1849 = vmatpush.msra.mxu0 %v524
    %1850 = vmatpush.msra.mxu0 %v520
    %1851 = vmatpush.msra.mxu0 %v516
    %1852 = vmatmul.f32.gmra.mxu0 %v1608
    %v1853 = vpop.f32.mrf.mxu0
    %v1854 = vadd.f32 %v1834, %v1853
    %1855 = vdwg.mxu0
    %1856 = vmatpush.msra.mxu0 %v513
    %1857 = vmatpush.msra.mxu0 %v509
    %1858 = vmatpush.msra.mxu0 %v505
    %1859 = vmatpush.msra.mxu0 %v501
    %1860 = vmatpush.msra.mxu0 %v497
    %1861 = vmatpush.msra.mxu0 %v493
    %1862 = vmatpush.msra.mxu0 %v489
    %1863 = vmatpush.msra.mxu0 %v485
    %1864 = vmatpush.msra.mxu0 %v481
    %1865 = vmatpush.msra.mxu0 %v477
    %1866 = vmatpush.msra.mxu0 %v473
    %1867 = vmatpush.msra.mxu0 %v469
    %1868 = vmatpush.msra.mxu0 %v465
    %1869 = vmatpush.msra.mxu0 %v461
    %1870 = vmatpush.msra.mxu0 %v457
    %1871 = vmatpush.msra.mxu0 %v453
    %1872 = vmatmul.f32.gmra.mxu0 %v1815
    %v1873 = vpop.f32.mrf.mxu0
    %v1874 = vadd.f32 %v111, %v1873
    %1875 = vdwg.mxu0
    %1876 = vmatpush.msra.mxu0 %v577
    %1877 = vmatpush.msra.mxu0 %v573
    %1878 = vmatpush.msra.mxu0 %v569
    %1879 = vmatpush.msra.mxu0 %v565
    %1880 = vmatpush.msra.mxu0 %v561
    %1881 = vmatpush.msra.mxu0 %v557
    %1882 = vmatpush.msra.mxu0 %v553
    %1883 = vmatpush.msra.mxu0 %v549
    %1884 = vmatpush.msra.mxu0 %v545
    %1885 = vmatpush.msra.mxu0 %v541
    %1886 = vmatpush.msra.mxu0 %v537
    %1887 = vmatpush.msra.mxu0 %v533
    %1888 = vmatpush.msra.mxu0 %v529
    %1889 = vmatpush.msra.mxu0 %v525
    %1890 = vmatpush.msra.mxu0 %v521
    %1891 = vmatpush.msra.mxu0 %v517
    %1892 = vmatmul.f32.gmra.mxu0 %v1608
    %v1893 = vpop.f32.mrf.mxu0
    %v1894 = vadd.f32 %v1874, %v1893
    %1895 = vdwg.mxu0
    %1896 = vmatpush.msra.mxu0 %v514
    %1897 = vmatpush.msra.mxu0 %v510
    %1898 = vmatpush.msra.mxu0 %v506
    %1899 = vmatpush.msra.mxu0 %v502
    %1900 = vmatpush.msra.mxu0 %v498
    %1901 = vmatpush.msra.mxu0 %v494
    %1902 = vmatpush.msra.mxu0 %v490
    %1903 = vmatpush.msra.mxu0 %v486
    %1904 = vmatpush.msra.mxu0 %v482
    %1905 = vmatpush.msra.mxu0 %v478
    %1906 = vmatpush.msra.mxu0 %v474
    %1907 = vmatpush.msra.mxu0 %v470
    %1908 = vmatpush.msra.mxu0 %v466
    %1909 = vmatpush.msra.mxu0 %v462
    %1910 = vmatpush.msra.mxu0 %v458
    %1911 = vmatpush.msra.mxu0 %v454
    %1912 = vmatmul.f32.gmra.mxu0 %v1815
    %v1913 = vpop.f32.mrf.mxu0
    %v1914 = vadd.f32 %v112, %v1913
    %1915 = vdwg.mxu0
    %1916 = vmatpush.msra.mxu0 %v578
    %1917 = vmatpush.msra.mxu0 %v574
    %1918 = vmatpush.msra.mxu0 %v570
    %1919 = vmatpush.msra.mxu0 %v566
    %1920 = vmatpush.msra.mxu0 %v562
    %1921 = vmatpush.msra.mxu0 %v558
    %1922 = vmatpush.msra.mxu0 %v554
    %1923 = vmatpush.msra.mxu0 %v550
    %1924 = vmatpush.msra.mxu0 %v546
    %1925 = vmatpush.msra.mxu0 %v542
    %1926 = vmatpush.msra.mxu0 %v538
    %1927 = vmatpush.msra.mxu0 %v534
    %1928 = vmatpush.msra.mxu0 %v530
    %1929 = vmatpush.msra.mxu0 %v526
    %1930 = vmatpush.msra.mxu0 %v522
    %1931 = vmatpush.msra.mxu0 %v518
    %1932 = vmatmul.f32.gmra.mxu0 %v1608
    %v1933 = vpop.f32.mrf.mxu0
    %v1934 = vadd.f32 %v1914, %v1933
    %1935 = vdwg.mxu0
    %1936 = vmatpush.msra.mxu0 %v515
    %1937 = vmatpush.msra.mxu0 %v511
    %1938 = vmatpush.msra.mxu0 %v507
    %1939 = vmatpush.msra.mxu0 %v503
    %1940 = vmatpush.msra.mxu0 %v499
    %1941 = vmatpush.msra.mxu0 %v495
    %1942 = vmatpush.msra.mxu0 %v491
    %1943 = vmatpush.msra.mxu0 %v487
    %1944 = vmatpush.msra.mxu0 %v483
    %1945 = vmatpush.msra.mxu0 %v479
    %1946 = vmatpush.msra.mxu0 %v475
    %1947 = vmatpush.msra.mxu0 %v471
    %1948 = vmatpush.msra.mxu0 %v467
    %1949 = vmatpush.msra.mxu0 %v463
    %1950 = vmatpush.msra.mxu0 %v459
    %1951 = vmatpush.msra.mxu0 %v455
    %1952 = vmatmul.f32.gmra.mxu0 %v1815
    %v1953 = vpop.f32.mrf.mxu0
    %v1954 = vadd.f32 %v113, %v1953
    %1955 = vdwg.mxu0
    %1956 = vmatpush.msra.mxu0 %v579
    %1957 = vmatpush.msra.mxu0 %v575
    %1958 = vmatpush.msra.mxu0 %v571
    %1959 = vmatpush.msra.mxu0 %v567
    %1960 = vmatpush.msra.mxu0 %v563
    %1961 = vmatpush.msra.mxu0 %v559
    %1962 = vmatpush.msra.mxu0 %v555
    %1963 = vmatpush.msra.mxu0 %v551
    %1964 = vmatpush.msra.mxu0 %v547
    %1965 = vmatpush.msra.mxu0 %v543
    %1966 = vmatpush.msra.mxu0 %v539
    %1967 = vmatpush.msra.mxu0 %v535
    %1968 = vmatpush.msra.mxu0 %v531
    %1969 = vmatpush.msra.mxu0 %v527
    %1970 = vmatpush.msra.mxu0 %v523
    %1971 = vmatpush.msra.mxu0 %v519
    %1972 = vmatmul.f32.gmra.mxu0 %v1608
    %v1973 = vpop.f32.mrf.mxu0
    %v1974 = vadd.f32 %v1954, %v1973
    %1975 = vdwg.mxu0
    %v1976 = vxor.u32 %v1854, 2147483648
    %v1977 = vmul.f32 %v1976, 1.442695
    %v1978 = vpow.pop %v1977
    %v1979 = vadd.f32 %v1978, 1.0
    %v1980 = vrcp.pop %v1979
    %v1981 = vmul.f32 %v1979, %v1980
    %v1982 = vsub.f32 1.0, %v1981
    %v1983 = vmul.f32 %v1980, %v1982
    %v1984 = vadd.f32 %v1980, %v1983
    %vm1985 = vweird.f32 %v1979
    %vm1986 = vweird.f32 %v1980
    %vm1987 = vmor %vm1985, %vm1986
    %v1988 = vsel %vm1987, %v1980, %v1984
    %v1989 = vand.u32 2147483647, %v1979
    %vm1990 = vcmp.eq.f32.partialorder %v1989, 8.507059e+37
    %v1991 = vand.u32 %v1979, 2147483648
    %v1992 = vor.u32 1.1754944e-38, %v1991
    %v1993 = vsel %vm1990, %v1992, %v1988
    %v1994 = vmul.f32 1.0, %v1993
    %v1995 = vxor.u32 %v1894, 2147483648
    %v1996 = vmul.f32 %v1995, 1.442695
    %v1997 = vpow.pop %v1996
    %v1998 = vadd.f32 %v1997, 1.0
    %v1999 = vrcp.pop %v1998
    %v2000 = vmul.f32 %v1998, %v1999
    %v2001 = vsub.f32 1.0, %v2000
    %v2002 = vmul.f32 %v1999, %v2001
    %v2003 = vadd.f32 %v1999, %v2002
    %vm2004 = vweird.f32 %v1998
    %vm2005 = vweird.f32 %v1999
    %vm2006 = vmor %vm2004, %vm2005
    %v2007 = vsel %vm2006, %v1999, %v2003
    %v2008 = vand.u32 2147483647, %v1998
    %vm2009 = vcmp.eq.f32.partialorder %v2008, 8.507059e+37
    %v2010 = vand.u32 %v1998, 2147483648
    %v2011 = vor.u32 1.1754944e-38, %v2010
    %v2012 = vsel %vm2009, %v2011, %v2007
    %v2013 = vmul.f32 1.0, %v2012
    %v2014 = vmul.f32 %v1994, %v1974
    %v2015 = vadd.f32 %v1934, %v2014
    %v2016 = vtanh.pop %v2015
    %v2017 = vsub.f32 1.0, %v2013
    %v2018 = vmul.f32 %v2017, %v2016
    %v2019 = vmul.f32 %v2013, %v1608
    %v2020 = vadd.f32 %v2018, %v2019
    %s2021 = scalar_lea.vmem [#allocation2], 32
    %v2022 = vld [vmem:[%s2021] sm:$0xff]
    %2023 = vmatpush.msra.mxu0 %v179
    %2024 = vmatpush.msra.mxu0 %v175
    %2025 = vmatpush.msra.mxu0 %v171
    %2026 = vmatpush.msra.mxu0 %v167
    %2027 = vmatpush.msra.mxu0 %v163
    %2028 = vmatpush.msra.mxu0 %v159
    %2029 = vmatpush.msra.mxu0 %v155
    %2030 = vmatpush.msra.mxu0 %v151
    %2031 = vmatpush.msra.mxu0 %v147
    %2032 = vmatpush.msra.mxu0 %v143
    %2033 = vmatpush.msra.mxu0 %v139
    %2034 = vmatpush.msra.mxu0 %v135
    %2035 = vmatpush.msra.mxu0 %v131
    %2036 = vmatpush.msra.mxu0 %v127
    %2037 = vmatpush.msra.mxu0 %v123
    %2038 = vmatpush.msra.mxu0 %v119
    %2039 = vmatmul.f32.gmra.mxu0 %v2022
    %v2040 = vpop.f32.mrf.mxu0
    %v2041 = vadd.f32 %v100, %v2040
    %2042 = vdwg.mxu0
    %2043 = vmatpush.msra.mxu0 %v243
    %2044 = vmatpush.msra.mxu0 %v239
    %2045 = vmatpush.msra.mxu0 %v235
    %2046 = vmatpush.msra.mxu0 %v231
    %2047 = vmatpush.msra.mxu0 %v227
    %2048 = vmatpush.msra.mxu0 %v223
    %2049 = vmatpush.msra.mxu0 %v219
    %2050 = vmatpush.msra.mxu0 %v215
    %2051 = vmatpush.msra.mxu0 %v211
    %2052 = vmatpush.msra.mxu0 %v207
    %2053 = vmatpush.msra.mxu0 %v203
    %2054 = vmatpush.msra.mxu0 %v199
    %2055 = vmatpush.msra.mxu0 %v195
    %2056 = vmatpush.msra.mxu0 %v191
    %2057 = vmatpush.msra.mxu0 %v187
    %2058 = vmatpush.msra.mxu0 %v183
    %2059 = vmatmul.f32.gmra.mxu0 %v1815
    %v2060 = vpop.f32.mrf.mxu0
    %v2061 = vadd.f32 %v2041, %v2060
    %2062 = vdwg.mxu0
    %2063 = vmatpush.msra.mxu0 %v180
    %2064 = vmatpush.msra.mxu0 %v176
    %2065 = vmatpush.msra.mxu0 %v172
    %2066 = vmatpush.msra.mxu0 %v168
    %2067 = vmatpush.msra.mxu0 %v164
    %2068 = vmatpush.msra.mxu0 %v160
    %2069 = vmatpush.msra.mxu0 %v156
    %2070 = vmatpush.msra.mxu0 %v152
    %2071 = vmatpush.msra.mxu0 %v148
    %2072 = vmatpush.msra.mxu0 %v144
    %2073 = vmatpush.msra.mxu0 %v140
    %2074 = vmatpush.msra.mxu0 %v136
    %2075 = vmatpush.msra.mxu0 %v132
    %2076 = vmatpush.msra.mxu0 %v128
    %2077 = vmatpush.msra.mxu0 %v124
    %2078 = vmatpush.msra.mxu0 %v120
    %2079 = vmatmul.f32.gmra.mxu0 %v2022
    %v2080 = vpop.f32.mrf.mxu0
    %v2081 = vadd.f32 %v101, %v2080
    %2082 = vdwg.mxu0
    %2083 = vmatpush.msra.mxu0 %v244
    %2084 = vmatpush.msra.mxu0 %v240
    %2085 = vmatpush.msra.mxu0 %v236
    %2086 = vmatpush.msra.mxu0 %v232
    %2087 = vmatpush.msra.mxu0 %v228
    %2088 = vmatpush.msra.mxu0 %v224
    %2089 = vmatpush.msra.mxu0 %v220
    %2090 = vmatpush.msra.mxu0 %v216
    %2091 = vmatpush.msra.mxu0 %v212
    %2092 = vmatpush.msra.mxu0 %v208
    %2093 = vmatpush.msra.mxu0 %v204
    %2094 = vmatpush.msra.mxu0 %v200
    %2095 = vmatpush.msra.mxu0 %v196
    %2096 = vmatpush.msra.mxu0 %v192
    %2097 = vmatpush.msra.mxu0 %v188
    %2098 = vmatpush.msra.mxu0 %v184
    %2099 = vmatmul.f32.gmra.mxu0 %v1815
    %v2100 = vpop.f32.mrf.mxu0
    %v2101 = vadd.f32 %v2081, %v2100
    %2102 = vdwg.mxu0
    %2103 = vmatpush.msra.mxu0 %v181
    %2104 = vmatpush.msra.mxu0 %v177
    %2105 = vmatpush.msra.mxu0 %v173
    %2106 = vmatpush.msra.mxu0 %v169
    %2107 = vmatpush.msra.mxu0 %v165
    %2108 = vmatpush.msra.mxu0 %v161
    %2109 = vmatpush.msra.mxu0 %v157
    %2110 = vmatpush.msra.mxu0 %v153
    %2111 = vmatpush.msra.mxu0 %v149
    %2112 = vmatpush.msra.mxu0 %v145
    %2113 = vmatpush.msra.mxu0 %v141
    %2114 = vmatpush.msra.mxu0 %v137
    %2115 = vmatpush.msra.mxu0 %v133
    %2116 = vmatpush.msra.mxu0 %v129
    %2117 = vmatpush.msra.mxu0 %v125
    %2118 = vmatpush.msra.mxu0 %v121
    %2119 = vmatmul.f32.gmra.mxu0 %v2022
    %v2120 = vpop.f32.mrf.mxu0
    %v2121 = vadd.f32 %v102, %v2120
    %2122 = vdwg.mxu0
    %2123 = vmatpush.msra.mxu0 %v245
    %2124 = vmatpush.msra.mxu0 %v241
    %2125 = vmatpush.msra.mxu0 %v237
    %2126 = vmatpush.msra.mxu0 %v233
    %2127 = vmatpush.msra.mxu0 %v229
    %2128 = vmatpush.msra.mxu0 %v225
    %2129 = vmatpush.msra.mxu0 %v221
    %2130 = vmatpush.msra.mxu0 %v217
    %2131 = vmatpush.msra.mxu0 %v213
    %2132 = vmatpush.msra.mxu0 %v209
    %2133 = vmatpush.msra.mxu0 %v205
    %2134 = vmatpush.msra.mxu0 %v201
    %2135 = vmatpush.msra.mxu0 %v197
    %2136 = vmatpush.msra.mxu0 %v193
    %2137 = vmatpush.msra.mxu0 %v189
    %2138 = vmatpush.msra.mxu0 %v185
    %2139 = vmatmul.f32.gmra.mxu0 %v1815
    %v2140 = vpop.f32.mrf.mxu0
    %v2141 = vadd.f32 %v2121, %v2140
    %2142 = vdwg.mxu0
    %2143 = vmatpush.msra.mxu0 %v182
    %2144 = vmatpush.msra.mxu0 %v178
    %2145 = vmatpush.msra.mxu0 %v174
    %2146 = vmatpush.msra.mxu0 %v170
    %2147 = vmatpush.msra.mxu0 %v166
    %2148 = vmatpush.msra.mxu0 %v162
    %2149 = vmatpush.msra.mxu0 %v158
    %2150 = vmatpush.msra.mxu0 %v154
    %2151 = vmatpush.msra.mxu0 %v150
    %2152 = vmatpush.msra.mxu0 %v146
    %2153 = vmatpush.msra.mxu0 %v142
    %2154 = vmatpush.msra.mxu0 %v138
    %2155 = vmatpush.msra.mxu0 %v134
    %2156 = vmatpush.msra.mxu0 %v130
    %2157 = vmatpush.msra.mxu0 %v126
    %2158 = vmatpush.msra.mxu0 %v122
    %2159 = vmatmul.f32.gmra.mxu0 %v2022
    %v2160 = vpop.f32.mrf.mxu0
    %v2161 = vadd.f32 %v103, %v2160
    %2162 = vdwg.mxu0
    %2163 = vmatpush.msra.mxu0 %v246
    %2164 = vmatpush.msra.mxu0 %v242
    %2165 = vmatpush.msra.mxu0 %v238
    %2166 = vmatpush.msra.mxu0 %v234
    %2167 = vmatpush.msra.mxu0 %v230
    %2168 = vmatpush.msra.mxu0 %v226
    %2169 = vmatpush.msra.mxu0 %v222
    %2170 = vmatpush.msra.mxu0 %v218
    %2171 = vmatpush.msra.mxu0 %v214
    %2172 = vmatpush.msra.mxu0 %v210
    %2173 = vmatpush.msra.mxu0 %v206
    %2174 = vmatpush.msra.mxu0 %v202
    %2175 = vmatpush.msra.mxu0 %v198
    %2176 = vmatpush.msra.mxu0 %v194
    %2177 = vmatpush.msra.mxu0 %v190
    %2178 = vmatpush.msra.mxu0 %v186
    %2179 = vmatmul.f32.gmra.mxu0 %v1815
    %v2180 = vpop.f32.mrf.mxu0
    %v2181 = vadd.f32 %v2161, %v2180
    %2182 = vdwg.mxu0
    %v2183 = vxor.u32 %v2061, 2147483648
    %v2184 = vmul.f32 %v2183, 1.442695
    %v2185 = vpow.pop %v2184
    %v2186 = vadd.f32 %v2185, 1.0
    %v2187 = vrcp.pop %v2186
    %v2188 = vmul.f32 %v2186, %v2187
    %v2189 = vsub.f32 1.0, %v2188
    %v2190 = vmul.f32 %v2187, %v2189
    %v2191 = vadd.f32 %v2187, %v2190
    %vm2192 = vweird.f32 %v2186
    %vm2193 = vweird.f32 %v2187
    %vm2194 = vmor %vm2192, %vm2193
    %v2195 = vsel %vm2194, %v2187, %v2191
    %v2196 = vand.u32 2147483647, %v2186
    %vm2197 = vcmp.eq.f32.partialorder %v2196, 8.507059e+37
    %v2198 = vand.u32 %v2186, 2147483648
    %v2199 = vor.u32 1.1754944e-38, %v2198
    %v2200 = vsel %vm2197, %v2199, %v2195
    %v2201 = vmul.f32 1.0, %v2200
    %v2202 = vxor.u32 %v2101, 2147483648
    %v2203 = vmul.f32 %v2202, 1.442695
    %v2204 = vpow.pop %v2203
    %v2205 = vadd.f32 %v2204, 1.0
    %v2206 = vrcp.pop %v2205
    %v2207 = vmul.f32 %v2205, %v2206
    %v2208 = vsub.f32 1.0, %v2207
    %v2209 = vmul.f32 %v2206, %v2208
    %v2210 = vadd.f32 %v2206, %v2209
    %vm2211 = vweird.f32 %v2205
    %vm2212 = vweird.f32 %v2206
    %vm2213 = vmor %vm2211, %vm2212
    %v2214 = vsel %vm2213, %v2206, %v2210
    %v2215 = vand.u32 2147483647, %v2205
    %vm2216 = vcmp.eq.f32.partialorder %v2215, 8.507059e+37
    %v2217 = vand.u32 %v2205, 2147483648
    %v2218 = vor.u32 1.1754944e-38, %v2217
    %v2219 = vsel %vm2216, %v2218, %v2214
    %v2220 = vmul.f32 1.0, %v2219
    %v2221 = vmul.f32 %v2201, %v2181
    %v2222 = vadd.f32 %v2141, %v2221
    %v2223 = vtanh.pop %v2222
    %v2224 = vsub.f32 1.0, %v2220
    %v2225 = vmul.f32 %v2224, %v2223
    %v2226 = vmul.f32 %v2220, %v1815
    %v2227 = vadd.f32 %v2225, %v2226
    %2228 = vmatpush.msra.mxu0 %v512
    %2229 = vmatpush.msra.mxu0 %v508
    %2230 = vmatpush.msra.mxu0 %v504
    %2231 = vmatpush.msra.mxu0 %v500
    %2232 = vmatpush.msra.mxu0 %v496
    %2233 = vmatpush.msra.mxu0 %v492
    %2234 = vmatpush.msra.mxu0 %v488
    %2235 = vmatpush.msra.mxu0 %v484
    %2236 = vmatpush.msra.mxu0 %v480
    %2237 = vmatpush.msra.mxu0 %v476
    %2238 = vmatpush.msra.mxu0 %v472
    %2239 = vmatpush.msra.mxu0 %v468
    %2240 = vmatpush.msra.mxu0 %v464
    %2241 = vmatpush.msra.mxu0 %v460
    %2242 = vmatpush.msra.mxu0 %v456
    %2243 = vmatpush.msra.mxu0 %v452
    %2244 = vmatmul.f32.gmra.mxu0 %v2227
    %v2245 = vpop.f32.mrf.mxu0
    %v2246 = vadd.f32 %v110, %v2245
    %2247 = vdwg.mxu0
    %2248 = vmatpush.msra.mxu0 %v576
    %2249 = vmatpush.msra.mxu0 %v572
    %2250 = vmatpush.msra.mxu0 %v568
    %2251 = vmatpush.msra.mxu0 %v564
    %2252 = vmatpush.msra.mxu0 %v560
    %2253 = vmatpush.msra.mxu0 %v556
    %2254 = vmatpush.msra.mxu0 %v552
    %2255 = vmatpush.msra.mxu0 %v548
    %2256 = vmatpush.msra.mxu0 %v544
    %2257 = vmatpush.msra.mxu0 %v540
    %2258 = vmatpush.msra.mxu0 %v536
    %2259 = vmatpush.msra.mxu0 %v532
    %2260 = vmatpush.msra.mxu0 %v528
    %2261 = vmatpush.msra.mxu0 %v524
    %2262 = vmatpush.msra.mxu0 %v520
    %2263 = vmatpush.msra.mxu0 %v516
    %2264 = vmatmul.f32.gmra.mxu0 %v2020
    %v2265 = vpop.f32.mrf.mxu0
    %v2266 = vadd.f32 %v2246, %v2265
    %2267 = vdwg.mxu0
    %2268 = vmatpush.msra.mxu0 %v513
    %2269 = vmatpush.msra.mxu0 %v509
    %2270 = vmatpush.msra.mxu0 %v505
    %2271 = vmatpush.msra.mxu0 %v501
    %2272 = vmatpush.msra.mxu0 %v497
    %2273 = vmatpush.msra.mxu0 %v493
    %2274 = vmatpush.msra.mxu0 %v489
    %2275 = vmatpush.msra.mxu0 %v485
    %2276 = vmatpush.msra.mxu0 %v481
    %2277 = vmatpush.msra.mxu0 %v477
    %2278 = vmatpush.msra.mxu0 %v473
    %2279 = vmatpush.msra.mxu0 %v469
    %2280 = vmatpush.msra.mxu0 %v465
    %2281 = vmatpush.msra.mxu0 %v461
    %2282 = vmatpush.msra.mxu0 %v457
    %2283 = vmatpush.msra.mxu0 %v453
    %2284 = vmatmul.f32.gmra.mxu0 %v2227
    %v2285 = vpop.f32.mrf.mxu0
    %v2286 = vadd.f32 %v111, %v2285
    %2287 = vdwg.mxu0
    %2288 = vmatpush.msra.mxu0 %v577
    %2289 = vmatpush.msra.mxu0 %v573
    %2290 = vmatpush.msra.mxu0 %v569
    %2291 = vmatpush.msra.mxu0 %v565
    %2292 = vmatpush.msra.mxu0 %v561
    %2293 = vmatpush.msra.mxu0 %v557
    %2294 = vmatpush.msra.mxu0 %v553
    %2295 = vmatpush.msra.mxu0 %v549
    %2296 = vmatpush.msra.mxu0 %v545
    %2297 = vmatpush.msra.mxu0 %v541
    %2298 = vmatpush.msra.mxu0 %v537
    %2299 = vmatpush.msra.mxu0 %v533
    %2300 = vmatpush.msra.mxu0 %v529
    %2301 = vmatpush.msra.mxu0 %v525
    %2302 = vmatpush.msra.mxu0 %v521
    %2303 = vmatpush.msra.mxu0 %v517
    %2304 = vmatmul.f32.gmra.mxu0 %v2020
    %v2305 = vpop.f32.mrf.mxu0
    %v2306 = vadd.f32 %v2286, %v2305
    %2307 = vdwg.mxu0
    %2308 = vmatpush.msra.mxu0 %v514
    %2309 = vmatpush.msra.mxu0 %v510
    %2310 = vmatpush.msra.mxu0 %v506
    %2311 = vmatpush.msra.mxu0 %v502
    %2312 = vmatpush.msra.mxu0 %v498
    %2313 = vmatpush.msra.mxu0 %v494
    %2314 = vmatpush.msra.mxu0 %v490
    %2315 = vmatpush.msra.mxu0 %v486
    %2316 = vmatpush.msra.mxu0 %v482
    %2317 = vmatpush.msra.mxu0 %v478
    %2318 = vmatpush.msra.mxu0 %v474
    %2319 = vmatpush.msra.mxu0 %v470
    %2320 = vmatpush.msra.mxu0 %v466
    %2321 = vmatpush.msra.mxu0 %v462
    %2322 = vmatpush.msra.mxu0 %v458
    %2323 = vmatpush.msra.mxu0 %v454
    %2324 = vmatmul.f32.gmra.mxu0 %v2227
    %v2325 = vpop.f32.mrf.mxu0
    %v2326 = vadd.f32 %v112, %v2325
    %2327 = vdwg.mxu0
    %2328 = vmatpush.msra.mxu0 %v578
    %2329 = vmatpush.msra.mxu0 %v574
    %2330 = vmatpush.msra.mxu0 %v570
    %2331 = vmatpush.msra.mxu0 %v566
    %2332 = vmatpush.msra.mxu0 %v562
    %2333 = vmatpush.msra.mxu0 %v558
    %2334 = vmatpush.msra.mxu0 %v554
    %2335 = vmatpush.msra.mxu0 %v550
    %2336 = vmatpush.msra.mxu0 %v546
    %2337 = vmatpush.msra.mxu0 %v542
    %2338 = vmatpush.msra.mxu0 %v538
    %2339 = vmatpush.msra.mxu0 %v534
    %2340 = vmatpush.msra.mxu0 %v530
    %2341 = vmatpush.msra.mxu0 %v526
    %2342 = vmatpush.msra.mxu0 %v522
    %2343 = vmatpush.msra.mxu0 %v518
    %2344 = vmatmul.f32.gmra.mxu0 %v2020
    %v2345 = vpop.f32.mrf.mxu0
    %v2346 = vadd.f32 %v2326, %v2345
    %2347 = vdwg.mxu0
    %2348 = vmatpush.msra.mxu0 %v515
    %2349 = vmatpush.msra.mxu0 %v511
    %2350 = vmatpush.msra.mxu0 %v507
    %2351 = vmatpush.msra.mxu0 %v503
    %2352 = vmatpush.msra.mxu0 %v499
    %2353 = vmatpush.msra.mxu0 %v495
    %2354 = vmatpush.msra.mxu0 %v491
    %2355 = vmatpush.msra.mxu0 %v487
    %2356 = vmatpush.msra.mxu0 %v483
    %2357 = vmatpush.msra.mxu0 %v479
    %2358 = vmatpush.msra.mxu0 %v475
    %2359 = vmatpush.msra.mxu0 %v471
    %2360 = vmatpush.msra.mxu0 %v467
    %2361 = vmatpush.msra.mxu0 %v463
    %2362 = vmatpush.msra.mxu0 %v459
    %2363 = vmatpush.msra.mxu0 %v455
    %2364 = vmatmul.f32.gmra.mxu0 %v2227
    %v2365 = vpop.f32.mrf.mxu0
    %v2366 = vadd.f32 %v113, %v2365
    %2367 = vdwg.mxu0
    %2368 = vmatpush.msra.mxu0 %v579
    %2369 = vmatpush.msra.mxu0 %v575
    %2370 = vmatpush.msra.mxu0 %v571
    %2371 = vmatpush.msra.mxu0 %v567
    %2372 = vmatpush.msra.mxu0 %v563
    %2373 = vmatpush.msra.mxu0 %v559
    %2374 = vmatpush.msra.mxu0 %v555
    %2375 = vmatpush.msra.mxu0 %v551
    %2376 = vmatpush.msra.mxu0 %v547
    %2377 = vmatpush.msra.mxu0 %v543
    %2378 = vmatpush.msra.mxu0 %v539
    %2379 = vmatpush.msra.mxu0 %v535
    %2380 = vmatpush.msra.mxu0 %v531
    %2381 = vmatpush.msra.mxu0 %v527
    %2382 = vmatpush.msra.mxu0 %v523
    %2383 = vmatpush.msra.mxu0 %v519
    %2384 = vmatmul.f32.gmra.mxu0 %v2020
    %v2385 = vpop.f32.mrf.mxu0
    %v2386 = vadd.f32 %v2366, %v2385
    %2387 = vdwg.mxu0
    %v2388 = vxor.u32 %v2266, 2147483648
    %v2389 = vmul.f32 %v2388, 1.442695
    %v2390 = vpow.pop %v2389
    %v2391 = vadd.f32 %v2390, 1.0
    %v2392 = vrcp.pop %v2391
    %v2393 = vmul.f32 %v2391, %v2392
    %v2394 = vsub.f32 1.0, %v2393
    %v2395 = vmul.f32 %v2392, %v2394
    %v2396 = vadd.f32 %v2392, %v2395
    %vm2397 = vweird.f32 %v2391
    %vm2398 = vweird.f32 %v2392
    %vm2399 = vmor %vm2397, %vm2398
    %v2400 = vsel %vm2399, %v2392, %v2396
    %v2401 = vand.u32 2147483647, %v2391
    %vm2402 = vcmp.eq.f32.partialorder %v2401, 8.507059e+37
    %v2403 = vand.u32 %v2391, 2147483648
    %v2404 = vor.u32 1.1754944e-38, %v2403
    %v2405 = vsel %vm2402, %v2404, %v2400
    %v2406 = vmul.f32 1.0, %v2405
    %v2407 = vxor.u32 %v2306, 2147483648
    %v2408 = vmul.f32 %v2407, 1.442695
    %v2409 = vpow.pop %v2408
    %v2410 = vadd.f32 %v2409, 1.0
    %v2411 = vrcp.pop %v2410
    %v2412 = vmul.f32 %v2410, %v2411
    %v2413 = vsub.f32 1.0, %v2412
    %v2414 = vmul.f32 %v2411, %v2413
    %v2415 = vadd.f32 %v2411, %v2414
    %vm2416 = vweird.f32 %v2410
    %vm2417 = vweird.f32 %v2411
    %vm2418 = vmor %vm2416, %vm2417
    %v2419 = vsel %vm2418, %v2411, %v2415
    %v2420 = vand.u32 2147483647, %v2410
    %vm2421 = vcmp.eq.f32.partialorder %v2420, 8.507059e+37
    %v2422 = vand.u32 %v2410, 2147483648
    %v2423 = vor.u32 1.1754944e-38, %v2422
    %v2424 = vsel %vm2421, %v2423, %v2419
    %v2425 = vmul.f32 1.0, %v2424
    %v2426 = vmul.f32 %v2406, %v2386
    %v2427 = vadd.f32 %v2346, %v2426
    %v2428 = vtanh.pop %v2427
    %v2429 = vsub.f32 1.0, %v2425
    %v2430 = vmul.f32 %v2429, %v2428
    %v2431 = vmul.f32 %v2425, %v2020
    %v2432 = vadd.f32 %v2430, %v2431
    %s2433 = scalar_lea.vmem [#allocation2], 40
    %v2434 = vld [vmem:[%s2433] sm:$0xff]
    %2435 = vmatpush.msra.mxu0 %v179
    %2436 = vmatpush.msra.mxu0 %v175
    %2437 = vmatpush.msra.mxu0 %v171
    %2438 = vmatpush.msra.mxu0 %v167
    %2439 = vmatpush.msra.mxu0 %v163
    %2440 = vmatpush.msra.mxu0 %v159
    %2441 = vmatpush.msra.mxu0 %v155
    %2442 = vmatpush.msra.mxu0 %v151
    %2443 = vmatpush.msra.mxu0 %v147
    %2444 = vmatpush.msra.mxu0 %v143
    %2445 = vmatpush.msra.mxu0 %v139
    %2446 = vmatpush.msra.mxu0 %v135
    %2447 = vmatpush.msra.mxu0 %v131
    %2448 = vmatpush.msra.mxu0 %v127
    %2449 = vmatpush.msra.mxu0 %v123
    %2450 = vmatpush.msra.mxu0 %v119
    %2451 = vmatmul.f32.gmra.mxu0 %v2434
    %v2452 = vpop.f32.mrf.mxu0
    %v2453 = vadd.f32 %v100, %v2452
    %2454 = vdwg.mxu0
    %2455 = vmatpush.msra.mxu0 %v243
    %2456 = vmatpush.msra.mxu0 %v239
    %2457 = vmatpush.msra.mxu0 %v235
    %2458 = vmatpush.msra.mxu0 %v231
    %2459 = vmatpush.msra.mxu0 %v227
    %2460 = vmatpush.msra.mxu0 %v223
    %2461 = vmatpush.msra.mxu0 %v219
    %2462 = vmatpush.msra.mxu0 %v215
    %2463 = vmatpush.msra.mxu0 %v211
    %2464 = vmatpush.msra.mxu0 %v207
    %2465 = vmatpush.msra.mxu0 %v203
    %2466 = vmatpush.msra.mxu0 %v199
    %2467 = vmatpush.msra.mxu0 %v195
    %2468 = vmatpush.msra.mxu0 %v191
    %2469 = vmatpush.msra.mxu0 %v187
    %2470 = vmatpush.msra.mxu0 %v183
    %2471 = vmatmul.f32.gmra.mxu0 %v2227
    %v2472 = vpop.f32.mrf.mxu0
    %v2473 = vadd.f32 %v2453, %v2472
    %2474 = vdwg.mxu0
    %2475 = vmatpush.msra.mxu0 %v180
    %2476 = vmatpush.msra.mxu0 %v176
    %2477 = vmatpush.msra.mxu0 %v172
    %2478 = vmatpush.msra.mxu0 %v168
    %2479 = vmatpush.msra.mxu0 %v164
    %2480 = vmatpush.msra.mxu0 %v160
    %2481 = vmatpush.msra.mxu0 %v156
    %2482 = vmatpush.msra.mxu0 %v152
    %2483 = vmatpush.msra.mxu0 %v148
    %2484 = vmatpush.msra.mxu0 %v144
    %2485 = vmatpush.msra.mxu0 %v140
    %2486 = vmatpush.msra.mxu0 %v136
    %2487 = vmatpush.msra.mxu0 %v132
    %2488 = vmatpush.msra.mxu0 %v128
    %2489 = vmatpush.msra.mxu0 %v124
    %2490 = vmatpush.msra.mxu0 %v120
    %2491 = vmatmul.f32.gmra.mxu0 %v2434
    %v2492 = vpop.f32.mrf.mxu0
    %v2493 = vadd.f32 %v101, %v2492
    %2494 = vdwg.mxu0
    %2495 = vmatpush.msra.mxu0 %v244
    %2496 = vmatpush.msra.mxu0 %v240
    %2497 = vmatpush.msra.mxu0 %v236
    %2498 = vmatpush.msra.mxu0 %v232
    %2499 = vmatpush.msra.mxu0 %v228
    %2500 = vmatpush.msra.mxu0 %v224
    %2501 = vmatpush.msra.mxu0 %v220
    %2502 = vmatpush.msra.mxu0 %v216
    %2503 = vmatpush.msra.mxu0 %v212
    %2504 = vmatpush.msra.mxu0 %v208
    %2505 = vmatpush.msra.mxu0 %v204
    %2506 = vmatpush.msra.mxu0 %v200
    %2507 = vmatpush.msra.mxu0 %v196
    %2508 = vmatpush.msra.mxu0 %v192
    %2509 = vmatpush.msra.mxu0 %v188
    %2510 = vmatpush.msra.mxu0 %v184
    %2511 = vmatmul.f32.gmra.mxu0 %v2227
    %v2512 = vpop.f32.mrf.mxu0
    %v2513 = vadd.f32 %v2493, %v2512
    %2514 = vdwg.mxu0
    %2515 = vmatpush.msra.mxu0 %v181
    %2516 = vmatpush.msra.mxu0 %v177
    %2517 = vmatpush.msra.mxu0 %v173
    %2518 = vmatpush.msra.mxu0 %v169
    %2519 = vmatpush.msra.mxu0 %v165
    %2520 = vmatpush.msra.mxu0 %v161
    %2521 = vmatpush.msra.mxu0 %v157
    %2522 = vmatpush.msra.mxu0 %v153
    %2523 = vmatpush.msra.mxu0 %v149
    %2524 = vmatpush.msra.mxu0 %v145
    %2525 = vmatpush.msra.mxu0 %v141
    %2526 = vmatpush.msra.mxu0 %v137
    %2527 = vmatpush.msra.mxu0 %v133
    %2528 = vmatpush.msra.mxu0 %v129
    %2529 = vmatpush.msra.mxu0 %v125
    %2530 = vmatpush.msra.mxu0 %v121
    %2531 = vmatmul.f32.gmra.mxu0 %v2434
    %v2532 = vpop.f32.mrf.mxu0
    %v2533 = vadd.f32 %v102, %v2532
    %2534 = vdwg.mxu0
    %2535 = vmatpush.msra.mxu0 %v245
    %2536 = vmatpush.msra.mxu0 %v241
    %2537 = vmatpush.msra.mxu0 %v237
    %2538 = vmatpush.msra.mxu0 %v233
    %2539 = vmatpush.msra.mxu0 %v229
    %2540 = vmatpush.msra.mxu0 %v225
    %2541 = vmatpush.msra.mxu0 %v221
    %2542 = vmatpush.msra.mxu0 %v217
    %2543 = vmatpush.msra.mxu0 %v213
    %2544 = vmatpush.msra.mxu0 %v209
    %2545 = vmatpush.msra.mxu0 %v205
    %2546 = vmatpush.msra.mxu0 %v201
    %2547 = vmatpush.msra.mxu0 %v197
    %2548 = vmatpush.msra.mxu0 %v193
    %2549 = vmatpush.msra.mxu0 %v189
    %2550 = vmatpush.msra.mxu0 %v185
    %2551 = vmatmul.f32.gmra.mxu0 %v2227
    %v2552 = vpop.f32.mrf.mxu0
    %v2553 = vadd.f32 %v2533, %v2552
    %2554 = vdwg.mxu0
    %2555 = vmatpush.msra.mxu0 %v182
    %2556 = vmatpush.msra.mxu0 %v178
    %2557 = vmatpush.msra.mxu0 %v174
    %2558 = vmatpush.msra.mxu0 %v170
    %2559 = vmatpush.msra.mxu0 %v166
    %2560 = vmatpush.msra.mxu0 %v162
    %2561 = vmatpush.msra.mxu0 %v158
    %2562 = vmatpush.msra.mxu0 %v154
    %2563 = vmatpush.msra.mxu0 %v150
    %2564 = vmatpush.msra.mxu0 %v146
    %2565 = vmatpush.msra.mxu0 %v142
    %2566 = vmatpush.msra.mxu0 %v138
    %2567 = vmatpush.msra.mxu0 %v134
    %2568 = vmatpush.msra.mxu0 %v130
    %2569 = vmatpush.msra.mxu0 %v126
    %2570 = vmatpush.msra.mxu0 %v122
    %2571 = vmatmul.f32.gmra.mxu0 %v2434
    %v2572 = vpop.f32.mrf.mxu0
    %v2573 = vadd.f32 %v103, %v2572
    %2574 = vdwg.mxu0
    %2575 = vmatpush.msra.mxu0 %v246
    %2576 = vmatpush.msra.mxu0 %v242
    %2577 = vmatpush.msra.mxu0 %v238
    %2578 = vmatpush.msra.mxu0 %v234
    %2579 = vmatpush.msra.mxu0 %v230
    %2580 = vmatpush.msra.mxu0 %v226
    %2581 = vmatpush.msra.mxu0 %v222
    %2582 = vmatpush.msra.mxu0 %v218
    %2583 = vmatpush.msra.mxu0 %v214
    %2584 = vmatpush.msra.mxu0 %v210
    %2585 = vmatpush.msra.mxu0 %v206
    %2586 = vmatpush.msra.mxu0 %v202
    %2587 = vmatpush.msra.mxu0 %v198
    %2588 = vmatpush.msra.mxu0 %v194
    %2589 = vmatpush.msra.mxu0 %v190
    %2590 = vmatpush.msra.mxu0 %v186
    %2591 = vmatmul.f32.gmra.mxu0 %v2227
    %v2592 = vpop.f32.mrf.mxu0
    %v2593 = vadd.f32 %v2573, %v2592
    %2594 = vdwg.mxu0
    %v2595 = vxor.u32 %v2473, 2147483648
    %v2596 = vmul.f32 %v2595, 1.442695
    %v2597 = vpow.pop %v2596
    %v2598 = vadd.f32 %v2597, 1.0
    %v2599 = vrcp.pop %v2598
    %v2600 = vmul.f32 %v2598, %v2599
    %v2601 = vsub.f32 1.0, %v2600
    %v2602 = vmul.f32 %v2599, %v2601
    %v2603 = vadd.f32 %v2599, %v2602
    %vm2604 = vweird.f32 %v2598
    %vm2605 = vweird.f32 %v2599
    %vm2606 = vmor %vm2604, %vm2605
    %v2607 = vsel %vm2606, %v2599, %v2603
    %v2608 = vand.u32 2147483647, %v2598
    %vm2609 = vcmp.eq.f32.partialorder %v2608, 8.507059e+37
    %v2610 = vand.u32 %v2598, 2147483648
    %v2611 = vor.u32 1.1754944e-38, %v2610
    %v2612 = vsel %vm2609, %v2611, %v2607
    %v2613 = vmul.f32 1.0, %v2612
    %v2614 = vxor.u32 %v2513, 2147483648
    %v2615 = vmul.f32 %v2614, 1.442695
    %v2616 = vpow.pop %v2615
    %v2617 = vadd.f32 %v2616, 1.0
    %v2618 = vrcp.pop %v2617
    %v2619 = vmul.f32 %v2617, %v2618
    %v2620 = vsub.f32 1.0, %v2619
    %v2621 = vmul.f32 %v2618, %v2620
    %v2622 = vadd.f32 %v2618, %v2621
    %vm2623 = vweird.f32 %v2617
    %vm2624 = vweird.f32 %v2618
    %vm2625 = vmor %vm2623, %vm2624
    %v2626 = vsel %vm2625, %v2618, %v2622
    %v2627 = vand.u32 2147483647, %v2617
    %vm2628 = vcmp.eq.f32.partialorder %v2627, 8.507059e+37
    %v2629 = vand.u32 %v2617, 2147483648
    %v2630 = vor.u32 1.1754944e-38, %v2629
    %v2631 = vsel %vm2628, %v2630, %v2626
    %v2632 = vmul.f32 1.0, %v2631
    %v2633 = vmul.f32 %v2613, %v2593
    %v2634 = vadd.f32 %v2553, %v2633
    %v2635 = vtanh.pop %v2634
    %v2636 = vsub.f32 1.0, %v2632
    %v2637 = vmul.f32 %v2636, %v2635
    %v2638 = vmul.f32 %v2632, %v2227
    %v2639 = vadd.f32 %v2637, %v2638
    %2640 = vmatpush.msra.mxu0 %v512
    %2641 = vmatpush.msra.mxu0 %v508
    %2642 = vmatpush.msra.mxu0 %v504
    %2643 = vmatpush.msra.mxu0 %v500
    %2644 = vmatpush.msra.mxu0 %v496
    %2645 = vmatpush.msra.mxu0 %v492
    %2646 = vmatpush.msra.mxu0 %v488
    %2647 = vmatpush.msra.mxu0 %v484
    %2648 = vmatpush.msra.mxu0 %v480
    %2649 = vmatpush.msra.mxu0 %v476
    %2650 = vmatpush.msra.mxu0 %v472
    %2651 = vmatpush.msra.mxu0 %v468
    %2652 = vmatpush.msra.mxu0 %v464
    %2653 = vmatpush.msra.mxu0 %v460
    %2654 = vmatpush.msra.mxu0 %v456
    %2655 = vmatpush.msra.mxu0 %v452
    %2656 = vmatmul.f32.gmra.mxu0 %v2639
    %v2657 = vpop.f32.mrf.mxu0
    %v2658 = vadd.f32 %v110, %v2657
    %2659 = vdwg.mxu0
    %2660 = vmatpush.msra.mxu0 %v576
    %2661 = vmatpush.msra.mxu0 %v572
    %2662 = vmatpush.msra.mxu0 %v568
    %2663 = vmatpush.msra.mxu0 %v564
    %2664 = vmatpush.msra.mxu0 %v560
    %2665 = vmatpush.msra.mxu0 %v556
    %2666 = vmatpush.msra.mxu0 %v552
    %2667 = vmatpush.msra.mxu0 %v548
    %2668 = vmatpush.msra.mxu0 %v544
    %2669 = vmatpush.msra.mxu0 %v540
    %2670 = vmatpush.msra.mxu0 %v536
    %2671 = vmatpush.msra.mxu0 %v532
    %2672 = vmatpush.msra.mxu0 %v528
    %2673 = vmatpush.msra.mxu0 %v524
    %2674 = vmatpush.msra.mxu0 %v520
    %2675 = vmatpush.msra.mxu0 %v516
    %2676 = vmatmul.f32.gmra.mxu0 %v2432
    %v2677 = vpop.f32.mrf.mxu0
    %v2678 = vadd.f32 %v2658, %v2677
    %2679 = vdwg.mxu0
    %2680 = vmatpush.msra.mxu0 %v513
    %2681 = vmatpush.msra.mxu0 %v509
    %2682 = vmatpush.msra.mxu0 %v505
    %2683 = vmatpush.msra.mxu0 %v501
    %2684 = vmatpush.msra.mxu0 %v497
    %2685 = vmatpush.msra.mxu0 %v493
    %2686 = vmatpush.msra.mxu0 %v489
    %2687 = vmatpush.msra.mxu0 %v485
    %2688 = vmatpush.msra.mxu0 %v481
    %2689 = vmatpush.msra.mxu0 %v477
    %2690 = vmatpush.msra.mxu0 %v473
    %2691 = vmatpush.msra.mxu0 %v469
    %2692 = vmatpush.msra.mxu0 %v465
    %2693 = vmatpush.msra.mxu0 %v461
    %2694 = vmatpush.msra.mxu0 %v457
    %2695 = vmatpush.msra.mxu0 %v453
    %2696 = vmatmul.f32.gmra.mxu0 %v2639
    %v2697 = vpop.f32.mrf.mxu0
    %v2698 = vadd.f32 %v111, %v2697
    %2699 = vdwg.mxu0
    %2700 = vmatpush.msra.mxu0 %v577
    %2701 = vmatpush.msra.mxu0 %v573
    %2702 = vmatpush.msra.mxu0 %v569
    %2703 = vmatpush.msra.mxu0 %v565
    %2704 = vmatpush.msra.mxu0 %v561
    %2705 = vmatpush.msra.mxu0 %v557
    %2706 = vmatpush.msra.mxu0 %v553
    %2707 = vmatpush.msra.mxu0 %v549
    %2708 = vmatpush.msra.mxu0 %v545
    %2709 = vmatpush.msra.mxu0 %v541
    %2710 = vmatpush.msra.mxu0 %v537
    %2711 = vmatpush.msra.mxu0 %v533
    %2712 = vmatpush.msra.mxu0 %v529
    %2713 = vmatpush.msra.mxu0 %v525
    %2714 = vmatpush.msra.mxu0 %v521
    %2715 = vmatpush.msra.mxu0 %v517
    %2716 = vmatmul.f32.gmra.mxu0 %v2432
    %v2717 = vpop.f32.mrf.mxu0
    %v2718 = vadd.f32 %v2698, %v2717
    %2719 = vdwg.mxu0
    %2720 = vmatpush.msra.mxu0 %v514
    %2721 = vmatpush.msra.mxu0 %v510
    %2722 = vmatpush.msra.mxu0 %v506
    %2723 = vmatpush.msra.mxu0 %v502
    %2724 = vmatpush.msra.mxu0 %v498
    %2725 = vmatpush.msra.mxu0 %v494
    %2726 = vmatpush.msra.mxu0 %v490
    %2727 = vmatpush.msra.mxu0 %v486
    %2728 = vmatpush.msra.mxu0 %v482
    %2729 = vmatpush.msra.mxu0 %v478
    %2730 = vmatpush.msra.mxu0 %v474
    %2731 = vmatpush.msra.mxu0 %v470
    %2732 = vmatpush.msra.mxu0 %v466
    %2733 = vmatpush.msra.mxu0 %v462
    %2734 = vmatpush.msra.mxu0 %v458
    %2735 = vmatpush.msra.mxu0 %v454
    %2736 = vmatmul.f32.gmra.mxu0 %v2639
    %v2737 = vpop.f32.mrf.mxu0
    %v2738 = vadd.f32 %v112, %v2737
    %2739 = vdwg.mxu0
    %2740 = vmatpush.msra.mxu0 %v578
    %2741 = vmatpush.msra.mxu0 %v574
    %2742 = vmatpush.msra.mxu0 %v570
    %2743 = vmatpush.msra.mxu0 %v566
    %2744 = vmatpush.msra.mxu0 %v562
    %2745 = vmatpush.msra.mxu0 %v558
    %2746 = vmatpush.msra.mxu0 %v554
    %2747 = vmatpush.msra.mxu0 %v550
    %2748 = vmatpush.msra.mxu0 %v546
    %2749 = vmatpush.msra.mxu0 %v542
    %2750 = vmatpush.msra.mxu0 %v538
    %2751 = vmatpush.msra.mxu0 %v534
    %2752 = vmatpush.msra.mxu0 %v530
    %2753 = vmatpush.msra.mxu0 %v526
    %2754 = vmatpush.msra.mxu0 %v522
    %2755 = vmatpush.msra.mxu0 %v518
    %2756 = vmatmul.f32.gmra.mxu0 %v2432
    %v2757 = vpop.f32.mrf.mxu0
    %v2758 = vadd.f32 %v2738, %v2757
    %2759 = vdwg.mxu0
    %2760 = vmatpush.msra.mxu0 %v515
    %2761 = vmatpush.msra.mxu0 %v511
    %2762 = vmatpush.msra.mxu0 %v507
    %2763 = vmatpush.msra.mxu0 %v503
    %2764 = vmatpush.msra.mxu0 %v499
    %2765 = vmatpush.msra.mxu0 %v495
    %2766 = vmatpush.msra.mxu0 %v491
    %2767 = vmatpush.msra.mxu0 %v487
    %2768 = vmatpush.msra.mxu0 %v483
    %2769 = vmatpush.msra.mxu0 %v479
    %2770 = vmatpush.msra.mxu0 %v475
    %2771 = vmatpush.msra.mxu0 %v471
    %2772 = vmatpush.msra.mxu0 %v467
    %2773 = vmatpush.msra.mxu0 %v463
    %2774 = vmatpush.msra.mxu0 %v459
    %2775 = vmatpush.msra.mxu0 %v455
    %2776 = vmatmul.f32.gmra.mxu0 %v2639
    %v2777 = vpop.f32.mrf.mxu0
    %v2778 = vadd.f32 %v113, %v2777
    %2779 = vdwg.mxu0
    %2780 = vmatpush.msra.mxu0 %v579
    %2781 = vmatpush.msra.mxu0 %v575
    %2782 = vmatpush.msra.mxu0 %v571
    %2783 = vmatpush.msra.mxu0 %v567
    %2784 = vmatpush.msra.mxu0 %v563
    %2785 = vmatpush.msra.mxu0 %v559
    %2786 = vmatpush.msra.mxu0 %v555
    %2787 = vmatpush.msra.mxu0 %v551
    %2788 = vmatpush.msra.mxu0 %v547
    %2789 = vmatpush.msra.mxu0 %v543
    %2790 = vmatpush.msra.mxu0 %v539
    %2791 = vmatpush.msra.mxu0 %v535
    %2792 = vmatpush.msra.mxu0 %v531
    %2793 = vmatpush.msra.mxu0 %v527
    %2794 = vmatpush.msra.mxu0 %v523
    %2795 = vmatpush.msra.mxu0 %v519
    %2796 = vmatmul.f32.gmra.mxu0 %v2432
    %v2797 = vpop.f32.mrf.mxu0
    %v2798 = vadd.f32 %v2778, %v2797
    %2799 = vdwg.mxu0
    %v2800 = vxor.u32 %v2678, 2147483648
    %v2801 = vmul.f32 %v2800, 1.442695
    %v2802 = vpow.pop %v2801
    %v2803 = vadd.f32 %v2802, 1.0
    %v2804 = vrcp.pop %v2803
    %v2805 = vmul.f32 %v2803, %v2804
    %v2806 = vsub.f32 1.0, %v2805
    %v2807 = vmul.f32 %v2804, %v2806
    %v2808 = vadd.f32 %v2804, %v2807
    %vm2809 = vweird.f32 %v2803
    %vm2810 = vweird.f32 %v2804
    %vm2811 = vmor %vm2809, %vm2810
    %v2812 = vsel %vm2811, %v2804, %v2808
    %v2813 = vand.u32 2147483647, %v2803
    %vm2814 = vcmp.eq.f32.partialorder %v2813, 8.507059e+37
    %v2815 = vand.u32 %v2803, 2147483648
    %v2816 = vor.u32 1.1754944e-38, %v2815
    %v2817 = vsel %vm2814, %v2816, %v2812
    %v2818 = vmul.f32 1.0, %v2817
    %v2819 = vxor.u32 %v2718, 2147483648
    %v2820 = vmul.f32 %v2819, 1.442695
    %v2821 = vpow.pop %v2820
    %v2822 = vadd.f32 %v2821, 1.0
    %v2823 = vrcp.pop %v2822
    %v2824 = vmul.f32 %v2822, %v2823
    %v2825 = vsub.f32 1.0, %v2824
    %v2826 = vmul.f32 %v2823, %v2825
    %v2827 = vadd.f32 %v2823, %v2826
    %vm2828 = vweird.f32 %v2822
    %vm2829 = vweird.f32 %v2823
    %vm2830 = vmor %vm2828, %vm2829
    %v2831 = vsel %vm2830, %v2823, %v2827
    %v2832 = vand.u32 2147483647, %v2822
    %vm2833 = vcmp.eq.f32.partialorder %v2832, 8.507059e+37
    %v2834 = vand.u32 %v2822, 2147483648
    %v2835 = vor.u32 1.1754944e-38, %v2834
    %v2836 = vsel %vm2833, %v2835, %v2831
    %v2837 = vmul.f32 1.0, %v2836
    %v2838 = vmul.f32 %v2818, %v2798
    %v2839 = vadd.f32 %v2758, %v2838
    %v2840 = vtanh.pop %v2839
    %v2841 = vsub.f32 1.0, %v2837
    %v2842 = vmul.f32 %v2841, %v2840
    %v2843 = vmul.f32 %v2837, %v2432
    %v2844 = vadd.f32 %v2842, %v2843
    %s2845 = scalar_lea.vmem [#allocation2], 48
    %v2846 = vld [vmem:[%s2845] sm:$0xff]
    %2847 = vmatpush.msra.mxu0 %v179
    %2848 = vmatpush.msra.mxu0 %v175
    %2849 = vmatpush.msra.mxu0 %v171
    %2850 = vmatpush.msra.mxu0 %v167
    %2851 = vmatpush.msra.mxu0 %v163
    %2852 = vmatpush.msra.mxu0 %v159
    %2853 = vmatpush.msra.mxu0 %v155
    %2854 = vmatpush.msra.mxu0 %v151
    %2855 = vmatpush.msra.mxu0 %v147
    %2856 = vmatpush.msra.mxu0 %v143
    %2857 = vmatpush.msra.mxu0 %v139
    %2858 = vmatpush.msra.mxu0 %v135
    %2859 = vmatpush.msra.mxu0 %v131
    %2860 = vmatpush.msra.mxu0 %v127
    %2861 = vmatpush.msra.mxu0 %v123
    %2862 = vmatpush.msra.mxu0 %v119
    %2863 = vmatmul.f32.gmra.mxu0 %v2846
    %v2864 = vpop.f32.mrf.mxu0
    %v2865 = vadd.f32 %v100, %v2864
    %2866 = vdwg.mxu0
    %2867 = vmatpush.msra.mxu0 %v243
    %2868 = vmatpush.msra.mxu0 %v239
    %2869 = vmatpush.msra.mxu0 %v235
    %2870 = vmatpush.msra.mxu0 %v231
    %2871 = vmatpush.msra.mxu0 %v227
    %2872 = vmatpush.msra.mxu0 %v223
    %2873 = vmatpush.msra.mxu0 %v219
    %2874 = vmatpush.msra.mxu0 %v215
    %2875 = vmatpush.msra.mxu0 %v211
    %2876 = vmatpush.msra.mxu0 %v207
    %2877 = vmatpush.msra.mxu0 %v203
    %2878 = vmatpush.msra.mxu0 %v199
    %2879 = vmatpush.msra.mxu0 %v195
    %2880 = vmatpush.msra.mxu0 %v191
    %2881 = vmatpush.msra.mxu0 %v187
    %2882 = vmatpush.msra.mxu0 %v183
    %2883 = vmatmul.f32.gmra.mxu0 %v2639
    %v2884 = vpop.f32.mrf.mxu0
    %v2885 = vadd.f32 %v2865, %v2884
    %2886 = vdwg.mxu0
    %2887 = vmatpush.msra.mxu0 %v180
    %2888 = vmatpush.msra.mxu0 %v176
    %2889 = vmatpush.msra.mxu0 %v172
    %2890 = vmatpush.msra.mxu0 %v168
    %2891 = vmatpush.msra.mxu0 %v164
    %2892 = vmatpush.msra.mxu0 %v160
    %2893 = vmatpush.msra.mxu0 %v156
    %2894 = vmatpush.msra.mxu0 %v152
    %2895 = vmatpush.msra.mxu0 %v148
    %2896 = vmatpush.msra.mxu0 %v144
    %2897 = vmatpush.msra.mxu0 %v140
    %2898 = vmatpush.msra.mxu0 %v136
    %2899 = vmatpush.msra.mxu0 %v132
    %2900 = vmatpush.msra.mxu0 %v128
    %2901 = vmatpush.msra.mxu0 %v124
    %2902 = vmatpush.msra.mxu0 %v120
    %2903 = vmatmul.f32.gmra.mxu0 %v2846
    %v2904 = vpop.f32.mrf.mxu0
    %v2905 = vadd.f32 %v101, %v2904
    %2906 = vdwg.mxu0
    %2907 = vmatpush.msra.mxu0 %v244
    %2908 = vmatpush.msra.mxu0 %v240
    %2909 = vmatpush.msra.mxu0 %v236
    %2910 = vmatpush.msra.mxu0 %v232
    %2911 = vmatpush.msra.mxu0 %v228
    %2912 = vmatpush.msra.mxu0 %v224
    %2913 = vmatpush.msra.mxu0 %v220
    %2914 = vmatpush.msra.mxu0 %v216
    %2915 = vmatpush.msra.mxu0 %v212
    %2916 = vmatpush.msra.mxu0 %v208
    %2917 = vmatpush.msra.mxu0 %v204
    %2918 = vmatpush.msra.mxu0 %v200
    %2919 = vmatpush.msra.mxu0 %v196
    %2920 = vmatpush.msra.mxu0 %v192
    %2921 = vmatpush.msra.mxu0 %v188
    %2922 = vmatpush.msra.mxu0 %v184
    %2923 = vmatmul.f32.gmra.mxu0 %v2639
    %v2924 = vpop.f32.mrf.mxu0
    %v2925 = vadd.f32 %v2905, %v2924
    %2926 = vdwg.mxu0
    %2927 = vmatpush.msra.mxu0 %v181
    %2928 = vmatpush.msra.mxu0 %v177
    %2929 = vmatpush.msra.mxu0 %v173
    %2930 = vmatpush.msra.mxu0 %v169
    %2931 = vmatpush.msra.mxu0 %v165
    %2932 = vmatpush.msra.mxu0 %v161
    %2933 = vmatpush.msra.mxu0 %v157
    %2934 = vmatpush.msra.mxu0 %v153
    %2935 = vmatpush.msra.mxu0 %v149
    %2936 = vmatpush.msra.mxu0 %v145
    %2937 = vmatpush.msra.mxu0 %v141
    %2938 = vmatpush.msra.mxu0 %v137
    %2939 = vmatpush.msra.mxu0 %v133
    %2940 = vmatpush.msra.mxu0 %v129
    %2941 = vmatpush.msra.mxu0 %v125
    %2942 = vmatpush.msra.mxu0 %v121
    %2943 = vmatmul.f32.gmra.mxu0 %v2846
    %v2944 = vpop.f32.mrf.mxu0
    %v2945 = vadd.f32 %v102, %v2944
    %2946 = vdwg.mxu0
    %2947 = vmatpush.msra.mxu0 %v245
    %2948 = vmatpush.msra.mxu0 %v241
    %2949 = vmatpush.msra.mxu0 %v237
    %2950 = vmatpush.msra.mxu0 %v233
    %2951 = vmatpush.msra.mxu0 %v229
    %2952 = vmatpush.msra.mxu0 %v225
    %2953 = vmatpush.msra.mxu0 %v221
    %2954 = vmatpush.msra.mxu0 %v217
    %2955 = vmatpush.msra.mxu0 %v213
    %2956 = vmatpush.msra.mxu0 %v209
    %2957 = vmatpush.msra.mxu0 %v205
    %2958 = vmatpush.msra.mxu0 %v201
    %2959 = vmatpush.msra.mxu0 %v197
    %2960 = vmatpush.msra.mxu0 %v193
    %2961 = vmatpush.msra.mxu0 %v189
    %2962 = vmatpush.msra.mxu0 %v185
    %2963 = vmatmul.f32.gmra.mxu0 %v2639
    %v2964 = vpop.f32.mrf.mxu0
    %v2965 = vadd.f32 %v2945, %v2964
    %2966 = vdwg.mxu0
    %2967 = vmatpush.msra.mxu0 %v182
    %2968 = vmatpush.msra.mxu0 %v178
    %2969 = vmatpush.msra.mxu0 %v174
    %2970 = vmatpush.msra.mxu0 %v170
    %2971 = vmatpush.msra.mxu0 %v166
    %2972 = vmatpush.msra.mxu0 %v162
    %2973 = vmatpush.msra.mxu0 %v158
    %2974 = vmatpush.msra.mxu0 %v154
    %2975 = vmatpush.msra.mxu0 %v150
    %2976 = vmatpush.msra.mxu0 %v146
    %2977 = vmatpush.msra.mxu0 %v142
    %2978 = vmatpush.msra.mxu0 %v138
    %2979 = vmatpush.msra.mxu0 %v134
    %2980 = vmatpush.msra.mxu0 %v130
    %2981 = vmatpush.msra.mxu0 %v126
    %2982 = vmatpush.msra.mxu0 %v122
    %2983 = vmatmul.f32.gmra.mxu0 %v2846
    %v2984 = vpop.f32.mrf.mxu0
    %v2985 = vadd.f32 %v103, %v2984
    %2986 = vdwg.mxu0
    %2987 = vmatpush.msra.mxu0 %v246
    %2988 = vmatpush.msra.mxu0 %v242
    %2989 = vmatpush.msra.mxu0 %v238
    %2990 = vmatpush.msra.mxu0 %v234
    %2991 = vmatpush.msra.mxu0 %v230
    %2992 = vmatpush.msra.mxu0 %v226
    %2993 = vmatpush.msra.mxu0 %v222
    %2994 = vmatpush.msra.mxu0 %v218
    %2995 = vmatpush.msra.mxu0 %v214
    %2996 = vmatpush.msra.mxu0 %v210
    %2997 = vmatpush.msra.mxu0 %v206
    %2998 = vmatpush.msra.mxu0 %v202
    %2999 = vmatpush.msra.mxu0 %v198
    %3000 = vmatpush.msra.mxu0 %v194
    %3001 = vmatpush.msra.mxu0 %v190
    %3002 = vmatpush.msra.mxu0 %v186
    %3003 = vmatmul.f32.gmra.mxu0 %v2639
    %v3004 = vpop.f32.mrf.mxu0
    %v3005 = vadd.f32 %v2985, %v3004
    %3006 = vdwg.mxu0
    %v3007 = vxor.u32 %v2885, 2147483648
    %v3008 = vmul.f32 %v3007, 1.442695
    %v3009 = vpow.pop %v3008
    %v3010 = vadd.f32 %v3009, 1.0
    %v3011 = vrcp.pop %v3010
    %v3012 = vmul.f32 %v3010, %v3011
    %v3013 = vsub.f32 1.0, %v3012
    %v3014 = vmul.f32 %v3011, %v3013
    %v3015 = vadd.f32 %v3011, %v3014
    %vm3016 = vweird.f32 %v3010
    %vm3017 = vweird.f32 %v3011
    %vm3018 = vmor %vm3016, %vm3017
    %v3019 = vsel %vm3018, %v3011, %v3015
    %v3020 = vand.u32 2147483647, %v3010
    %vm3021 = vcmp.eq.f32.partialorder %v3020, 8.507059e+37
    %v3022 = vand.u32 %v3010, 2147483648
    %v3023 = vor.u32 1.1754944e-38, %v3022
    %v3024 = vsel %vm3021, %v3023, %v3019
    %v3025 = vmul.f32 1.0, %v3024
    %v3026 = vxor.u32 %v2925, 2147483648
    %v3027 = vmul.f32 %v3026, 1.442695
    %v3028 = vpow.pop %v3027
    %v3029 = vadd.f32 %v3028, 1.0
    %v3030 = vrcp.pop %v3029
    %v3031 = vmul.f32 %v3029, %v3030
    %v3032 = vsub.f32 1.0, %v3031
    %v3033 = vmul.f32 %v3030, %v3032
    %v3034 = vadd.f32 %v3030, %v3033
    %vm3035 = vweird.f32 %v3029
    %vm3036 = vweird.f32 %v3030
    %vm3037 = vmor %vm3035, %vm3036
    %v3038 = vsel %vm3037, %v3030, %v3034
    %v3039 = vand.u32 2147483647, %v3029
    %vm3040 = vcmp.eq.f32.partialorder %v3039, 8.507059e+37
    %v3041 = vand.u32 %v3029, 2147483648
    %v3042 = vor.u32 1.1754944e-38, %v3041
    %v3043 = vsel %vm3040, %v3042, %v3038
    %v3044 = vmul.f32 1.0, %v3043
    %v3045 = vmul.f32 %v3025, %v3005
    %v3046 = vadd.f32 %v2965, %v3045
    %v3047 = vtanh.pop %v3046
    %v3048 = vsub.f32 1.0, %v3044
    %v3049 = vmul.f32 %v3048, %v3047
    %v3050 = vmul.f32 %v3044, %v2639
    %v3051 = vadd.f32 %v3049, %v3050
    %3052 = vmatpush.msra.mxu0 %v512
    %3053 = vmatpush.msra.mxu0 %v508
    %3054 = vmatpush.msra.mxu0 %v504
    %3055 = vmatpush.msra.mxu0 %v500
    %3056 = vmatpush.msra.mxu0 %v496
    %3057 = vmatpush.msra.mxu0 %v492
    %3058 = vmatpush.msra.mxu0 %v488
    %3059 = vmatpush.msra.mxu0 %v484
    %3060 = vmatpush.msra.mxu0 %v480
    %3061 = vmatpush.msra.mxu0 %v476
    %3062 = vmatpush.msra.mxu0 %v472
    %3063 = vmatpush.msra.mxu0 %v468
    %3064 = vmatpush.msra.mxu0 %v464
    %3065 = vmatpush.msra.mxu0 %v460
    %3066 = vmatpush.msra.mxu0 %v456
    %3067 = vmatpush.msra.mxu0 %v452
    %3068 = vmatmul.f32.gmra.mxu0 %v3051
    %v3069 = vpop.f32.mrf.mxu0
    %v3070 = vadd.f32 %v110, %v3069
    %3071 = vdwg.mxu0
    %3072 = vmatpush.msra.mxu0 %v576
    %3073 = vmatpush.msra.mxu0 %v572
    %3074 = vmatpush.msra.mxu0 %v568
    %3075 = vmatpush.msra.mxu0 %v564
    %3076 = vmatpush.msra.mxu0 %v560
    %3077 = vmatpush.msra.mxu0 %v556
    %3078 = vmatpush.msra.mxu0 %v552
    %3079 = vmatpush.msra.mxu0 %v548
    %3080 = vmatpush.msra.mxu0 %v544
    %3081 = vmatpush.msra.mxu0 %v540
    %3082 = vmatpush.msra.mxu0 %v536
    %3083 = vmatpush.msra.mxu0 %v532
    %3084 = vmatpush.msra.mxu0 %v528
    %3085 = vmatpush.msra.mxu0 %v524
    %3086 = vmatpush.msra.mxu0 %v520
    %3087 = vmatpush.msra.mxu0 %v516
    %3088 = vmatmul.f32.gmra.mxu0 %v2844
    %v3089 = vpop.f32.mrf.mxu0
    %v3090 = vadd.f32 %v3070, %v3089
    %3091 = vdwg.mxu0
    %3092 = vmatpush.msra.mxu0 %v513
    %3093 = vmatpush.msra.mxu0 %v509
    %3094 = vmatpush.msra.mxu0 %v505
    %3095 = vmatpush.msra.mxu0 %v501
    %3096 = vmatpush.msra.mxu0 %v497
    %3097 = vmatpush.msra.mxu0 %v493
    %3098 = vmatpush.msra.mxu0 %v489
    %3099 = vmatpush.msra.mxu0 %v485
    %3100 = vmatpush.msra.mxu0 %v481
    %3101 = vmatpush.msra.mxu0 %v477
    %3102 = vmatpush.msra.mxu0 %v473
    %3103 = vmatpush.msra.mxu0 %v469
    %3104 = vmatpush.msra.mxu0 %v465
    %3105 = vmatpush.msra.mxu0 %v461
    %3106 = vmatpush.msra.mxu0 %v457
    %3107 = vmatpush.msra.mxu0 %v453
    %3108 = vmatmul.f32.gmra.mxu0 %v3051
    %v3109 = vpop.f32.mrf.mxu0
    %v3110 = vadd.f32 %v111, %v3109
    %3111 = vdwg.mxu0
    %3112 = vmatpush.msra.mxu0 %v577
    %3113 = vmatpush.msra.mxu0 %v573
    %3114 = vmatpush.msra.mxu0 %v569
    %3115 = vmatpush.msra.mxu0 %v565
    %3116 = vmatpush.msra.mxu0 %v561
    %3117 = vmatpush.msra.mxu0 %v557
    %3118 = vmatpush.msra.mxu0 %v553
    %3119 = vmatpush.msra.mxu0 %v549
    %3120 = vmatpush.msra.mxu0 %v545
    %3121 = vmatpush.msra.mxu0 %v541
    %3122 = vmatpush.msra.mxu0 %v537
    %3123 = vmatpush.msra.mxu0 %v533
    %3124 = vmatpush.msra.mxu0 %v529
    %3125 = vmatpush.msra.mxu0 %v525
    %3126 = vmatpush.msra.mxu0 %v521
    %3127 = vmatpush.msra.mxu0 %v517
    %3128 = vmatmul.f32.gmra.mxu0 %v2844
    %v3129 = vpop.f32.mrf.mxu0
    %v3130 = vadd.f32 %v3110, %v3129
    %3131 = vdwg.mxu0
    %3132 = vmatpush.msra.mxu0 %v514
    %3133 = vmatpush.msra.mxu0 %v510
    %3134 = vmatpush.msra.mxu0 %v506
    %3135 = vmatpush.msra.mxu0 %v502
    %3136 = vmatpush.msra.mxu0 %v498
    %3137 = vmatpush.msra.mxu0 %v494
    %3138 = vmatpush.msra.mxu0 %v490
    %3139 = vmatpush.msra.mxu0 %v486
    %3140 = vmatpush.msra.mxu0 %v482
    %3141 = vmatpush.msra.mxu0 %v478
    %3142 = vmatpush.msra.mxu0 %v474
    %3143 = vmatpush.msra.mxu0 %v470
    %3144 = vmatpush.msra.mxu0 %v466
    %3145 = vmatpush.msra.mxu0 %v462
    %3146 = vmatpush.msra.mxu0 %v458
    %3147 = vmatpush.msra.mxu0 %v454
    %3148 = vmatmul.f32.gmra.mxu0 %v3051
    %v3149 = vpop.f32.mrf.mxu0
    %v3150 = vadd.f32 %v112, %v3149
    %3151 = vdwg.mxu0
    %3152 = vmatpush.msra.mxu0 %v578
    %3153 = vmatpush.msra.mxu0 %v574
    %3154 = vmatpush.msra.mxu0 %v570
    %3155 = vmatpush.msra.mxu0 %v566
    %3156 = vmatpush.msra.mxu0 %v562
    %3157 = vmatpush.msra.mxu0 %v558
    %3158 = vmatpush.msra.mxu0 %v554
    %3159 = vmatpush.msra.mxu0 %v550
    %3160 = vmatpush.msra.mxu0 %v546
    %3161 = vmatpush.msra.mxu0 %v542
    %3162 = vmatpush.msra.mxu0 %v538
    %3163 = vmatpush.msra.mxu0 %v534
    %3164 = vmatpush.msra.mxu0 %v530
    %3165 = vmatpush.msra.mxu0 %v526
    %3166 = vmatpush.msra.mxu0 %v522
    %3167 = vmatpush.msra.mxu0 %v518
    %3168 = vmatmul.f32.gmra.mxu0 %v2844
    %v3169 = vpop.f32.mrf.mxu0
    %v3170 = vadd.f32 %v3150, %v3169
    %3171 = vdwg.mxu0
    %3172 = vmatpush.msra.mxu0 %v515
    %3173 = vmatpush.msra.mxu0 %v511
    %3174 = vmatpush.msra.mxu0 %v507
    %3175 = vmatpush.msra.mxu0 %v503
    %3176 = vmatpush.msra.mxu0 %v499
    %3177 = vmatpush.msra.mxu0 %v495
    %3178 = vmatpush.msra.mxu0 %v491
    %3179 = vmatpush.msra.mxu0 %v487
    %3180 = vmatpush.msra.mxu0 %v483
    %3181 = vmatpush.msra.mxu0 %v479
    %3182 = vmatpush.msra.mxu0 %v475
    %3183 = vmatpush.msra.mxu0 %v471
    %3184 = vmatpush.msra.mxu0 %v467
    %3185 = vmatpush.msra.mxu0 %v463
    %3186 = vmatpush.msra.mxu0 %v459
    %3187 = vmatpush.msra.mxu0 %v455
    %3188 = vmatmul.f32.gmra.mxu0 %v3051
    %v3189 = vpop.f32.mrf.mxu0
    %v3190 = vadd.f32 %v113, %v3189
    %3191 = vdwg.mxu0
    %3192 = vmatpush.msra.mxu0 %v579
    %3193 = vmatpush.msra.mxu0 %v575
    %3194 = vmatpush.msra.mxu0 %v571
    %3195 = vmatpush.msra.mxu0 %v567
    %3196 = vmatpush.msra.mxu0 %v563
    %3197 = vmatpush.msra.mxu0 %v559
    %3198 = vmatpush.msra.mxu0 %v555
    %3199 = vmatpush.msra.mxu0 %v551
    %3200 = vmatpush.msra.mxu0 %v547
    %3201 = vmatpush.msra.mxu0 %v543
    %3202 = vmatpush.msra.mxu0 %v539
    %3203 = vmatpush.msra.mxu0 %v535
    %3204 = vmatpush.msra.mxu0 %v531
    %3205 = vmatpush.msra.mxu0 %v527
    %3206 = vmatpush.msra.mxu0 %v523
    %3207 = vmatpush.msra.mxu0 %v519
    %3208 = vmatmul.f32.gmra.mxu0 %v2844
    %v3209 = vpop.f32.mrf.mxu0
    %v3210 = vadd.f32 %v3190, %v3209
    %3211 = vdwg.mxu0
    %v3212 = vxor.u32 %v3090, 2147483648
    %v3213 = vmul.f32 %v3212, 1.442695
    %v3214 = vpow.pop %v3213
    %v3215 = vadd.f32 %v3214, 1.0
    %v3216 = vrcp.pop %v3215
    %v3217 = vmul.f32 %v3215, %v3216
    %v3218 = vsub.f32 1.0, %v3217
    %v3219 = vmul.f32 %v3216, %v3218
    %v3220 = vadd.f32 %v3216, %v3219
    %vm3221 = vweird.f32 %v3215
    %vm3222 = vweird.f32 %v3216
    %vm3223 = vmor %vm3221, %vm3222
    %v3224 = vsel %vm3223, %v3216, %v3220
    %v3225 = vand.u32 2147483647, %v3215
    %vm3226 = vcmp.eq.f32.partialorder %v3225, 8.507059e+37
    %v3227 = vand.u32 %v3215, 2147483648
    %v3228 = vor.u32 1.1754944e-38, %v3227
    %v3229 = vsel %vm3226, %v3228, %v3224
    %v3230 = vmul.f32 1.0, %v3229
    %v3231 = vxor.u32 %v3130, 2147483648
    %v3232 = vmul.f32 %v3231, 1.442695
    %v3233 = vpow.pop %v3232
    %v3234 = vadd.f32 %v3233, 1.0
    %v3235 = vrcp.pop %v3234
    %v3236 = vmul.f32 %v3234, %v3235
    %v3237 = vsub.f32 1.0, %v3236
    %v3238 = vmul.f32 %v3235, %v3237
    %v3239 = vadd.f32 %v3235, %v3238
    %vm3240 = vweird.f32 %v3234
    %vm3241 = vweird.f32 %v3235
    %vm3242 = vmor %vm3240, %vm3241
    %v3243 = vsel %vm3242, %v3235, %v3239
    %v3244 = vand.u32 2147483647, %v3234
    %vm3245 = vcmp.eq.f32.partialorder %v3244, 8.507059e+37
    %v3246 = vand.u32 %v3234, 2147483648
    %v3247 = vor.u32 1.1754944e-38, %v3246
    %v3248 = vsel %vm3245, %v3247, %v3243
    %v3249 = vmul.f32 1.0, %v3248
    %v3250 = vmul.f32 %v3230, %v3210
    %v3251 = vadd.f32 %v3170, %v3250
    %v3252 = vtanh.pop %v3251
    %v3253 = vsub.f32 1.0, %v3249
    %v3254 = vmul.f32 %v3253, %v3252
    %v3255 = vmul.f32 %v3249, %v2844
    %v3256 = vadd.f32 %v3254, %v3255
    %s3257 = scalar_lea.vmem [#allocation2], 56
    %v3258 = vld [vmem:[%s3257] sm:$0xff]
    %3259 = vmatpush.msra.mxu0 %v179
    %3260 = vmatpush.msra.mxu0 %v175
    %3261 = vmatpush.msra.mxu0 %v171
    %3262 = vmatpush.msra.mxu0 %v167
    %3263 = vmatpush.msra.mxu0 %v163
    %3264 = vmatpush.msra.mxu0 %v159
    %3265 = vmatpush.msra.mxu0 %v155
    %3266 = vmatpush.msra.mxu0 %v151
    %3267 = vmatpush.msra.mxu0 %v147
    %3268 = vmatpush.msra.mxu0 %v143
    %3269 = vmatpush.msra.mxu0 %v139
    %3270 = vmatpush.msra.mxu0 %v135
    %3271 = vmatpush.msra.mxu0 %v131
    %3272 = vmatpush.msra.mxu0 %v127
    %3273 = vmatpush.msra.mxu0 %v123
    %3274 = vmatpush.msra.mxu0 %v119
    %3275 = vmatmul.f32.gmra.mxu0 %v3258
    %v3276 = vpop.f32.mrf.mxu0
    %v3277 = vadd.f32 %v100, %v3276
    %3278 = vdwg.mxu0
    %3279 = vmatpush.msra.mxu0 %v243
    %3280 = vmatpush.msra.mxu0 %v239
    %3281 = vmatpush.msra.mxu0 %v235
    %3282 = vmatpush.msra.mxu0 %v231
    %3283 = vmatpush.msra.mxu0 %v227
    %3284 = vmatpush.msra.mxu0 %v223
    %3285 = vmatpush.msra.mxu0 %v219
    %3286 = vmatpush.msra.mxu0 %v215
    %3287 = vmatpush.msra.mxu0 %v211
    %3288 = vmatpush.msra.mxu0 %v207
    %3289 = vmatpush.msra.mxu0 %v203
    %3290 = vmatpush.msra.mxu0 %v199
    %3291 = vmatpush.msra.mxu0 %v195
    %3292 = vmatpush.msra.mxu0 %v191
    %3293 = vmatpush.msra.mxu0 %v187
    %3294 = vmatpush.msra.mxu0 %v183
    %3295 = vmatmul.f32.gmra.mxu0 %v3051
    %v3296 = vpop.f32.mrf.mxu0
    %v3297 = vadd.f32 %v3277, %v3296
    %3298 = vdwg.mxu0
    %3299 = vmatpush.msra.mxu0 %v180
    %3300 = vmatpush.msra.mxu0 %v176
    %3301 = vmatpush.msra.mxu0 %v172
    %3302 = vmatpush.msra.mxu0 %v168
    %3303 = vmatpush.msra.mxu0 %v164
    %3304 = vmatpush.msra.mxu0 %v160
    %3305 = vmatpush.msra.mxu0 %v156
    %3306 = vmatpush.msra.mxu0 %v152
    %3307 = vmatpush.msra.mxu0 %v148
    %3308 = vmatpush.msra.mxu0 %v144
    %3309 = vmatpush.msra.mxu0 %v140
    %3310 = vmatpush.msra.mxu0 %v136
    %3311 = vmatpush.msra.mxu0 %v132
    %3312 = vmatpush.msra.mxu0 %v128
    %3313 = vmatpush.msra.mxu0 %v124
    %3314 = vmatpush.msra.mxu0 %v120
    %3315 = vmatmul.f32.gmra.mxu0 %v3258
    %v3316 = vpop.f32.mrf.mxu0
    %v3317 = vadd.f32 %v101, %v3316
    %3318 = vdwg.mxu0
    %3319 = vmatpush.msra.mxu0 %v244
    %3320 = vmatpush.msra.mxu0 %v240
    %3321 = vmatpush.msra.mxu0 %v236
    %3322 = vmatpush.msra.mxu0 %v232
    %3323 = vmatpush.msra.mxu0 %v228
    %3324 = vmatpush.msra.mxu0 %v224
    %3325 = vmatpush.msra.mxu0 %v220
    %3326 = vmatpush.msra.mxu0 %v216
    %3327 = vmatpush.msra.mxu0 %v212
    %3328 = vmatpush.msra.mxu0 %v208
    %3329 = vmatpush.msra.mxu0 %v204
    %3330 = vmatpush.msra.mxu0 %v200
    %3331 = vmatpush.msra.mxu0 %v196
    %3332 = vmatpush.msra.mxu0 %v192
    %3333 = vmatpush.msra.mxu0 %v188
    %3334 = vmatpush.msra.mxu0 %v184
    %3335 = vmatmul.f32.gmra.mxu0 %v3051
    %v3336 = vpop.f32.mrf.mxu0
    %v3337 = vadd.f32 %v3317, %v3336
    %3338 = vdwg.mxu0
    %3339 = vmatpush.msra.mxu0 %v181
    %3340 = vmatpush.msra.mxu0 %v177
    %3341 = vmatpush.msra.mxu0 %v173
    %3342 = vmatpush.msra.mxu0 %v169
    %3343 = vmatpush.msra.mxu0 %v165
    %3344 = vmatpush.msra.mxu0 %v161
    %3345 = vmatpush.msra.mxu0 %v157
    %3346 = vmatpush.msra.mxu0 %v153
    %3347 = vmatpush.msra.mxu0 %v149
    %3348 = vmatpush.msra.mxu0 %v145
    %3349 = vmatpush.msra.mxu0 %v141
    %3350 = vmatpush.msra.mxu0 %v137
    %3351 = vmatpush.msra.mxu0 %v133
    %3352 = vmatpush.msra.mxu0 %v129
    %3353 = vmatpush.msra.mxu0 %v125
    %3354 = vmatpush.msra.mxu0 %v121
    %3355 = vmatmul.f32.gmra.mxu0 %v3258
    %v3356 = vpop.f32.mrf.mxu0
    %v3357 = vadd.f32 %v102, %v3356
    %3358 = vdwg.mxu0
    %3359 = vmatpush.msra.mxu0 %v245
    %3360 = vmatpush.msra.mxu0 %v241
    %3361 = vmatpush.msra.mxu0 %v237
    %3362 = vmatpush.msra.mxu0 %v233
    %3363 = vmatpush.msra.mxu0 %v229
    %3364 = vmatpush.msra.mxu0 %v225
    %3365 = vmatpush.msra.mxu0 %v221
    %3366 = vmatpush.msra.mxu0 %v217
    %3367 = vmatpush.msra.mxu0 %v213
    %3368 = vmatpush.msra.mxu0 %v209
    %3369 = vmatpush.msra.mxu0 %v205
    %3370 = vmatpush.msra.mxu0 %v201
    %3371 = vmatpush.msra.mxu0 %v197
    %3372 = vmatpush.msra.mxu0 %v193
    %3373 = vmatpush.msra.mxu0 %v189
    %3374 = vmatpush.msra.mxu0 %v185
    %3375 = vmatmul.f32.gmra.mxu0 %v3051
    %v3376 = vpop.f32.mrf.mxu0
    %v3377 = vadd.f32 %v3357, %v3376
    %3378 = vdwg.mxu0
    %3379 = vmatpush.msra.mxu0 %v182
    %3380 = vmatpush.msra.mxu0 %v178
    %3381 = vmatpush.msra.mxu0 %v174
    %3382 = vmatpush.msra.mxu0 %v170
    %3383 = vmatpush.msra.mxu0 %v166
    %3384 = vmatpush.msra.mxu0 %v162
    %3385 = vmatpush.msra.mxu0 %v158
    %3386 = vmatpush.msra.mxu0 %v154
    %3387 = vmatpush.msra.mxu0 %v150
    %3388 = vmatpush.msra.mxu0 %v146
    %3389 = vmatpush.msra.mxu0 %v142
    %3390 = vmatpush.msra.mxu0 %v138
    %3391 = vmatpush.msra.mxu0 %v134
    %3392 = vmatpush.msra.mxu0 %v130
    %3393 = vmatpush.msra.mxu0 %v126
    %3394 = vmatpush.msra.mxu0 %v122
    %3395 = vmatmul.f32.gmra.mxu0 %v3258
    %v3396 = vpop.f32.mrf.mxu0
    %v3397 = vadd.f32 %v103, %v3396
    %3398 = vdwg.mxu0
    %3399 = vmatpush.msra.mxu0 %v246
    %3400 = vmatpush.msra.mxu0 %v242
    %3401 = vmatpush.msra.mxu0 %v238
    %3402 = vmatpush.msra.mxu0 %v234
    %3403 = vmatpush.msra.mxu0 %v230
    %3404 = vmatpush.msra.mxu0 %v226
    %3405 = vmatpush.msra.mxu0 %v222
    %3406 = vmatpush.msra.mxu0 %v218
    %3407 = vmatpush.msra.mxu0 %v214
    %3408 = vmatpush.msra.mxu0 %v210
    %3409 = vmatpush.msra.mxu0 %v206
    %3410 = vmatpush.msra.mxu0 %v202
    %3411 = vmatpush.msra.mxu0 %v198
    %3412 = vmatpush.msra.mxu0 %v194
    %3413 = vmatpush.msra.mxu0 %v190
    %3414 = vmatpush.msra.mxu0 %v186
    %3415 = vmatmul.f32.gmra.mxu0 %v3051
    %v3416 = vpop.f32.mrf.mxu0
    %v3417 = vadd.f32 %v3397, %v3416
    %3418 = vdwg.mxu0
    %v3419 = vxor.u32 %v3297, 2147483648
    %v3420 = vmul.f32 %v3419, 1.442695
    %v3421 = vpow.pop %v3420
    %v3422 = vadd.f32 %v3421, 1.0
    %v3423 = vrcp.pop %v3422
    %v3424 = vmul.f32 %v3422, %v3423
    %v3425 = vsub.f32 1.0, %v3424
    %v3426 = vmul.f32 %v3423, %v3425
    %v3427 = vadd.f32 %v3423, %v3426
    %vm3428 = vweird.f32 %v3422
    %vm3429 = vweird.f32 %v3423
    %vm3430 = vmor %vm3428, %vm3429
    %v3431 = vsel %vm3430, %v3423, %v3427
    %v3432 = vand.u32 2147483647, %v3422
    %vm3433 = vcmp.eq.f32.partialorder %v3432, 8.507059e+37
    %v3434 = vand.u32 %v3422, 2147483648
    %v3435 = vor.u32 1.1754944e-38, %v3434
    %v3436 = vsel %vm3433, %v3435, %v3431
    %v3437 = vmul.f32 1.0, %v3436
    %v3438 = vxor.u32 %v3337, 2147483648
    %v3439 = vmul.f32 %v3438, 1.442695
    %v3440 = vpow.pop %v3439
    %v3441 = vadd.f32 %v3440, 1.0
    %v3442 = vrcp.pop %v3441
    %v3443 = vmul.f32 %v3441, %v3442
    %v3444 = vsub.f32 1.0, %v3443
    %v3445 = vmul.f32 %v3442, %v3444
    %v3446 = vadd.f32 %v3442, %v3445
    %vm3447 = vweird.f32 %v3441
    %vm3448 = vweird.f32 %v3442
    %vm3449 = vmor %vm3447, %vm3448
    %v3450 = vsel %vm3449, %v3442, %v3446
    %v3451 = vand.u32 2147483647, %v3441
    %vm3452 = vcmp.eq.f32.partialorder %v3451, 8.507059e+37
    %v3453 = vand.u32 %v3441, 2147483648
    %v3454 = vor.u32 1.1754944e-38, %v3453
    %v3455 = vsel %vm3452, %v3454, %v3450
    %v3456 = vmul.f32 1.0, %v3455
    %v3457 = vmul.f32 %v3437, %v3417
    %v3458 = vadd.f32 %v3377, %v3457
    %v3459 = vtanh.pop %v3458
    %v3460 = vsub.f32 1.0, %v3456
    %v3461 = vmul.f32 %v3460, %v3459
    %v3462 = vmul.f32 %v3456, %v3051
    %v3463 = vadd.f32 %v3461, %v3462
    %3464 = vmatpush.msra.mxu0 %v512
    %3465 = vmatpush.msra.mxu0 %v508
    %3466 = vmatpush.msra.mxu0 %v504
    %3467 = vmatpush.msra.mxu0 %v500
    %3468 = vmatpush.msra.mxu0 %v496
    %3469 = vmatpush.msra.mxu0 %v492
    %3470 = vmatpush.msra.mxu0 %v488
    %3471 = vmatpush.msra.mxu0 %v484
    %3472 = vmatpush.msra.mxu0 %v480
    %3473 = vmatpush.msra.mxu0 %v476
    %3474 = vmatpush.msra.mxu0 %v472
    %3475 = vmatpush.msra.mxu0 %v468
    %3476 = vmatpush.msra.mxu0 %v464
    %3477 = vmatpush.msra.mxu0 %v460
    %3478 = vmatpush.msra.mxu0 %v456
    %3479 = vmatpush.msra.mxu0 %v452
    %3480 = vmatmul.f32.gmra.mxu0 %v3463
    %v3481 = vpop.f32.mrf.mxu0
    %v3482 = vadd.f32 %v110, %v3481
    %3483 = vdwg.mxu0
    %3484 = vmatpush.msra.mxu0 %v576
    %3485 = vmatpush.msra.mxu0 %v572
    %3486 = vmatpush.msra.mxu0 %v568
    %3487 = vmatpush.msra.mxu0 %v564
    %3488 = vmatpush.msra.mxu0 %v560
    %3489 = vmatpush.msra.mxu0 %v556
    %3490 = vmatpush.msra.mxu0 %v552
    %3491 = vmatpush.msra.mxu0 %v548
    %3492 = vmatpush.msra.mxu0 %v544
    %3493 = vmatpush.msra.mxu0 %v540
    %3494 = vmatpush.msra.mxu0 %v536
    %3495 = vmatpush.msra.mxu0 %v532
    %3496 = vmatpush.msra.mxu0 %v528
    %3497 = vmatpush.msra.mxu0 %v524
    %3498 = vmatpush.msra.mxu0 %v520
    %3499 = vmatpush.msra.mxu0 %v516
    %3500 = vmatmul.f32.gmra.mxu0 %v3256
    %v3501 = vpop.f32.mrf.mxu0
    %v3502 = vadd.f32 %v3482, %v3501
    %3503 = vdwg.mxu0
    %3504 = vmatpush.msra.mxu0 %v513
    %3505 = vmatpush.msra.mxu0 %v509
    %3506 = vmatpush.msra.mxu0 %v505
    %3507 = vmatpush.msra.mxu0 %v501
    %3508 = vmatpush.msra.mxu0 %v497
    %3509 = vmatpush.msra.mxu0 %v493
    %3510 = vmatpush.msra.mxu0 %v489
    %3511 = vmatpush.msra.mxu0 %v485
    %3512 = vmatpush.msra.mxu0 %v481
    %3513 = vmatpush.msra.mxu0 %v477
    %3514 = vmatpush.msra.mxu0 %v473
    %3515 = vmatpush.msra.mxu0 %v469
    %3516 = vmatpush.msra.mxu0 %v465
    %3517 = vmatpush.msra.mxu0 %v461
    %3518 = vmatpush.msra.mxu0 %v457
    %3519 = vmatpush.msra.mxu0 %v453
    %3520 = vmatmul.f32.gmra.mxu0 %v3463
    %v3521 = vpop.f32.mrf.mxu0
    %v3522 = vadd.f32 %v111, %v3521
    %3523 = vdwg.mxu0
    %3524 = vmatpush.msra.mxu0 %v577
    %3525 = vmatpush.msra.mxu0 %v573
    %3526 = vmatpush.msra.mxu0 %v569
    %3527 = vmatpush.msra.mxu0 %v565
    %3528 = vmatpush.msra.mxu0 %v561
    %3529 = vmatpush.msra.mxu0 %v557
    %3530 = vmatpush.msra.mxu0 %v553
    %3531 = vmatpush.msra.mxu0 %v549
    %3532 = vmatpush.msra.mxu0 %v545
    %3533 = vmatpush.msra.mxu0 %v541
    %3534 = vmatpush.msra.mxu0 %v537
    %3535 = vmatpush.msra.mxu0 %v533
    %3536 = vmatpush.msra.mxu0 %v529
    %3537 = vmatpush.msra.mxu0 %v525
    %3538 = vmatpush.msra.mxu0 %v521
    %3539 = vmatpush.msra.mxu0 %v517
    %3540 = vmatmul.f32.gmra.mxu0 %v3256
    %v3541 = vpop.f32.mrf.mxu0
    %v3542 = vadd.f32 %v3522, %v3541
    %3543 = vdwg.mxu0
    %3544 = vmatpush.msra.mxu0 %v514
    %3545 = vmatpush.msra.mxu0 %v510
    %3546 = vmatpush.msra.mxu0 %v506
    %3547 = vmatpush.msra.mxu0 %v502
    %3548 = vmatpush.msra.mxu0 %v498
    %3549 = vmatpush.msra.mxu0 %v494
    %3550 = vmatpush.msra.mxu0 %v490
    %3551 = vmatpush.msra.mxu0 %v486
    %3552 = vmatpush.msra.mxu0 %v482
    %3553 = vmatpush.msra.mxu0 %v478
    %3554 = vmatpush.msra.mxu0 %v474
    %3555 = vmatpush.msra.mxu0 %v470
    %3556 = vmatpush.msra.mxu0 %v466
    %3557 = vmatpush.msra.mxu0 %v462
    %3558 = vmatpush.msra.mxu0 %v458
    %3559 = vmatpush.msra.mxu0 %v454
    %3560 = vmatmul.f32.gmra.mxu0 %v3463
    %v3561 = vpop.f32.mrf.mxu0
    %v3562 = vadd.f32 %v112, %v3561
    %3563 = vdwg.mxu0
    %3564 = vmatpush.msra.mxu0 %v578
    %3565 = vmatpush.msra.mxu0 %v574
    %3566 = vmatpush.msra.mxu0 %v570
    %3567 = vmatpush.msra.mxu0 %v566
    %3568 = vmatpush.msra.mxu0 %v562
    %3569 = vmatpush.msra.mxu0 %v558
    %3570 = vmatpush.msra.mxu0 %v554
    %3571 = vmatpush.msra.mxu0 %v550
    %3572 = vmatpush.msra.mxu0 %v546
    %3573 = vmatpush.msra.mxu0 %v542
    %3574 = vmatpush.msra.mxu0 %v538
    %3575 = vmatpush.msra.mxu0 %v534
    %3576 = vmatpush.msra.mxu0 %v530
    %3577 = vmatpush.msra.mxu0 %v526
    %3578 = vmatpush.msra.mxu0 %v522
    %3579 = vmatpush.msra.mxu0 %v518
    %3580 = vmatmul.f32.gmra.mxu0 %v3256
    %v3581 = vpop.f32.mrf.mxu0
    %v3582 = vadd.f32 %v3562, %v3581
    %3583 = vdwg.mxu0
    %3584 = vmatpush.msra.mxu0 %v515
    %3585 = vmatpush.msra.mxu0 %v511
    %3586 = vmatpush.msra.mxu0 %v507
    %3587 = vmatpush.msra.mxu0 %v503
    %3588 = vmatpush.msra.mxu0 %v499
    %3589 = vmatpush.msra.mxu0 %v495
    %3590 = vmatpush.msra.mxu0 %v491
    %3591 = vmatpush.msra.mxu0 %v487
    %3592 = vmatpush.msra.mxu0 %v483
    %3593 = vmatpush.msra.mxu0 %v479
    %3594 = vmatpush.msra.mxu0 %v475
    %3595 = vmatpush.msra.mxu0 %v471
    %3596 = vmatpush.msra.mxu0 %v467
    %3597 = vmatpush.msra.mxu0 %v463
    %3598 = vmatpush.msra.mxu0 %v459
    %3599 = vmatpush.msra.mxu0 %v455
    %3600 = vmatmul.f32.gmra.mxu0 %v3463
    %v3601 = vpop.f32.mrf.mxu0
    %v3602 = vadd.f32 %v113, %v3601
    %3603 = vdwg.mxu0
    %3604 = vmatpush.msra.mxu0 %v579
    %3605 = vmatpush.msra.mxu0 %v575
    %3606 = vmatpush.msra.mxu0 %v571
    %3607 = vmatpush.msra.mxu0 %v567
    %3608 = vmatpush.msra.mxu0 %v563
    %3609 = vmatpush.msra.mxu0 %v559
    %3610 = vmatpush.msra.mxu0 %v555
    %3611 = vmatpush.msra.mxu0 %v551
    %3612 = vmatpush.msra.mxu0 %v547
    %3613 = vmatpush.msra.mxu0 %v543
    %3614 = vmatpush.msra.mxu0 %v539
    %3615 = vmatpush.msra.mxu0 %v535
    %3616 = vmatpush.msra.mxu0 %v531
    %3617 = vmatpush.msra.mxu0 %v527
    %3618 = vmatpush.msra.mxu0 %v523
    %3619 = vmatpush.msra.mxu0 %v519
    %3620 = vmatmul.f32.gmra.mxu0 %v3256
    %v3621 = vpop.f32.mrf.mxu0
    %v3622 = vadd.f32 %v3602, %v3621
    %3623 = vdwg.mxu0
    %v3624 = vxor.u32 %v3502, 2147483648
    %v3625 = vmul.f32 %v3624, 1.442695
    %v3626 = vpow.pop %v3625
    %v3627 = vadd.f32 %v3626, 1.0
    %v3628 = vrcp.pop %v3627
    %v3629 = vmul.f32 %v3627, %v3628
    %v3630 = vsub.f32 1.0, %v3629
    %v3631 = vmul.f32 %v3628, %v3630
    %v3632 = vadd.f32 %v3628, %v3631
    %vm3633 = vweird.f32 %v3627
    %vm3634 = vweird.f32 %v3628
    %vm3635 = vmor %vm3633, %vm3634
    %v3636 = vsel %vm3635, %v3628, %v3632
    %v3637 = vand.u32 2147483647, %v3627
    %vm3638 = vcmp.eq.f32.partialorder %v3637, 8.507059e+37
    %v3639 = vand.u32 %v3627, 2147483648
    %v3640 = vor.u32 1.1754944e-38, %v3639
    %v3641 = vsel %vm3638, %v3640, %v3636
    %v3642 = vmul.f32 1.0, %v3641
    %v3643 = vxor.u32 %v3542, 2147483648
    %v3644 = vmul.f32 %v3643, 1.442695
    %v3645 = vpow.pop %v3644
    %v3646 = vadd.f32 %v3645, 1.0
    %v3647 = vrcp.pop %v3646
    %v3648 = vmul.f32 %v3646, %v3647
    %v3649 = vsub.f32 1.0, %v3648
    %v3650 = vmul.f32 %v3647, %v3649
    %v3651 = vadd.f32 %v3647, %v3650
    %vm3652 = vweird.f32 %v3646
    %vm3653 = vweird.f32 %v3647
    %vm3654 = vmor %vm3652, %vm3653
    %v3655 = vsel %vm3654, %v3647, %v3651
    %v3656 = vand.u32 2147483647, %v3646
    %vm3657 = vcmp.eq.f32.partialorder %v3656, 8.507059e+37
    %v3658 = vand.u32 %v3646, 2147483648
    %v3659 = vor.u32 1.1754944e-38, %v3658
    %v3660 = vsel %vm3657, %v3659, %v3655
    %v3661 = vmul.f32 1.0, %v3660
    %v3662 = vmul.f32 %v3642, %v3622
    %v3663 = vadd.f32 %v3582, %v3662
    %v3664 = vtanh.pop %v3663
    %v3665 = vsub.f32 1.0, %v3661
    %v3666 = vmul.f32 %v3665, %v3664
    %v3667 = vmul.f32 %v3661, %v3256
    %v3668 = vadd.f32 %v3666, %v3667
    %3669 = vst [vmem:[#allocation11] sm:$0xff] %v3463
    %3670 = vst [vmem:[#allocation12] sm:$0xff] %v3668
    // Predicated region
    $region42: #{tpu_custom_call.1} parent=1 // pred_check
      _
    $region43: #{tpu_custom_call.1} parent=1 // pred_check_branch
      %3672 = sbr.rel (0) target = $region45
    $region44: #{tpu_custom_call.1} parent=1 // pred_region
      %3674 = vsyncadd [#allocation4], 0
      %s3676 = sshll.u32 [#allocation11], 4
      %s3677 = int_to_ptr.vmem [resolvable:$true] %s3676
      %s3678 = sshll.u32 %s5, 4
      %s3679 = int_to_ptr.hbm [resolvable:$true] %s3678
      %3681 = dma.vmem_to_hbm [thread:$0]  %s3677, 128, %s3679, [#allocation4]
    $region45: #{tpu_custom_call.1} parent=1 // pred_fallthru
      _
    // Predicated region
    $region46: #{tpu_custom_call.1} parent=1 // pred_check
      _
    $region47: #{tpu_custom_call.1} parent=1 // pred_check_branch
      %3683 = sbr.rel (0) target = $region49
    $region48: #{tpu_custom_call.1} parent=1 // pred_region
      %3685 = vsyncadd [#allocation13], 0
      %s3687 = sshll.u32 [#allocation12], 4
      %s3688 = int_to_ptr.vmem [resolvable:$true] %s3687
      %s3689 = sshll.u32 %s6, 4
      %s3690 = int_to_ptr.hbm [resolvable:$true] %s3689
      %3692 = dma.vmem_to_hbm [thread:$0]  %s3688, 128, %s3690, [#allocation13]
    $region49: #{tpu_custom_call.1} parent=1 // pred_fallthru
      _
    // Predicated region
    $region50: #{tpu_custom_call.1} parent=1 // pred_check
      _
    $region51: #{tpu_custom_call.1} parent=1 // pred_check_branch
      %3694 = sbr.rel (0) target = $region53
    $region52: #{tpu_custom_call.1} parent=1 // pred_region
      %3696 = dma.done [#allocation4], 128
    $region53: #{tpu_custom_call.1} parent=1 // pred_fallthru
      _
    // Predicated region
    $region54: #{tpu_custom_call.1} parent=1 // pred_check
      _
    $region55: #{tpu_custom_call.1} parent=1 // pred_check_branch
      %3698 = sbr.rel (0) target = $region57
    $region56: #{tpu_custom_call.1} parent=1 // pred_region
      %3700 = dma.done [#allocation13], 128
    $region57: #{tpu_custom_call.1} parent=1 // pred_fallthru
      _
    %3701 = vsyncpa [#allocation3], 1
    %3702 = vsyncpa [#allocation6], 1
    %3703 = vsyncpa [#allocation9], 1
    %3704 = vsyncpa [#allocation4], 1
    %3705 = vsyncpa [#allocation13], 1

</llo_original>
